<compile_context>
chip_gen: v6e
topology: v6e:2x2x1
jax: 0.10.0
libtpu: 0.0.40
codegen_flags: <defaults>
</compile_context>

<pallas_src>
import math
import functools

import jax
import jax.numpy as jnp
from jax import lax
from jax.experimental import pallas as pl
from jax.experimental.pallas import tpu as pltpu


def _pick_tile(total, candidates):
    for c in candidates:
        if total >= c and total % c == 0:
            return c
    return total  # total is always a multiple of 128 after padding, so 128 always hits


def _vmem_limit_bytes():
    # Generation-aware scoped-VMEM limit: ~96 MiB on v5e/v6e (128 MiB physical VMEM),
    # ~48 MiB on v7x (64 MiB physical).  Safe fallback if the query is unavailable.
    try:
        cap = pltpu.get_tpu_info().vmem_capacity_bytes
        return int(max(32 * 1024 * 1024, min(0.75 * cap, 100 * 1024 * 1024)))
    except Exception:
        return 64 * 1024 * 1024


# ---------------------------------------------------------------------------
# Stage 1: fused GroupNorm affine + qkv projection, tiled over T.
# Grid = (B, T_pad // Tt).
# ---------------------------------------------------------------------------
def norm_qkv_kernel(x_ref, a_ref, b_ref, wq_ref, wk_ref, wv_ref,
                    q_ref, k_ref, v_ref):
    # x_ref: (1, C, Tt) f32; a_ref/b_ref: (1, C, 1) f32 per-batch fused GroupNorm scale/shift.
    xn = (x_ref[0] * a_ref[0] + b_ref[0]).astype(wq_ref.dtype)   # one fused FMA pass -> bf16
    # Three (C, C) @ (C, Tt) MXU matmuls writing q/k/v directly (no (3C, Tt) live intermediate).
    q_ref[0] = jnp.dot(wq_ref[...], xn,
                       preferred_element_type=jnp.float32).astype(q_ref.dtype)
    k_ref[0] = jnp.dot(wk_ref[...], xn,
                       preferred_element_type=jnp.float32).astype(k_ref.dtype)
    v_ref[0] = jnp.dot(wv_ref[...], xn,
                       preferred_element_type=jnp.float32).astype(v_ref.dtype)


# ---------------------------------------------------------------------------
# Stage 2: flash attention (online softmax over key tiles) + projection + residual.
# Grid = (B, num_q_tiles, num_k_tiles); key-tile axis is the innermost reduction.
# K (transposed to (nh, T, d)) and V are VMEM-resident per batch element.
# ---------------------------------------------------------------------------
def flash_attn_proj_kernel(q_ref, kt_ref, v_ref, x_ref, wproj_ref, bproj_ref,
                           o_ref, m_ref, l_ref, acc_ref,
                           *, num_heads, tk_size, t_valid, t_padded):
    ki = pl.program_id(2)

    @pl.when(ki == 0)
    def _():
        m_ref[...] = jnp.full(m_ref.shape, -jnp.inf, dtype=m_ref.dtype)
        l_ref[...] = jnp.zeros(l_ref.shape, dtype=l_ref.dtype)
        acc_ref[...] = jnp.zeros(acc_ref.shape, dtype=acc_ref.dtype)

    C, Tq = q_ref.shape[1], q_ref.shape[2]
    d = C // num_heads

    q = q_ref[0].reshape(num_heads, d, Tq)                      # bf16, scale folded into W_q

    start = pl.multiple_of(ki * tk_size, tk_size)
    k_t = kt_ref[0, :, pl.ds(start, tk_size), :]                # (nh, Tk, d) bf16 (resident K^T)
    v = v_ref[0, :, pl.ds(start, tk_size)].reshape(num_heads, d, tk_size)

    # s[h, tk, tq] = sum_c k_t[h, tk, c] * q[h, c, tq]  -- lhs contracts last dim: natural MXU form.
    s = lax.dot_general(k_t, q, (((2,), (1,)), ((0,), (0,))),
                        preferred_element_type=jnp.float32)     # (nh, Tk, Tq) f32

    if t_padded != t_valid:                                     # static: only emitted if T was padded
        key_pos = start + lax.broadcasted_iota(jnp.int32, (1, tk_size, 1), 1)
        s = jnp.where(key_pos < t_valid, s, jnp.float32(-1e30))

    m_prev = m_ref[...]                                         # (nh, 1, Tq)
    m_new = jnp.maximum(m_prev, jnp.max(s, axis=1, keepdims=True))
    alpha = jnp.exp(m_prev - m_new)
    p = jnp.exp(s - m_new)                                      # (nh, Tk, Tq) f32
    l_ref[...] = alpha * l_ref[...] + jnp.sum(p, axis=1, keepdims=True)

    # acc[h, c, tq] += sum_tk v[h, c, tk] * p[h, tk, tq]  -- natural MXU form.
    pv = lax.dot_general(v, p.astype(v.dtype), (((2,), (1,)), ((0,), (0,))),
                         preferred_element_type=jnp.float32)    # (nh, d, Tq)
    acc_ref[...] = alpha * acc_ref[...] + pv
    m_ref[...] = m_new

    @pl.when(ki == pl.num_programs(2) - 1)
    def _():
        inv_l = pl.reciprocal(l_ref[...])                       # exact; runs once per q tile
        h_all = (acc_ref[...] * inv_l).reshape(C, Tq)           # f32, head-contiguous channels
        out = jnp.dot(wproj_ref[...], h_all.astype(wproj_ref.dtype),
                      preferred_element_type=jnp.float32)       # (C, Tq)
        out = out + bproj_ref[...] + x_ref[0].astype(jnp.float32)  # bias + residual
        o_ref[0] = out.astype(o_ref.dtype)


# ---------------------------------------------------------------------------
# Wrapper
# ---------------------------------------------------------------------------
def attention_block(x_nchw, params, *, num_heads=1, num_groups=32, eps=1e-5):
    B, C, H, W = x_nchw.shape
    assert C % num_groups == 0 and C % num_heads == 0
    T = H * W
    d = C // num_heads
    T_pad = -(-T // 128) * 128                                  # lane-align T

    x = x_nchw.reshape(B, C, T).astype(jnp.float32)

    # ---- stage 0: two-pass GroupNorm stats (tiny XLA reduction; numerically safe) ----
    cg = C // num_groups
    xg = x.reshape(B, num_groups, cg * T)
    mean = jnp.mean(xg, axis=-1)                                # (B, G)
    var = jnp.mean(jnp.square(xg - mean[..., None]), axis=-1)   # two-pass, not E[x^2]-m^2
    rstd = lax.rsqrt(var + eps)
    gamma = params["gamma"].reshape(C).astype(jnp.float32)
    beta = params["beta"].reshape(C).astype(jnp.float32)
    a = gamma[None, :] * jnp.repeat(rstd, cg, axis=1)           # (B, C) fused scale
    bvec = beta[None, :] - jnp.repeat(mean, cg, axis=1) * a     # (B, C) fused shift
    a = a.reshape(B, C, 1)
    bvec = bvec.reshape(B, C, 1)

    x_p = x if T_pad == T else jnp.pad(x, ((0, 0), (0, 0), (0, T_pad - T)))

    # ---- weights: head-contiguous qkv rows; fold full 1/sqrt(d) scale into W_q (constant-folded) ----
    w = params["w_qkv"].reshape(num_heads, 3, d, C).astype(jnp.float32)
    wq = (w[:, 0] / math.sqrt(d)).reshape(C, C).astype(jnp.bfloat16)
    wk = w[:, 1].reshape(C, C).astype(jnp.bfloat16)
    wv = w[:, 2].reshape(C, C).astype(jnp.bfloat16)
    w_proj = params["w_proj"].reshape(C, C).astype(jnp.bfloat16)
    b_proj = params["b_proj"].reshape(C, 1).astype(jnp.float32)

    vmem_limit = _vmem_limit_bytes()

    # ---- stage 1: GroupNorm affine + qkv projection, tiled over T ----
    Tt = _pick_tile(T_pad, (512, 256, 128))
    qkv_shape = jax.ShapeDtypeStruct((B, C, T_pad), jnp.bfloat16)
    tile_spec = pl.BlockSpec((1, C, Tt), lambda b, t: (b, 0, t))
    vec_spec = pl.BlockSpec((1, C, 1), lambda b, t: (b, 0, 0))
    w_spec = pl.BlockSpec((C, C), lambda b, t: (0, 0))
    q_a, k_a, v_a = pl.pallas_call(
        norm_qkv_kernel,
        out_shape=(qkv_shape, qkv_shape, qkv_shape),
        grid_spec=pltpu.PrefetchScalarGridSpec(
            num_scalar_prefetch=0,
            grid=(B, T_pad // Tt),
            in_specs=[tile_spec, vec_spec, vec_spec, w_spec, w_spec, w_spec],
            out_specs=(tile_spec, tile_spec, tile_spec),
        ),
        compiler_params=pltpu.CompilerParams(
            dimension_semantics=("parallel", "parallel"),
            vmem_limit_bytes=vmem_limit),
    )(x_p, a, bvec, wq, wk, wv)

    # One cheap XLA relayout of K to (B, nh, T, d): makes the stage-2 score matmul contract the
    # lhs on its last dim so the flash inner loop has no hidden per-step XLU transposes.
    k_t = jnp.swapaxes(k_a.reshape(B, num_heads, d, T_pad), 2, 3)   # (B, nh, T_pad, d) bf16

    # ---- stage 2: flash attention (K/V VMEM-resident) + proj + bias + residual ----
    Tq = _pick_tile(T_pad, (256, 128))                          # 256 fills the 256-wide MXU on v6e/v7x
    Tk = Tq
    nqt, nkt = T_pad // Tq, T_pad // Tk

    kern2 = functools.partial(flash_attn_proj_kernel, num_heads=num_heads,
                              tk_size=Tk, t_valid=T, t_padded=T_pad)
    out = pl.pallas_call(
        kern2,
        out_shape=jax.ShapeDtypeStruct((B, C, T_pad), x_nchw.dtype),
        grid_spec=pltpu.PrefetchScalarGridSpec(
            num_scalar_prefetch=0,
            grid=(B, nqt, nkt),
            in_specs=[
                pl.BlockSpec((1, C, Tq), lambda b, qt, kt: (b, 0, qt)),                 # q tile
                pl.BlockSpec((1, num_heads, T_pad, d), lambda b, qt, kt: (b, 0, 0, 0)), # K^T resident
                pl.BlockSpec((1, C, T_pad), lambda b, qt, kt: (b, 0, 0)),               # V resident
                pl.BlockSpec((1, C, Tq), lambda b, qt, kt: (b, 0, qt)),                 # x (residual)
                pl.BlockSpec((C, C), lambda b, qt, kt: (0, 0)),                         # W_proj
                pl.BlockSpec((C, 1), lambda b, qt, kt: (0, 0)),                         # b_proj
            ],
            out_specs=pl.BlockSpec((1, C, Tq), lambda b, qt, kt: (b, 0, qt)),
            scratch_shapes=[
                pltpu.VMEM((num_heads, 1, Tq), jnp.float32),    # running max
                pltpu.VMEM((num_heads, 1, Tq), jnp.float32),    # running denom
                pltpu.VMEM((num_heads, d, Tq), jnp.float32),    # output accumulator
            ]),
        compiler_params=pltpu.CompilerParams(
            dimension_semantics=("parallel", "parallel", "arbitrary"),
            vmem_limit_bytes=vmem_limit),
    )(q_a, k_t, v_a, x_p, w_proj, b_proj)

    if T_pad != T:
        out = out[:, :, :T]
    return out.reshape(B, C, H, W)


# ---------------------------------------------------------------------------
# Pure-JAX f32 reference (mirrors the PyTorch forward) — verification only.
# ---------------------------------------------------------------------------
def attention_block_reference(x, params, *, num_heads=1, num_groups=32, eps=1e-5):
    B, C, H, W = x.shape
    T = H * W
    xf = x.reshape(B, C, T)
    g = C // num_groups
    x2 = xf.reshape(B, num_groups, g * T)
    mean = x2.mean(-1, keepdims=True)
    var = ((x2 - mean) ** 2).mean(-1, keepdims=True)
    xn = ((x2 - mean) / jnp.sqrt(var + eps)).reshape(B, C, T)
    xn = xn * params["gamma"].reshape(1, C, 1) + params["beta"].reshape(1, C, 1)
    qkv = jnp.einsum('oc,bct->bot', params["w_qkv"].reshape(3 * C, C), xn)
    d = C // num_heads
    qkv_h = qkv.reshape(B * num_heads, 3 * d, T)
    q, k, v = qkv_h[:, :d], qkv_h[:, d:2 * d], qkv_h[:, 2 * d:]
    scale = 1.0 / math.sqrt(math.sqrt(d))
    attn = jnp.einsum('bct,bcs->bts', q * scale, k * scale)
    attn = jax.nn.softmax(attn, axis=-1)
    h = jnp.einsum('bts,bcs->bct', attn, v).reshape(B, C, T)
    out = jnp.einsum('oc,bct->bot', params["w_proj"].reshape(C, C), h)
    out = out + params["b_proj"].reshape(1, C, 1)
    return (out + xf).reshape(B, C, H, W)


if __name__ == "__main__":
    B, C, H, W = 2, 32, 16, 16        # C must be divisible by 32 (GroupNorm(32, C))
    num_heads = 2

    key = jax.random.PRNGKey(0)
    kk1, kk2, kk3, kk4, kk5 = jax.random.split(key, 5)

    x = jax.random.normal(kk1, (B, C, H, W), jnp.float32)
    params = {
        "gamma": 1.0 + 0.1 * jax.random.normal(kk2, (C,), jnp.float32),
        "beta": 0.1 * jax.random.normal(kk3, (C,), jnp.float32),
        "w_qkv": jax.random.normal(kk4, (3 * C, C, 1, 1), jnp.float32) / math.sqrt(C),
        "w_proj": jax.random.normal(kk5, (C, C, 1, 1), jnp.float32) / math.sqrt(C),
        "b_proj": jnp.linspace(-0.1, 0.1, C, dtype=jnp.float32),
    }

    attn_fn = jax.jit(functools.partial(attention_block, num_heads=num_heads))
    out = jax.block_until_ready(attn_fn(x, params))

    ref = attention_block_reference(x, params, num_heads=num_heads)
    assert out.shape == (B, C, H, W)
    # bf16 MXU operands vs. f32 reference dominate the error; GroupNorm stats are exact
    # two-pass f32, so a moderate tolerance suffices.
    assert bool(jnp.allclose(out, ref, atol=7.5e-2, rtol=7.5e-2)), \
        float(jnp.max(jnp.abs(out - ref)))

    print("KERNEL_OK")
</pallas_src>

<mosaic_0001>
module attributes {stable_mosaic.version = 11 : i64} {
  func.func @norm_qkv_kernel(%arg0: i32, %arg1: i32, %arg2: memref<1x32x256xf32, #tpu.memory_space<vmem>>, %arg3: memref<1x32x1xf32, #tpu.memory_space<vmem>>, %arg4: memref<1x32x1xf32, #tpu.memory_space<vmem>>, %arg5: memref<32x32xbf16, #tpu.memory_space<vmem>>, %arg6: memref<32x32xbf16, #tpu.memory_space<vmem>>, %arg7: memref<32x32xbf16, #tpu.memory_space<vmem>>, %arg8: memref<1x32x256xbf16, #tpu.memory_space<vmem>>, %arg9: memref<1x32x256xbf16, #tpu.memory_space<vmem>>, %arg10: memref<1x32x256xbf16, #tpu.memory_space<vmem>>) attributes {dimension_semantics = [#tpu.dimension_semantics<parallel>, #tpu.dimension_semantics<parallel>], iteration_bounds = array<i64: 2, 1>, scalar_prefetch = 0 : i64, scratch_operands = 0 : i64, tpu.core_type = #tpu.core_type<tc>, window_params = [{transform_indices = @transform_0, window_bounds = array<i64: 1, 32, 256>}, {transform_indices = @transform_1, window_bounds = array<i64: 1, 32, 1>}, {transform_indices = @transform_2, window_bounds = array<i64: 1, 32, 1>}, {pipeline_mode = #tpu.pipeline_mode<synchronous>, transform_indices = @transform_3, window_bounds = array<i64: 32, 32>}, {pipeline_mode = #tpu.pipeline_mode<synchronous>, transform_indices = @transform_4, window_bounds = array<i64: 32, 32>}, {pipeline_mode = #tpu.pipeline_mode<synchronous>, transform_indices = @transform_5, window_bounds = array<i64: 32, 32>}, {transform_indices = @transform_6, window_bounds = array<i64: 1, 32, 256>}, {transform_indices = @transform_7, window_bounds = array<i64: 1, 32, 256>}, {transform_indices = @transform_8, window_bounds = array<i64: 1, 32, 256>}]} {
    %c0 = arith.constant 0 : index
    %c0_0 = arith.constant 0 : index
    %c0_1 = arith.constant 0 : index
    %0 = vector.load %arg2[%c0, %c0_0, %c0_1] : memref<1x32x256xf32, #tpu.memory_space<vmem>>, vector<1x32x256xf32>
    %1 = vector.shape_cast %0 : vector<1x32x256xf32> to vector<32x256xf32>
    %c0_2 = arith.constant 0 : index
    %c0_3 = arith.constant 0 : index
    %c0_4 = arith.constant 0 : index
    %2 = vector.load %arg3[%c0_2, %c0_3, %c0_4] : memref<1x32x1xf32, #tpu.memory_space<vmem>>, vector<1x32x1xf32>
    %3 = vector.shape_cast %2 : vector<1x32x1xf32> to vector<32x1xf32>
    %4 = vector.broadcast %3 : vector<32x1xf32> to vector<32x256xf32>
    %5 = arith.mulf %1, %4 : vector<32x256xf32>
    %c0_5 = arith.constant 0 : index
    %c0_6 = arith.constant 0 : index
    %c0_7 = arith.constant 0 : index
    %6 = vector.load %arg4[%c0_5, %c0_6, %c0_7] : memref<1x32x1xf32, #tpu.memory_space<vmem>>, vector<1x32x1xf32>
    %7 = vector.shape_cast %6 : vector<1x32x1xf32> to vector<32x1xf32>
    %8 = vector.broadcast %7 : vector<32x1xf32> to vector<32x256xf32>
    %9 = arith.addf %5, %8 : vector<32x256xf32>
    %10 = arith.truncf %9 : vector<32x256xf32> to vector<32x256xbf16>
    %c0_8 = arith.constant 0 : index
    %c0_9 = arith.constant 0 : index
    %11 = vector.load %arg5[%c0_8, %c0_9] : memref<32x32xbf16, #tpu.memory_space<vmem>>, vector<32x32xbf16>
    %cst = arith.constant dense<0.000000e+00> : vector<32x256xf32>
    %12 = tpu.matmul %11, %10, %cst {dimension_numbers = #tpu.dot_dimension_numbers<[1], [0], [0], [1], [0, 0, 1, 1], [], []>} : vector<32x32xbf16>, vector<32x256xbf16>, vector<32x256xf32> -> vector<32x256xf32>
    %13 = arith.truncf %12 : vector<32x256xf32> to vector<32x256xbf16>
    %c0_10 = arith.constant 0 : index
    %c0_11 = arith.constant 0 : index
    %c0_12 = arith.constant 0 : index
    %14 = vector.load %arg8[%c0_10, %c0_11, %c0_12] : memref<1x32x256xbf16, #tpu.memory_space<vmem>>, vector<1x32x256xbf16>
    %15 = vector.shape_cast %14 : vector<1x32x256xbf16> to vector<32x256xbf16>
    %16 = vector.shape_cast %13 : vector<32x256xbf16> to vector<1x32x256xbf16>
    tpu.vector_store %arg8[%c0_10, %c0_11, %c0_12], %16 {strides = array<i32>} : memref<1x32x256xbf16, #tpu.memory_space<vmem>>, vector<1x32x256xbf16>,
    %c0_13 = arith.constant 0 : index
    %c0_14 = arith.constant 0 : index
    %17 = vector.load %arg6[%c0_13, %c0_14] : memref<32x32xbf16, #tpu.memory_space<vmem>>, vector<32x32xbf16>
    %cst_15 = arith.constant dense<0.000000e+00> : vector<32x256xf32>
    %18 = tpu.matmul %17, %10, %cst_15 {dimension_numbers = #tpu.dot_dimension_numbers<[1], [0], [0], [1], [0, 0, 1, 1], [], []>} : vector<32x32xbf16>, vector<32x256xbf16>, vector<32x256xf32> -> vector<32x256xf32>
    %19 = arith.truncf %18 : vector<32x256xf32> to vector<32x256xbf16>
    %c0_16 = arith.constant 0 : index
    %c0_17 = arith.constant 0 : index
    %c0_18 = arith.constant 0 : index
    %20 = vector.load %arg9[%c0_16, %c0_17, %c0_18] : memref<1x32x256xbf16, #tpu.memory_space<vmem>>, vector<1x32x256xbf16>
    %21 = vector.shape_cast %20 : vector<1x32x256xbf16> to vector<32x256xbf16>
    %22 = vector.shape_cast %19 : vector<32x256xbf16> to vector<1x32x256xbf16>
    tpu.vector_store %arg9[%c0_16, %c0_17, %c0_18], %22 {strides = array<i32>} : memref<1x32x256xbf16, #tpu.memory_space<vmem>>, vector<1x32x256xbf16>,
    %c0_19 = arith.constant 0 : index
    %c0_20 = arith.constant 0 : index
    %23 = vector.load %arg7[%c0_19, %c0_20] : memref<32x32xbf16, #tpu.memory_space<vmem>>, vector<32x32xbf16>
    %cst_21 = arith.constant dense<0.000000e+00> : vector<32x256xf32>
    %24 = tpu.matmul %23, %10, %cst_21 {dimension_numbers = #tpu.dot_dimension_numbers<[1], [0], [0], [1], [0, 0, 1, 1], [], []>} : vector<32x32xbf16>, vector<32x256xbf16>, vector<32x256xf32> -> vector<32x256xf32>
    %25 = arith.truncf %24 : vector<32x256xf32> to vector<32x256xbf16>
    %c0_22 = arith.constant 0 : index
    %c0_23 = arith.constant 0 : index
    %c0_24 = arith.constant 0 : index
    %26 = vector.load %arg10[%c0_22, %c0_23, %c0_24] : memref<1x32x256xbf16, #tpu.memory_space<vmem>>, vector<1x32x256xbf16>
    %27 = vector.shape_cast %26 : vector<1x32x256xbf16> to vector<32x256xbf16>
    %28 = vector.shape_cast %25 : vector<32x256xbf16> to vector<1x32x256xbf16>
    tpu.vector_store %arg10[%c0_22, %c0_23, %c0_24], %28 {strides = array<i32>} : memref<1x32x256xbf16, #tpu.memory_space<vmem>>, vector<1x32x256xbf16>,
    return
  }
  func.func @transform_0(%arg0: i32, %arg1: i32) -> (i32, i32, i32) {
    %c0_i32 = arith.constant 0 : i32
    %c0_i32_0 = arith.constant 0 : i32
    return %arg0, %c0_i32, %arg1 : i32, i32, i32
  }
  func.func @transform_1(%arg0: i32, %arg1: i32) -> (i32, i32, i32) {
    %c0_i32 = arith.constant 0 : i32
    %c0_i32_0 = arith.constant 0 : i32
    %c0_i32_1 = arith.constant 0 : i32
    return %arg0, %c0_i32, %c0_i32_0 : i32, i32, i32
  }
  func.func @transform_2(%arg0: i32, %arg1: i32) -> (i32, i32, i32) {
    %c0_i32 = arith.constant 0 : i32
    %c0_i32_0 = arith.constant 0 : i32
    %c0_i32_1 = arith.constant 0 : i32
    return %arg0, %c0_i32, %c0_i32_0 : i32, i32, i32
  }
  func.func @transform_3(%arg0: i32, %arg1: i32) -> (i32, i32) {
    %c0_i32 = arith.constant 0 : i32
    %c0_i32_0 = arith.constant 0 : i32
    %c0_i32_1 = arith.constant 0 : i32
    return %c0_i32, %c0_i32_0 : i32, i32
  }
  func.func @transform_4(%arg0: i32, %arg1: i32) -> (i32, i32) {
    %c0_i32 = arith.constant 0 : i32
    %c0_i32_0 = arith.constant 0 : i32
    %c0_i32_1 = arith.constant 0 : i32
    return %c0_i32, %c0_i32_0 : i32, i32
  }
  func.func @transform_5(%arg0: i32, %arg1: i32) -> (i32, i32) {
    %c0_i32 = arith.constant 0 : i32
    %c0_i32_0 = arith.constant 0 : i32
    %c0_i32_1 = arith.constant 0 : i32
    return %c0_i32, %c0_i32_0 : i32, i32
  }
  func.func @transform_6(%arg0: i32, %arg1: i32) -> (i32, i32, i32) {
    %c0_i32 = arith.constant 0 : i32
    %c0_i32_0 = arith.constant 0 : i32
    return %arg0, %c0_i32, %arg1 : i32, i32, i32
  }
  func.func @transform_7(%arg0: i32, %arg1: i32) -> (i32, i32, i32) {
    %c0_i32 = arith.constant 0 : i32
    %c0_i32_0 = arith.constant 0 : i32
    return %arg0, %c0_i32, %arg1 : i32, i32, i32
  }
  func.func @transform_8(%arg0: i32, %arg1: i32) -> (i32, i32, i32) {
    %c0_i32 = arith.constant 0 : i32
    %c0_i32_0 = arith.constant 0 : i32
    return %arg0, %c0_i32, %arg1 : i32, i32, i32
  }
}

module attributes {stable_mosaic.version = 11 : i64} {
  func.func @flash_attn_proj_kernel(%arg0: i32, %arg1: i32, %arg2: i32, %arg3: memref<1x32x256xbf16, #tpu.memory_space<vmem>>, %arg4: memref<1x2x256x16xbf16, #tpu.memory_space<vmem>>, %arg5: memref<1x32x256xbf16, #tpu.memory_space<vmem>>, %arg6: memref<1x32x256xf32, #tpu.memory_space<vmem>>, %arg7: memref<32x32xbf16, #tpu.memory_space<vmem>>, %arg8: memref<32x1xf32, #tpu.memory_space<vmem>>, %arg9: memref<1x32x256xf32, #tpu.memory_space<vmem>>, %arg10: memref<2x1x256xf32, #tpu.memory_space<vmem>>, %arg11: memref<2x1x256xf32, #tpu.memory_space<vmem>>, %arg12: memref<2x16x256xf32, #tpu.memory_space<vmem>>) attributes {dimension_semantics = [#tpu.dimension_semantics<parallel>, #tpu.dimension_semantics<parallel>, #tpu.dimension_semantics<arbitrary>], iteration_bounds = array<i64: 2, 1, 1>, scalar_prefetch = 0 : i64, scratch_operands = 3 : i64, tpu.core_type = #tpu.core_type<tc>, window_params = [{transform_indices = @transform_0, window_bounds = array<i64: 1, 32, 256>}, {transform_indices = @transform_1, window_bounds = array<i64: 1, 2, 256, 16>}, {transform_indices = @transform_2, window_bounds = array<i64: 1, 32, 256>}, {transform_indices = @transform_3, window_bounds = array<i64: 1, 32, 256>}, {pipeline_mode = #tpu.pipeline_mode<synchronous>, transform_indices = @transform_4, window_bounds = array<i64: 32, 32>}, {pipeline_mode = #tpu.pipeline_mode<synchronous>, transform_indices = @transform_5, window_bounds = array<i64: 32, 1>}, {transform_indices = @transform_6, window_bounds = array<i64: 1, 32, 256>}]} {
    %c0_i32 = arith.constant 0 : i32
    %0 = arith.cmpi eq, %arg2, %c0_i32 : i32
    %1 = arith.extui %0 : i1 to i32
    %c0_i32_0 = arith.constant 0 : i32
    %2 = arith.cmpi ne, %1, %c0_i32_0 : i32
    scf.if %2 {
      %cst_31 = arith.constant 0xFF800000 : f32
      %42 = vector.broadcast %cst_31 : f32 to vector<2x1x256xf32>
      %c0_32 = arith.constant 0 : index
      %c0_33 = arith.constant 0 : index
      %c0_34 = arith.constant 0 : index
      %43 = vector.load %arg10[%c0_32, %c0_33, %c0_34] : memref<2x1x256xf32, #tpu.memory_space<vmem>>, vector<2x1x256xf32>
      tpu.vector_store %arg10[%c0_32, %c0_33, %c0_34], %42 {strides = array<i32>} : memref<2x1x256xf32, #tpu.memory_space<vmem>>, vector<2x1x256xf32>,
      %cst_35 = arith.constant 0.000000e+00 : f32
      %44 = vector.broadcast %cst_35 : f32 to vector<2x1x256xf32>
      %c0_36 = arith.constant 0 : index
      %c0_37 = arith.constant 0 : index
      %c0_38 = arith.constant 0 : index
      %45 = vector.load %arg11[%c0_36, %c0_37, %c0_38] : memref<2x1x256xf32, #tpu.memory_space<vmem>>, vector<2x1x256xf32>
      tpu.vector_store %arg11[%c0_36, %c0_37, %c0_38], %44 {strides = array<i32>} : memref<2x1x256xf32, #tpu.memory_space<vmem>>, vector<2x1x256xf32>,
      %cst_39 = arith.constant 0.000000e+00 : f32
      %46 = vector.broadcast %cst_39 : f32 to vector<2x16x256xf32>
      %c0_40 = arith.constant 0 : index
      %c0_41 = arith.constant 0 : index
      %c0_42 = arith.constant 0 : index
      %47 = vector.load %arg12[%c0_40, %c0_41, %c0_42] : memref<2x16x256xf32, #tpu.memory_space<vmem>>, vector<2x16x256xf32>
      tpu.vector_store %arg12[%c0_40, %c0_41, %c0_42], %46 {strides = array<i32>} : memref<2x16x256xf32, #tpu.memory_space<vmem>>, vector<2x16x256xf32>,
    } else {
    }
    %c0 = arith.constant 0 : index
    %c0_1 = arith.constant 0 : index
    %c0_2 = arith.constant 0 : index
    %3 = vector.load %arg3[%c0, %c0_1, %c0_2] : memref<1x32x256xbf16, #tpu.memory_space<vmem>>, vector<1x32x256xbf16>
    %4 = vector.shape_cast %3 : vector<1x32x256xbf16> to vector<32x256xbf16>
    %5 = vector.shape_cast %4 : vector<32x256xbf16> to vector<2x16x256xbf16>
    %c256_i32 = arith.constant 256 : i32
    %6 = arith.muli %arg2, %c256_i32 : i32
    %7 = tpu.assume_multiple %6, 256 : i32
    %c0_3 = arith.constant 0 : index
    %c0_4 = arith.constant 0 : index
    %8 = arith.index_cast %7 : i32 to index
    %c0_5 = arith.constant 0 : index
    %9 = vector.load %arg4[%c0_3, %c0_4, %8, %c0_5] : memref<1x2x256x16xbf16, #tpu.memory_space<vmem>>, vector<1x2x256x16xbf16>
    %10 = vector.shape_cast %9 : vector<1x2x256x16xbf16> to vector<2x256x16xbf16>
    %c0_6 = arith.constant 0 : index
    %c0_7 = arith.constant 0 : index
    %11 = arith.index_cast %7 : i32 to index
    %12 = vector.load %arg5[%c0_6, %c0_7, %11] : memref<1x32x256xbf16, #tpu.memory_space<vmem>>, vector<1x32x256xbf16>
    %13 = vector.shape_cast %12 : vector<1x32x256xbf16> to vector<32x256xbf16>
    %14 = vector.shape_cast %13 : vector<32x256xbf16> to vector<2x16x256xbf16>
    %cst = arith.constant dense<0.000000e+00> : vector<2x256x256xf32>
    %15 = tpu.matmul %10, %5, %cst {dimension_numbers = #tpu.dot_dimension_numbers<[2], [1], [1], [2], [0, 0, 0, 1, 1, 2], [0], [0]>} : vector<2x256x16xbf16>, vector<2x16x256xbf16>, vector<2x256x256xf32> -> vector<2x256x256xf32>
    %c0_8 = arith.constant 0 : index
    %c0_9 = arith.constant 0 : index
    %c0_10 = arith.constant 0 : index
    %16 = vector.load %arg10[%c0_8, %c0_9, %c0_10] : memref<2x1x256xf32, #tpu.memory_space<vmem>>, vector<2x1x256xf32>
    %cst_11 = arith.constant dense<0xFF800000> : vector<2x256xf32>
    %17 = vector.multi_reduction <maximumf>, %15, %cst_11 [1] : vector<2x256x256xf32> to vector<2x256xf32>
    %18 = vector.shape_cast %17 : vector<2x256xf32> to vector<2x1x256xf32>
    %19 = arith.maximumf %16, %18 : vector<2x1x256xf32>
    %20 = arith.subf %16, %19 : vector<2x1x256xf32>
    %21 = math.exp %20 : vector<2x1x256xf32>
    %22 = vector.broadcast %19 : vector<2x1x256xf32> to vector<2x256x256xf32>
    %23 = arith.subf %15, %22 : vector<2x256x256xf32>
    %24 = math.exp %23 : vector<2x256x256xf32>
    %c0_12 = arith.constant 0 : index
    %c0_13 = arith.constant 0 : index
    %c0_14 = arith.constant 0 : index
    %25 = vector.load %arg11[%c0_12, %c0_13, %c0_14] : memref<2x1x256xf32, #tpu.memory_space<vmem>>, vector<2x1x256xf32>
    %26 = arith.mulf %21, %25 : vector<2x1x256xf32>
    %cst_15 = arith.constant dense<0.000000e+00> : vector<2x256xf32>
    %27 = vector.multi_reduction <add>, %24, %cst_15 [1] : vector<2x256x256xf32> to vector<2x256xf32>
    %28 = vector.shape_cast %27 : vector<2x256xf32> to vector<2x1x256xf32>
    %29 = arith.addf %26, %28 : vector<2x1x256xf32>
    %c0_16 = arith.constant 0 : index
    %c0_17 = arith.constant 0 : index
    %c0_18 = arith.constant 0 : index
    %30 = vector.load %arg11[%c0_16, %c0_17, %c0_18] : memref<2x1x256xf32, #tpu.memory_space<vmem>>, vector<2x1x256xf32>
    tpu.vector_store %arg11[%c0_16, %c0_17, %c0_18], %29 {strides = array<i32>} : memref<2x1x256xf32, #tpu.memory_space<vmem>>, vector<2x1x256xf32>,
    %31 = arith.truncf %24 : vector<2x256x256xf32> to vector<2x256x256xbf16>
    %cst_19 = arith.constant dense<0.000000e+00> : vector<2x16x256xf32>
    %32 = tpu.matmul %14, %31, %cst_19 {dimension_numbers = #tpu.dot_dimension_numbers<[2], [1], [1], [2], [0, 0, 0, 1, 1, 2], [0], [0]>} : vector<2x16x256xbf16>, vector<2x256x256xbf16>, vector<2x16x256xf32> -> vector<2x16x256xf32>
    %c0_20 = arith.constant 0 : index
    %c0_21 = arith.constant 0 : index
    %c0_22 = arith.constant 0 : index
    %33 = vector.load %arg12[%c0_20, %c0_21, %c0_22] : memref<2x16x256xf32, #tpu.memory_space<vmem>>, vector<2x16x256xf32>
    %34 = vector.broadcast %21 : vector<2x1x256xf32> to vector<2x16x256xf32>
    %35 = arith.mulf %34, %33 : vector<2x16x256xf32>
    %36 = arith.addf %35, %32 : vector<2x16x256xf32>
    %c0_23 = arith.constant 0 : index
    %c0_24 = arith.constant 0 : index
    %c0_25 = arith.constant 0 : index
    %37 = vector.load %arg12[%c0_23, %c0_24, %c0_25] : memref<2x16x256xf32, #tpu.memory_space<vmem>>, vector<2x16x256xf32>
    tpu.vector_store %arg12[%c0_23, %c0_24, %c0_25], %36 {strides = array<i32>} : memref<2x16x256xf32, #tpu.memory_space<vmem>>, vector<2x16x256xf32>,
    %c0_26 = arith.constant 0 : index
    %c0_27 = arith.constant 0 : index
    %c0_28 = arith.constant 0 : index
    %38 = vector.load %arg10[%c0_26, %c0_27, %c0_28] : memref<2x1x256xf32, #tpu.memory_space<vmem>>, vector<2x1x256xf32>
    tpu.vector_store %arg10[%c0_26, %c0_27, %c0_28], %19 {strides = array<i32>} : memref<2x1x256xf32, #tpu.memory_space<vmem>>, vector<2x1x256xf32>,
    %c0_i32_29 = arith.constant 0 : i32
    %39 = arith.cmpi eq, %arg2, %c0_i32_29 : i32
    %40 = arith.extui %39 : i1 to i32
    %c0_i32_30 = arith.constant 0 : i32
    %41 = arith.cmpi ne, %40, %c0_i32_30 : i32
    scf.if %41 {
      %c0_31 = arith.constant 0 : index
      %c0_32 = arith.constant 0 : index
      %c0_33 = arith.constant 0 : index
      %42 = vector.load %arg11[%c0_31, %c0_32, %c0_33] : memref<2x1x256xf32, #tpu.memory_space<vmem>>, vector<2x1x256xf32>
      %43 = tpu.reciprocal %42 : vector<2x1x256xf32> -> vector<2x1x256xf32>
      %c0_34 = arith.constant 0 : index
      %c0_35 = arith.constant 0 : index
      %c0_36 = arith.constant 0 : index
      %44 = vector.load %arg12[%c0_34, %c0_35, %c0_36] : memref<2x16x256xf32, #tpu.memory_space<vmem>>, vector<2x16x256xf32>
      %45 = vector.broadcast %43 : vector<2x1x256xf32> to vector<2x16x256xf32>
      %46 = arith.mulf %44, %45 : vector<2x16x256xf32>
      %47 = vector.shape_cast %46 : vector<2x16x256xf32> to vector<32x256xf32>
      %c0_37 = arith.constant 0 : index
      %c0_38 = arith.constant 0 : index
      %48 = vector.load %arg7[%c0_37, %c0_38] : memref<32x32xbf16, #tpu.memory_space<vmem>>, vector<32x32xbf16>
      %49 = arith.truncf %47 : vector<32x256xf32> to vector<32x256xbf16>
      %cst_39 = arith.constant dense<0.000000e+00> : vector<32x256xf32>
      %50 = tpu.matmul %48, %49, %cst_39 {dimension_numbers = #tpu.dot_dimension_numbers<[1], [0], [0], [1], [0, 0, 1, 1], [], []>} : vector<32x32xbf16>, vector<32x256xbf16>, vector<32x256xf32> -> vector<32x256xf32>
      %c0_40 = arith.constant 0 : index
      %c0_41 = arith.constant 0 : index
      %51 = vector.load %arg8[%c0_40, %c0_41] : memref<32x1xf32, #tpu.memory_space<vmem>>, vector<32x1xf32>
      %52 = vector.broadcast %51 : vector<32x1xf32> to vector<32x256xf32>
      %53 = arith.addf %50, %52 : vector<32x256xf32>
      %c0_42 = arith.constant 0 : index
      %c0_43 = arith.constant 0 : index
      %c0_44 = arith.constant 0 : index
      %54 = vector.load %arg6[%c0_42, %c0_43, %c0_44] : memref<1x32x256xf32, #tpu.memory_space<vmem>>, vector<1x32x256xf32>
      %55 = vector.shape_cast %54 : vector<1x32x256xf32> to vector<32x256xf32>
      %56 = arith.addf %53, %55 : vector<32x256xf32>
      %c0_45 = arith.constant 0 : index
      %c0_46 = arith.constant 0 : index
      %c0_47 = arith.constant 0 : index
      %57 = vector.load %arg9[%c0_45, %c0_46, %c0_47] : memref<1x32x256xf32, #tpu.memory_space<vmem>>, vector<1x32x256xf32>
      %58 = vector.shape_cast %57 : vector<1x32x256xf32> to vector<32x256xf32>
      %59 = vector.shape_cast %56 : vector<32x256xf32> to vector<1x32x256xf32>
      tpu.vector_store %arg9[%c0_45, %c0_46, %c0_47], %59 {strides = array<i32>} : memref<1x32x256xf32, #tpu.memory_space<vmem>>, vector<1x32x256xf32>,
    } else {
    }
    return
  }
  func.func @transform_0(%arg0: i32, %arg1: i32, %arg2: i32) -> (i32, i32, i32) {
    %c0_i32 = arith.constant 0 : i32
    %c0_i32_0 = arith.constant 0 : i32
    return %arg0, %c0_i32, %arg1 : i32, i32, i32
  }
  func.func @transform_1(%arg0: i32, %arg1: i32, %arg2: i32) -> (i32, i32, i32, i32) {
    %c0_i32 = arith.constant 0 : i32
    %c0_i32_0 = arith.constant 0 : i32
    %c0_i32_1 = arith.constant 0 : i32
    %c0_i32_2 = arith.constant 0 : i32
    return %arg0, %c0_i32, %c0_i32_0, %c0_i32_1 : i32, i32, i32, i32
  }
  func.func @transform_2(%arg0: i32, %arg1: i32, %arg2: i32) -> (i32, i32, i32) {
    %c0_i32 = arith.constant 0 : i32
    %c0_i32_0 = arith.constant 0 : i32
    %c0_i32_1 = arith.constant 0 : i32
    return %arg0, %c0_i32, %c0_i32_0 : i32, i32, i32
  }
  func.func @transform_3(%arg0: i32, %arg1: i32, %arg2: i32) -> (i32, i32, i32) {
    %c0_i32 = arith.constant 0 : i32
    %c0_i32_0 = arith.constant 0 : i32
    return %arg0, %c0_i32, %arg1 : i32, i32, i32
  }
  func.func @transform_4(%arg0: i32, %arg1: i32, %arg2: i32) -> (i32, i32) {
    %c0_i32 = arith.constant 0 : i32
    %c0_i32_0 = arith.constant 0 : i32
    %c0_i32_1 = arith.constant 0 : i32
    return %c0_i32, %c0_i32_0 : i32, i32
  }
  func.func @transform_5(%arg0: i32, %arg1: i32, %arg2: i32) -> (i32, i32) {
    %c0_i32 = arith.constant 0 : i32
    %c0_i32_0 = arith.constant 0 : i32
    %c0_i32_1 = arith.constant 0 : i32
    return %c0_i32, %c0_i32_0 : i32, i32
  }
  func.func @transform_6(%arg0: i32, %arg1: i32, %arg2: i32) -> (i32, i32, i32) {
    %c0_i32 = arith.constant 0 : i32
    %c0_i32_0 = arith.constant 0 : i32
    return %arg0, %c0_i32, %arg1 : i32, i32, i32
  }
}

</mosaic_0001>

<llo_original>
// kernel: attention_block.2
$region0: #{attention_block.2}
  #allocation0 [shape = 'u32[]', space=smem, size = 0x4, offset = 0x4, fixed_abs, tag = 'smem constant byte address 0x4 - core index']
  #allocation1 [shape = 'u32[144,128]{1,0:T(1,128)}', space=vmem, size = 0x12000, scoped, tag = 'internal scratch']
  %s0 = inlined_call_operand.vmem [shape: f32[2,32,256], index: 0, kind: input, shape index: {}]
  %s1 = inlined_call_operand.vmem [shape: f32[2,32,1], index: 1, kind: input, shape index: {}]
  %s2 = inlined_call_operand.vmem [shape: f32[2,32,1], index: 2, kind: input, shape index: {}]
  %s3 = inlined_call_operand.vmem [shape: bf16[32,32], index: 3, kind: input, shape index: {}]
  %s4 = inlined_call_operand.vmem [shape: bf16[32,32], index: 4, kind: input, shape index: {}]
  %s5 = inlined_call_operand.vmem [shape: bf16[32,32], index: 5, kind: input, shape index: {}]
  %s6 = inlined_call_operand.vmem [shape: bf16[2,32,256], index: 6, kind: output, shape index: {0}]
  %s7 = inlined_call_operand.vmem [shape: bf16[2,32,256], index: 7, kind: output, shape index: {1}]
  %s8 = inlined_call_operand.vmem [shape: bf16[2,32,256], index: 8, kind: output, shape index: {2}]
  %9 = xla_tuple %s6, %s7, %s8
  %s10 = sld [smem:[#allocation0]]
  $region73: #{attention_block.2} parent=0
    _
  %s12 = ssub.s32 1, %s10
  %s13 = scalar_select 0, %s12, %s10
  loop: start=0, step=1, limit=4
  $region2: #{attention_block.2} parent=0 // loop_pre_header
    _
  $region3: #{attention_block.2} parent=0 // loop_header
    %s15 = sphi 0, %s19
    %p16 = scmp.ge.s32.totalorder %s15, 4
    %s22 = sphi 0, %s34
    %s23 = sphi 0, %s30
    %s24 = sphi 0, %s22
    %s25 = sphi 0, %s23
    %s26 = sphi 0, %s24
    %s27 = sphi 0, %s25
    %s39 = sphi 0, %s41
    %s42 = sphi 0, %s39
    %s43 = sphi 0, %s42
    %s59 = sphi 0, %s43
    %s65 = sphi 0, %s67
    %s68 = sphi 0, %s65
    %s69 = sphi 0, %s68
    %s85 = sphi 0, %s69
    %s91 = sphi 0, %s93
    %s94 = sphi 0, %s91
    %s95 = sphi 0, %s94
    %s111 = sphi 0, %s95
    %s115 = sphi 0, %s115
    %s117 = sphi 0, %s115
    %s118 = sphi 0, %s117
    %s132 = sphi 0, %s118
    %s136 = sphi 0, %s136
    %s138 = sphi 0, %s136
    %s139 = sphi 0, %s138
    %s153 = sphi 0, %s139
    %s157 = sphi 0, %s157
    %s159 = sphi 0, %s157
    %s160 = sphi 0, %s159
    %s174 = sphi 0, %s160
    %s182 = sphi 0, %s184
    %s185 = sphi 0, %s182
    %s186 = sphi 0, %s185
    %s202 = sphi 0, %s186
    %s210 = sphi 0, %s212
    %s213 = sphi 0, %s210
    %s214 = sphi 0, %s213
    %s230 = sphi 0, %s214
    %s238 = sphi 0, %s240
    %s241 = sphi 0, %s238
    %s242 = sphi 0, %s241
    %s258 = sphi 0, %s242
  $region4: #{attention_block.2} parent=0 // loop_header_branch
    %18 = sbr.rel (%p16) target = $region8
  $region5: #{attention_block.2} parent=0 // loop_body
    %s20 = ssub.s32 %s15, 1
    %s21 = ssub.s32 %s15, 2
    %s28 = sadd.s32 1, %s23
    %p29 = scmp.ge.s32.totalorder %s28, 1
    %s30 = scalar_select %p29, 0, %s28
    %s31 = sadd.s32 1, %s22
    %s32 = scalar_select %p29, %s31, %s22
    %p33 = scmp.ge.s32.totalorder %s32, 2
    %s34 = scalar_select %p33, 0, %s32
    %s35 = ssub.s32 %s22, %s34
    %s36 = ssub.s32 %s23, %s30
    %s37 = sor.u32 %s35, %s36
    %p38 = scmp.eq.s32.totalorder %s37, 0
    %s40 = sadd.s32 %s39, 1
    %s41 = scalar_select %p38, %s39, %s40
    %p44 = pneg %p38
    %p45 = scmp.eq.s32.totalorder %s15, 1
    %p46 = por %p44, %p45
    %p47 = scmp.ne.s32.totalorder %s39, %s42
    %p48 = scmp.eq.s32.totalorder %s15, 0
    %p49 = por %p47, %p48
    %p50 = scmp.ne.s32.totalorder %s39, %s42
    %p51 = scmp.eq.s32.totalorder %s20, 1
    %p52 = por %p50, %p51
    %p53 = scmp.ne.s32.totalorder %s42, %s43
    %p54 = scmp.eq.s32.totalorder %s20, 0
    %p55 = por %p53, %p54
    %p56 = scmp.ne.s32.totalorder %s42, %s43
    %p57 = scmp.eq.s32.totalorder %s21, 1
    %p58 = por %p56, %p57
    %p60 = scmp.ne.s32.totalorder %s43, %s59
    %p61 = scmp.eq.s32.totalorder %s21, 0
    %p62 = por %p60, %p61
    %s63 = ssub.s32 %s22, %s34
    %p64 = scmp.eq.s32.totalorder %s63, 0
    %s66 = sadd.s32 %s65, 1
    %s67 = scalar_select %p64, %s65, %s66
    %p70 = pneg %p64
    %p71 = scmp.eq.s32.totalorder %s15, 1
    %p72 = por %p70, %p71
    %p73 = scmp.ne.s32.totalorder %s65, %s68
    %p74 = scmp.eq.s32.totalorder %s15, 0
    %p75 = por %p73, %p74
    %p76 = scmp.ne.s32.totalorder %s65, %s68
    %p77 = scmp.eq.s32.totalorder %s20, 1
    %p78 = por %p76, %p77
    %p79 = scmp.ne.s32.totalorder %s68, %s69
    %p80 = scmp.eq.s32.totalorder %s20, 0
    %p81 = por %p79, %p80
    %p82 = scmp.ne.s32.totalorder %s68, %s69
    %p83 = scmp.eq.s32.totalorder %s21, 1
    %p84 = por %p82, %p83
    %p86 = scmp.ne.s32.totalorder %s69, %s85
    %p87 = scmp.eq.s32.totalorder %s21, 0
    %p88 = por %p86, %p87
    %s89 = ssub.s32 %s22, %s34
    %p90 = scmp.eq.s32.totalorder %s89, 0
    %s92 = sadd.s32 %s91, 1
    %s93 = scalar_select %p90, %s91, %s92
    %p96 = pneg %p90
    %p97 = scmp.eq.s32.totalorder %s15, 1
    %p98 = por %p96, %p97
    %p99 = scmp.ne.s32.totalorder %s91, %s94
    %p100 = scmp.eq.s32.totalorder %s15, 0
    %p101 = por %p99, %p100
    %p102 = scmp.ne.s32.totalorder %s91, %s94
    %p103 = scmp.eq.s32.totalorder %s20, 1
    %p104 = por %p102, %p103
    %p105 = scmp.ne.s32.totalorder %s94, %s95
    %p106 = scmp.eq.s32.totalorder %s20, 0
    %p107 = por %p105, %p106
    %p108 = scmp.ne.s32.totalorder %s94, %s95
    %p109 = scmp.eq.s32.totalorder %s21, 1
    %p110 = por %p108, %p109
    %p112 = scmp.ne.s32.totalorder %s95, %s111
    %p113 = scmp.eq.s32.totalorder %s21, 0
    %p114 = por %p112, %p113
    %s116 = sadd.s32 %s115, 1
    %p119 = scmp.eq.s32.totalorder %s15, 1
    %p120 = scmp.ne.s32.totalorder %s115, %s117
    %p121 = scmp.eq.s32.totalorder %s15, 0
    %p122 = por %p120, %p121
    %p123 = scmp.ne.s32.totalorder %s115, %s117
    %p124 = scmp.eq.s32.totalorder %s20, 1
    %p125 = por %p123, %p124
    %p126 = scmp.ne.s32.totalorder %s117, %s118
    %p127 = scmp.eq.s32.totalorder %s20, 0
    %p128 = por %p126, %p127
    %p129 = scmp.ne.s32.totalorder %s117, %s118
    %p130 = scmp.eq.s32.totalorder %s21, 1
    %p131 = por %p129, %p130
    %p133 = scmp.ne.s32.totalorder %s118, %s132
    %p134 = scmp.eq.s32.totalorder %s21, 0
    %p135 = por %p133, %p134
    %s137 = sadd.s32 %s136, 1
    %p140 = scmp.eq.s32.totalorder %s15, 1
    %p141 = scmp.ne.s32.totalorder %s136, %s138
    %p142 = scmp.eq.s32.totalorder %s15, 0
    %p143 = por %p141, %p142
    %p144 = scmp.ne.s32.totalorder %s136, %s138
    %p145 = scmp.eq.s32.totalorder %s20, 1
    %p146 = por %p144, %p145
    %p147 = scmp.ne.s32.totalorder %s138, %s139
    %p148 = scmp.eq.s32.totalorder %s20, 0
    %p149 = por %p147, %p148
    %p150 = scmp.ne.s32.totalorder %s138, %s139
    %p151 = scmp.eq.s32.totalorder %s21, 1
    %p152 = por %p150, %p151
    %p154 = scmp.ne.s32.totalorder %s139, %s153
    %p155 = scmp.eq.s32.totalorder %s21, 0
    %p156 = por %p154, %p155
    %s158 = sadd.s32 %s157, 1
    %p161 = scmp.eq.s32.totalorder %s15, 1
    %p162 = scmp.ne.s32.totalorder %s157, %s159
    %p163 = scmp.eq.s32.totalorder %s15, 0
    %p164 = por %p162, %p163
    %p165 = scmp.ne.s32.totalorder %s157, %s159
    %p166 = scmp.eq.s32.totalorder %s20, 1
    %p167 = por %p165, %p166
    %p168 = scmp.ne.s32.totalorder %s159, %s160
    %p169 = scmp.eq.s32.totalorder %s20, 0
    %p170 = por %p168, %p169
    %p171 = scmp.ne.s32.totalorder %s159, %s160
    %p172 = scmp.eq.s32.totalorder %s21, 1
    %p173 = por %p171, %p172
    %p175 = scmp.ne.s32.totalorder %s160, %s174
    %p176 = scmp.eq.s32.totalorder %s21, 0
    %p177 = por %p175, %p176
    %s178 = ssub.s32 %s22, %s34
    %s179 = ssub.s32 %s23, %s30
    %s180 = sor.u32 %s178, %s179
    %p181 = scmp.eq.s32.totalorder %s180, 0
    %s183 = sadd.s32 %s182, 1
    %s184 = scalar_select %p181, %s182, %s183
    %p187 = pneg %p181
    %p188 = scmp.eq.s32.totalorder %s15, 1
    %p189 = por %p187, %p188
    %p190 = scmp.ne.s32.totalorder %s182, %s185
    %p191 = scmp.eq.s32.totalorder %s15, 0
    %p192 = por %p190, %p191
    %p193 = scmp.ne.s32.totalorder %s182, %s185
    %p194 = scmp.eq.s32.totalorder %s20, 1
    %p195 = por %p193, %p194
    %p196 = scmp.ne.s32.totalorder %s185, %s186
    %p197 = scmp.eq.s32.totalorder %s20, 0
    %p198 = por %p196, %p197
    %p199 = scmp.ne.s32.totalorder %s185, %s186
    %p200 = scmp.eq.s32.totalorder %s21, 1
    %p201 = por %p199, %p200
    %p203 = scmp.ne.s32.totalorder %s186, %s202
    %p204 = scmp.eq.s32.totalorder %s21, 0
    %p205 = por %p203, %p204
    %s206 = ssub.s32 %s22, %s34
    %s207 = ssub.s32 %s23, %s30
    %s208 = sor.u32 %s206, %s207
    %p209 = scmp.eq.s32.totalorder %s208, 0
    %s211 = sadd.s32 %s210, 1
    %s212 = scalar_select %p209, %s210, %s211
    %p215 = pneg %p209
    %p216 = scmp.eq.s32.totalorder %s15, 1
    %p217 = por %p215, %p216
    %p218 = scmp.ne.s32.totalorder %s210, %s213
    %p219 = scmp.eq.s32.totalorder %s15, 0
    %p220 = por %p218, %p219
    %p221 = scmp.ne.s32.totalorder %s210, %s213
    %p222 = scmp.eq.s32.totalorder %s20, 1
    %p223 = por %p221, %p222
    %p224 = scmp.ne.s32.totalorder %s213, %s214
    %p225 = scmp.eq.s32.totalorder %s20, 0
    %p226 = por %p224, %p225
    %p227 = scmp.ne.s32.totalorder %s213, %s214
    %p228 = scmp.eq.s32.totalorder %s21, 1
    %p229 = por %p227, %p228
    %p231 = scmp.ne.s32.totalorder %s214, %s230
    %p232 = scmp.eq.s32.totalorder %s21, 0
    %p233 = por %p231, %p232
    %s234 = ssub.s32 %s22, %s34
    %s235 = ssub.s32 %s23, %s30
    %s236 = sor.u32 %s234, %s235
    %p237 = scmp.eq.s32.totalorder %s236, 0
    %s239 = sadd.s32 %s238, 1
    %s240 = scalar_select %p237, %s238, %s239
    %p243 = pneg %p237
    %p244 = scmp.eq.s32.totalorder %s15, 1
    %p245 = por %p243, %p244
    %p246 = scmp.ne.s32.totalorder %s238, %s241
    %p247 = scmp.eq.s32.totalorder %s15, 0
    %p248 = por %p246, %p247
    %p249 = scmp.ne.s32.totalorder %s238, %s241
    %p250 = scmp.eq.s32.totalorder %s20, 1
    %p251 = por %p249, %p250
    %p252 = scmp.ne.s32.totalorder %s241, %s242
    %p253 = scmp.eq.s32.totalorder %s20, 0
    %p254 = por %p252, %p253
    %p255 = scmp.ne.s32.totalorder %s241, %s242
    %p256 = scmp.eq.s32.totalorder %s21, 1
    %p257 = por %p255, %p256
    %p259 = scmp.ne.s32.totalorder %s242, %s258
    %p260 = scmp.eq.s32.totalorder %s21, 0
    %p261 = por %p259, %p260
    %p262 = scmp.le.s32.totalorder 1, %s15
    %p263 = scmp.lt.s32.totalorder %s15, 3
    %p264 = pnand %p262, %p263
    %p265 = pneg %p264
    // Predicated region
    $region9: #{attention_block.2} parent=5 // pred_check
      _
    $region10: #{attention_block.2} parent=5 // pred_check_branch
      %267 = sbr.rel (%p264) target = $region12
    $region11: #{attention_block.2} parent=5 // pred_region
      %s268 = ssub.s32 %s15, 1
      // Predicated region
      $region13: #{attention_block.2} parent=11 // pred_check
        %p269 = pneg %p128
      $region14: #{attention_block.2} parent=11 // pred_check_branch
        %271 = sbr.rel (%p269) target = $region16
      $region15: #{attention_block.2} parent=11 // pred_region
        _
      $region16: #{attention_block.2} parent=11 // pred_fallthru
        _
      // Predicated region
      $region17: #{attention_block.2} parent=11 // pred_check
        %p272 = pneg %p149
      $region18: #{attention_block.2} parent=11 // pred_check_branch
        %274 = sbr.rel (%p272) target = $region20
      $region19: #{attention_block.2} parent=11 // pred_region
        _
      $region20: #{attention_block.2} parent=11 // pred_fallthru
        _
      // Predicated region
      $region21: #{attention_block.2} parent=11 // pred_check
        %p275 = pneg %p170
      $region22: #{attention_block.2} parent=11 // pred_check_branch
        %277 = sbr.rel (%p275) target = $region24
      $region23: #{attention_block.2} parent=11 // pred_region
        _
      $region24: #{attention_block.2} parent=11 // pred_fallthru
        _
    $region12: #{attention_block.2} parent=5 // pred_fallthru
      _
    %p278 = scmp.lt.s32.totalorder %s15, 2
    // Predicated region
    $region25: #{attention_block.2} parent=5 // pred_check
      %p279 = pneg %p278
    $region26: #{attention_block.2} parent=5 // pred_check_branch
      %281 = sbr.rel (%p279) target = $region28
    $region27: #{attention_block.2} parent=5 // pred_region
      // Predicated region
      $region29: #{attention_block.2} parent=27 // pred_check
        %p282 = pneg %p49
      $region30: #{attention_block.2} parent=27 // pred_check_branch
        %284 = sbr.rel (%p282) target = $region32
      $region31: #{attention_block.2} parent=27 // pred_region
        %s285 = smul.u32 2, %s23
        %p286 = scmp.lt.s32.totalorder %s22, 1
        %s287 = scalar_select %p286, %s22, 1
        %p288 = scmp.lt.s32.totalorder %s285, 1
        %s289 = scalar_select %p288, %s285, 1
        %s290 = smul.addr %s287, 8
        %s291 = sadd.s32 %s289, %s290
        %s292 = smul.addr %s291, 8
        %s293 = scalar_lea.vmem %s0, %s292
        %s294 = smul.u32 2, %s23
      $region32: #{attention_block.2} parent=27 // pred_fallthru
        _
      // Predicated region
      $region33: #{attention_block.2} parent=27 // pred_check
        %p295 = pneg %p75
      $region34: #{attention_block.2} parent=27 // pred_check_branch
        %297 = sbr.rel (%p295) target = $region36
      $region35: #{attention_block.2} parent=27 // pred_region
        %p298 = scmp.lt.s32.totalorder %s22, 1
        %s299 = scalar_select %p298, %s22, 1
        %s300 = smul.addr %s299, 4
        %s301 = smul.addr %s300, 8
        %s302 = scalar_lea.vmem %s1, %s301
      $region36: #{attention_block.2} parent=27 // pred_fallthru
        _
      // Predicated region
      $region37: #{attention_block.2} parent=27 // pred_check
        %p303 = pneg %p101
      $region38: #{attention_block.2} parent=27 // pred_check_branch
        %305 = sbr.rel (%p303) target = $region40
      $region39: #{attention_block.2} parent=27 // pred_region
        %p306 = scmp.lt.s32.totalorder %s22, 1
        %s307 = scalar_select %p306, %s22, 1
        %s308 = smul.addr %s307, 4
        %s309 = smul.addr %s308, 8
        %s310 = scalar_lea.vmem %s2, %s309
      $region40: #{attention_block.2} parent=27 // pred_fallthru
        _
    $region28: #{attention_block.2} parent=5 // pred_fallthru
      _
    %p311 = scmp.le.s32.totalorder 1, %s15
    %p312 = scmp.lt.s32.totalorder %s15, 3
    %p313 = pnand %p311, %p312
    %p314 = pneg %p313
    // Predicated region
    $region41: #{attention_block.2} parent=5 // pred_check
      _
    $region42: #{attention_block.2} parent=5 // pred_check_branch
      %316 = sbr.rel (%p313) target = $region44
    $region43: #{attention_block.2} parent=5 // pred_region
      %s317 = ssub.s32 %s15, 1
      %s318 = smul.u32 2, %s25
      %p319 = scmp.lt.s32.totalorder %s24, 1
      %s320 = scalar_select %p319, %s24, 1
      %p321 = scmp.lt.s32.totalorder %s318, 1
      %s322 = scalar_select %p321, %s318, 1
      %s323 = smul.addr %s320, 8
      %s324 = sadd.s32 %s322, %s323
      %s325 = smul.addr %s324, 8
      %s326 = scalar_lea.vmem %s0, %s325
      %p327 = pneg %p55
      %p328 = pneg %p52
      %p329 = scmp.lt.s32.totalorder %s24, 1
      %s330 = scalar_select %p329, %s24, 1
      %s331 = smul.addr %s330, 4
      %s332 = smul.addr %s331, 8
      %s333 = scalar_lea.vmem %s1, %s332
      %p334 = pneg %p81
      %p335 = pneg %p78
      %p336 = scmp.lt.s32.totalorder %s24, 1
      %s337 = scalar_select %p336, %s24, 1
      %s338 = smul.addr %s337, 4
      %s339 = smul.addr %s338, 8
      %s340 = scalar_lea.vmem %s2, %s339
      %p341 = pneg %p107
      %p342 = pneg %p104
      %p343 = pneg %p128
      %p344 = pneg %p125
      %p345 = pneg %p149
      %p346 = pneg %p146
      %p347 = pneg %p170
      %p348 = pneg %p167
      %p349 = pneg %p198
      %p350 = pneg %p195
      %s351 = smul.u32 2, %s25
      %p352 = scmp.lt.s32.totalorder %s24, 1
      %s353 = scalar_select %p352, %s24, 1
      %p354 = scmp.lt.s32.totalorder %s351, 1
      %s355 = scalar_select %p354, %s351, 1
      %s356 = smul.addr %s353, 8
      %s357 = sadd.s32 %s355, %s356
      %s358 = smul.addr %s357, 4
      %s359 = scalar_lea.vmem %s6, %s358
      %p360 = pneg %p226
      %p361 = pneg %p223
      %s362 = smul.u32 2, %s25
      %p363 = scmp.lt.s32.totalorder %s24, 1
      %s364 = scalar_select %p363, %s24, 1
      %p365 = scmp.lt.s32.totalorder %s362, 1
      %s366 = scalar_select %p365, %s362, 1
      %s367 = smul.addr %s364, 8
      %s368 = sadd.s32 %s366, %s367
      %s369 = smul.addr %s368, 4
      %s370 = scalar_lea.vmem %s7, %s369
      %p371 = pneg %p254
      %p372 = pneg %p251
      %s373 = smul.u32 2, %s25
      %p374 = scmp.lt.s32.totalorder %s24, 1
      %s375 = scalar_select %p374, %s24, 1
      %p376 = scmp.lt.s32.totalorder %s373, 1
      %s377 = scalar_select %p376, %s373, 1
      %s378 = smul.addr %s375, 8
      %s379 = sadd.s32 %s377, %s378
      %s380 = smul.addr %s379, 4
      %s381 = scalar_lea.vmem %s8, %s380
      %s382 = smul.u32 2, %s25
      %p383 = scmp.lt.s32.totalorder %s24, 1
      %s384 = scalar_select %p383, %s24, 1
      %p385 = scmp.lt.s32.totalorder %s382, 1
      %s386 = scalar_select %p385, %s382, 1
      %s387 = smul.addr %s384, 8
      %s388 = sadd.s32 %s386, %s387
      %s389 = smul.addr %s388, 8
      %s390 = scalar_lea.vmem %s0, %s389
      %s391 = smul.u32 2, %s25
      %p392 = scmp.lt.s32.totalorder %s24, 1
      %s393 = scalar_select %p392, %s24, 1
      %s394 = smul.addr %s393, 4
      %s395 = smul.addr %s394, 8
      %s396 = scalar_lea.vmem %s1, %s395
      %p397 = scmp.lt.s32.totalorder %s24, 1
      %s398 = scalar_select %p397, %s24, 1
      %s399 = smul.addr %s398, 4
      %s400 = smul.addr %s399, 8
      %s401 = scalar_lea.vmem %s2, %s400
      %s402 = smul.u32 2, %s25
      %p403 = scmp.lt.s32.totalorder %s24, 1
      %s404 = scalar_select %p403, %s24, 1
      %p405 = scmp.lt.s32.totalorder %s402, 1
      %s406 = scalar_select %p405, %s402, 1
      %s407 = smul.addr %s404, 8
      %s408 = sadd.s32 %s406, %s407
      %s409 = smul.addr %s408, 4
      %s410 = scalar_lea.vmem %s6, %s409
      %s411 = smul.u32 2, %s25
      %s412 = smul.u32 2, %s25
      %p413 = scmp.lt.s32.totalorder %s24, 1
      %s414 = scalar_select %p413, %s24, 1
      %p415 = scmp.lt.s32.totalorder %s412, 1
      %s416 = scalar_select %p415, %s412, 1
      %s417 = smul.addr %s414, 8
      %s418 = sadd.s32 %s416, %s417
      %s419 = smul.addr %s418, 4
      %s420 = scalar_lea.vmem %s7, %s419
      %s421 = smul.u32 2, %s25
      %s422 = smul.u32 2, %s25
      %p423 = scmp.lt.s32.totalorder %s24, 1
      %s424 = scalar_select %p423, %s24, 1
      %p425 = scmp.lt.s32.totalorder %s422, 1
      %s426 = scalar_select %p425, %s422, 1
      %s427 = smul.addr %s424, 8
      %s428 = sadd.s32 %s426, %s427
      %s429 = smul.addr %s428, 4
      %s430 = scalar_lea.vmem %s8, %s429
      %s431 = smul.u32 2, %s25
      %v433 = vld [vmem:[%s390] sm:$0xff]
      %v434 = vld [vmem:[%s390 + $0x8] sm:$0xff]
      %v435 = vld [vmem:[%s390 + $0x10] sm:$0xff]
      %v436 = vld [vmem:[%s390 + $0x18] sm:$0xff]
      %v437 = vld [vmem:[%s390 + $0x20] sm:$0xff]
      %v438 = vld [vmem:[%s390 + $0x28] sm:$0xff]
      %v439 = vld [vmem:[%s390 + $0x30] sm:$0xff]
      %v440 = vld [vmem:[%s390 + $0x38] sm:$0xff]
      %v441 = vld [vmem:[%s396] sm:$0xff]
      %v442 = vld [vmem:[%s396 + $0x8] sm:$0xff]
      %v443 = vld [vmem:[%s396 + $0x10] sm:$0xff]
      %v444 = vld [vmem:[%s396 + $0x18] sm:$0xff]
      %446 = vset.pattern.permute.xlu0 0
      %447 = vperm.xlu0 %446, %v441
      %v448 = vpop.permute.xlu0 %447
      %451 = vset.pattern.permute.xlu0 0
      %452 = vperm.xlu0 %451, %v442
      %v453 = vpop.permute.xlu0 %452
      %456 = vset.pattern.permute.xlu0 0
      %457 = vperm.xlu0 %456, %v443
      %v458 = vpop.permute.xlu0 %457
      %461 = vset.pattern.permute.xlu0 0
      %462 = vperm.xlu0 %461, %v444
      %v463 = vpop.permute.xlu0 %462
      %v465 = vmul.f32 %v433, %v448
      %v466 = vmul.f32 %v434, %v448
      %v467 = vmul.f32 %v435, %v453
      %v468 = vmul.f32 %v436, %v453
      %v469 = vmul.f32 %v437, %v458
      %v470 = vmul.f32 %v438, %v458
      %v471 = vmul.f32 %v439, %v463
      %v472 = vmul.f32 %v440, %v463
      %v473 = vld [vmem:[%s401] sm:$0xff]
      %v474 = vld [vmem:[%s401 + $0x8] sm:$0xff]
      %v475 = vld [vmem:[%s401 + $0x10] sm:$0xff]
      %v476 = vld [vmem:[%s401 + $0x18] sm:$0xff]
      %478 = vset.pattern.permute.xlu0 0
      %479 = vperm.xlu0 %478, %v473
      %v480 = vpop.permute.xlu0 %479
      %483 = vset.pattern.permute.xlu0 0
      %484 = vperm.xlu0 %483, %v474
      %v485 = vpop.permute.xlu0 %484
      %488 = vset.pattern.permute.xlu0 0
      %489 = vperm.xlu0 %488, %v475
      %v490 = vpop.permute.xlu0 %489
      %493 = vset.pattern.permute.xlu0 0
      %494 = vperm.xlu0 %493, %v476
      %v495 = vpop.permute.xlu0 %494
      %v497 = vadd.f32 %v465, %v480
      %v498 = vadd.f32 %v466, %v480
      %v499 = vadd.f32 %v467, %v485
      %v500 = vadd.f32 %v468, %v485
      %v501 = vadd.f32 %v469, %v490
      %v502 = vadd.f32 %v470, %v490
      %v503 = vadd.f32 %v471, %v495
      %v504 = vadd.f32 %v472, %v495
      %v505 = vpack.c.bf16 %v499, %v497
      %v506 = vpack.c.bf16 %v500, %v498
      %v507 = vpack.c.bf16 %v503, %v501
      %v508 = vpack.c.bf16 %v504, %v502
      %v509 = vld [vmem:[%s3] sm:$0xf]
      %v510 = vld [vmem:[%s3 + $0x4] sm:$0xf]
      %v511 = vld [vmem:[%s3 + $0x8] sm:$0xf]
      %v512 = vld [vmem:[%s3 + $0xc] sm:$0xf]
      %v517 = vunpack.c.l.b16 %v509
      %v518 = vunpack.c.l.b16 %v510
      %v519 = vunpack.c.l.b16 %v511
      %v520 = vunpack.c.l.b16 %v512
      %v521 = vpack.c.b16 %v518, %v517
      %v522 = vpack.c.b16 %v520, %v519
      %vm523 = vcmask 261120
      %v525 = vsel %vm523, %v521, 0
      %v528 = vsel %vm523, %v522, 0
      %530 = vmatprep.subr.bf16.mxu0 0
      %531 = vmatpush1.bf16.msra.mxu0 0
      %532 = vmatprep.subr.bf16.mxu0 0
      %533 = vmatpush1.bf16.msra.mxu0 0
      %534 = vmatprep.subr.bf16.mxu0 0
      %535 = vmatpush1.bf16.msra.mxu0 0
      %536 = vmatprep.subr.bf16.mxu0 0
      %537 = vmatpush1.bf16.msra.mxu0 0
      %538 = vmatprep.subr.bf16.mxu0 0
      %539 = vmatpush1.bf16.msra.mxu0 0
      %540 = vmatprep.subr.bf16.mxu0 0
      %541 = vmatpush1.bf16.msra.mxu0 0
      %542 = vmatprep.subr.bf16.mxu0 %v508
      %543 = vmatpush1.bf16.msra.mxu0 %v507
      %544 = vmatprep.subr.bf16.mxu0 %v506
      %545 = vmatpush1.bf16.msra.mxu0 %v505
      %546 = vmatprep.subr.bf16.mxu0 0
      %547 = vmatpush2.bf16.msra.mxu0 0
      %548 = vmatprep.subr.bf16.mxu0 0
      %549 = vmatpush2.bf16.msra.mxu0 0
      %550 = vmatprep.subr.bf16.mxu0 0
      %551 = vmatpush2.bf16.msra.mxu0 0
      %552 = vmatprep.subr.bf16.mxu0 0
      %553 = vmatpush2.bf16.msra.mxu0 0
      %554 = vmatprep.subr.bf16.mxu0 0
      %555 = vmatpush2.bf16.msra.mxu0 0
      %556 = vmatprep.subr.bf16.mxu0 0
      %557 = vmatpush2.bf16.msra.mxu0 0
      %558 = vmatprep.subr.bf16.mxu0 0
      %559 = vmatpush2.bf16.msra.mxu0 0
      %560 = vmatprep.subr.bf16.mxu0 0
      %561 = vmatpush2.bf16.msra.mxu0 0
      %562 = vmatprep.mubr.bf16.mxu0 0
      %563 = vmatmul.mubr.bf16.gmra.mxu0 %v525
      %v564 = vpop.f32.mrf.mxu0
      %v565 = vadd.f32 0.0, %v564
      %v566 = vpop.f32.mrf.mxu0
      %v567 = vadd.f32 0.0, %v566
      %v568 = vpop.f32.mrf.mxu0
      %v569 = vadd.f32 0.0, %v568
      %v570 = vpop.f32.mrf.mxu0
      %v571 = vadd.f32 0.0, %v570
      %572 = vmatprep.mubr.bf16.mxu0 0
      %573 = vmatmul.mubr.bf16.gmra.mxu0 %v528
      %v574 = vpop.f32.mrf.mxu0
      %v575 = vadd.f32 0.0, %v574
      %v576 = vpop.f32.mrf.mxu0
      %v577 = vadd.f32 0.0, %v576
      %v578 = vpop.f32.mrf.mxu0
      %v579 = vadd.f32 0.0, %v578
      %v580 = vpop.f32.mrf.mxu0
      %v581 = vadd.f32 0.0, %v580
      %582 = vdwg.mxu0
      %v583 = vpack.c.bf16 %v569, %v565
      %v584 = vpack.c.bf16 %v571, %v567
      %v585 = vpack.c.bf16 %v579, %v575
      %v586 = vpack.c.bf16 %v581, %v577
      %v591 = vunpack.c.l.b16 %v583
      %v592 = vunpack.c.l.b16 %v584
      %v593 = vunpack.c.h.b16 %v583
      %v594 = vunpack.c.h.b16 %v584
      %v595 = vunpack.c.l.b16 %v585
      %v596 = vunpack.c.l.b16 %v586
      %v597 = vunpack.c.h.b16 %v585
      %v598 = vunpack.c.h.b16 %v586
      %v599 = vpack.c.b16 %v592, %v591
      %v600 = vpack.c.b16 %v594, %v593
      %v601 = vpack.c.b16 %v596, %v595
      %v602 = vpack.c.b16 %v598, %v597
      %607 = vst [vmem:[%s410] sm:$0xff] %v599
      %608 = vst [vmem:[%s410 + $0x8] sm:$0xff] %v600
      %609 = vst [vmem:[%s410 + $0x10] sm:$0xff] %v601
      %610 = vst [vmem:[%s410 + $0x18] sm:$0xff] %v602
      %v611 = vld [vmem:[%s4] sm:$0xf]
      %v612 = vld [vmem:[%s4 + $0x4] sm:$0xf]
      %v613 = vld [vmem:[%s4 + $0x8] sm:$0xf]
      %v614 = vld [vmem:[%s4 + $0xc] sm:$0xf]
      %v619 = vunpack.c.l.b16 %v611
      %v620 = vunpack.c.l.b16 %v612
      %v621 = vunpack.c.l.b16 %v613
      %v622 = vunpack.c.l.b16 %v614
      %v623 = vpack.c.b16 %v620, %v619
      %v624 = vpack.c.b16 %v622, %v621
      %v626 = vsel %vm523, %v623, 0
      %v629 = vsel %vm523, %v624, 0
      %631 = vmatprep.subr.bf16.mxu0 0
      %632 = vmatpush1.bf16.msra.mxu0 0
      %633 = vmatprep.subr.bf16.mxu0 0
      %634 = vmatpush1.bf16.msra.mxu0 0
      %635 = vmatprep.subr.bf16.mxu0 0
      %636 = vmatpush1.bf16.msra.mxu0 0
      %637 = vmatprep.subr.bf16.mxu0 0
      %638 = vmatpush1.bf16.msra.mxu0 0
      %639 = vmatprep.subr.bf16.mxu0 0
      %640 = vmatpush1.bf16.msra.mxu0 0
      %641 = vmatprep.subr.bf16.mxu0 0
      %642 = vmatpush1.bf16.msra.mxu0 0
      %643 = vmatprep.subr.bf16.mxu0 %v508
      %644 = vmatpush1.bf16.msra.mxu0 %v507
      %645 = vmatprep.subr.bf16.mxu0 %v506
      %646 = vmatpush1.bf16.msra.mxu0 %v505
      %647 = vmatprep.subr.bf16.mxu0 0
      %648 = vmatpush2.bf16.msra.mxu0 0
      %649 = vmatprep.subr.bf16.mxu0 0
      %650 = vmatpush2.bf16.msra.mxu0 0
      %651 = vmatprep.subr.bf16.mxu0 0
      %652 = vmatpush2.bf16.msra.mxu0 0
      %653 = vmatprep.subr.bf16.mxu0 0
      %654 = vmatpush2.bf16.msra.mxu0 0
      %655 = vmatprep.subr.bf16.mxu0 0
      %656 = vmatpush2.bf16.msra.mxu0 0
      %657 = vmatprep.subr.bf16.mxu0 0
      %658 = vmatpush2.bf16.msra.mxu0 0
      %659 = vmatprep.subr.bf16.mxu0 0
      %660 = vmatpush2.bf16.msra.mxu0 0
      %661 = vmatprep.subr.bf16.mxu0 0
      %662 = vmatpush2.bf16.msra.mxu0 0
      %663 = vmatprep.mubr.bf16.mxu0 0
      %664 = vmatmul.mubr.bf16.gmra.mxu0 %v626
      %v665 = vpop.f32.mrf.mxu0
      %v666 = vadd.f32 0.0, %v665
      %v667 = vpop.f32.mrf.mxu0
      %v668 = vadd.f32 0.0, %v667
      %v669 = vpop.f32.mrf.mxu0
      %v670 = vadd.f32 0.0, %v669
      %v671 = vpop.f32.mrf.mxu0
      %v672 = vadd.f32 0.0, %v671
      %673 = vmatprep.mubr.bf16.mxu0 0
      %674 = vmatmul.mubr.bf16.gmra.mxu0 %v629
      %v675 = vpop.f32.mrf.mxu0
      %v676 = vadd.f32 0.0, %v675
      %v677 = vpop.f32.mrf.mxu0
      %v678 = vadd.f32 0.0, %v677
      %v679 = vpop.f32.mrf.mxu0
      %v680 = vadd.f32 0.0, %v679
      %v681 = vpop.f32.mrf.mxu0
      %v682 = vadd.f32 0.0, %v681
      %683 = vdwg.mxu0
      %v684 = vpack.c.bf16 %v670, %v666
      %v685 = vpack.c.bf16 %v672, %v668
      %v686 = vpack.c.bf16 %v680, %v676
      %v687 = vpack.c.bf16 %v682, %v678
      %v692 = vunpack.c.l.b16 %v684
      %v693 = vunpack.c.l.b16 %v685
      %v694 = vunpack.c.h.b16 %v684
      %v695 = vunpack.c.h.b16 %v685
      %v696 = vunpack.c.l.b16 %v686
      %v697 = vunpack.c.l.b16 %v687
      %v698 = vunpack.c.h.b16 %v686
      %v699 = vunpack.c.h.b16 %v687
      %v700 = vpack.c.b16 %v693, %v692
      %v701 = vpack.c.b16 %v695, %v694
      %v702 = vpack.c.b16 %v697, %v696
      %v703 = vpack.c.b16 %v699, %v698
      %708 = vst [vmem:[%s420] sm:$0xff] %v700
      %709 = vst [vmem:[%s420 + $0x8] sm:$0xff] %v701
      %710 = vst [vmem:[%s420 + $0x10] sm:$0xff] %v702
      %711 = vst [vmem:[%s420 + $0x18] sm:$0xff] %v703
      %v712 = vld [vmem:[%s5] sm:$0xf]
      %v713 = vld [vmem:[%s5 + $0x4] sm:$0xf]
      %v714 = vld [vmem:[%s5 + $0x8] sm:$0xf]
      %v715 = vld [vmem:[%s5 + $0xc] sm:$0xf]
      %v720 = vunpack.c.l.b16 %v712
      %v721 = vunpack.c.l.b16 %v713
      %v722 = vunpack.c.l.b16 %v714
      %v723 = vunpack.c.l.b16 %v715
      %v724 = vpack.c.b16 %v721, %v720
      %v725 = vpack.c.b16 %v723, %v722
      %v727 = vsel %vm523, %v724, 0
      %v730 = vsel %vm523, %v725, 0
      %732 = vmatprep.subr.bf16.mxu0 0
      %733 = vmatpush1.bf16.msra.mxu0 0
      %734 = vmatprep.subr.bf16.mxu0 0
      %735 = vmatpush1.bf16.msra.mxu0 0
      %736 = vmatprep.subr.bf16.mxu0 0
      %737 = vmatpush1.bf16.msra.mxu0 0
      %738 = vmatprep.subr.bf16.mxu0 0
      %739 = vmatpush1.bf16.msra.mxu0 0
      %740 = vmatprep.subr.bf16.mxu0 0
      %741 = vmatpush1.bf16.msra.mxu0 0
      %742 = vmatprep.subr.bf16.mxu0 0
      %743 = vmatpush1.bf16.msra.mxu0 0
      %744 = vmatprep.subr.bf16.mxu0 %v508
      %745 = vmatpush1.bf16.msra.mxu0 %v507
      %746 = vmatprep.subr.bf16.mxu0 %v506
      %747 = vmatpush1.bf16.msra.mxu0 %v505
      %748 = vmatprep.subr.bf16.mxu0 0
      %749 = vmatpush2.bf16.msra.mxu0 0
      %750 = vmatprep.subr.bf16.mxu0 0
      %751 = vmatpush2.bf16.msra.mxu0 0
      %752 = vmatprep.subr.bf16.mxu0 0
      %753 = vmatpush2.bf16.msra.mxu0 0
      %754 = vmatprep.subr.bf16.mxu0 0
      %755 = vmatpush2.bf16.msra.mxu0 0
      %756 = vmatprep.subr.bf16.mxu0 0
      %757 = vmatpush2.bf16.msra.mxu0 0
      %758 = vmatprep.subr.bf16.mxu0 0
      %759 = vmatpush2.bf16.msra.mxu0 0
      %760 = vmatprep.subr.bf16.mxu0 0
      %761 = vmatpush2.bf16.msra.mxu0 0
      %762 = vmatprep.subr.bf16.mxu0 0
      %763 = vmatpush2.bf16.msra.mxu0 0
      %764 = vmatprep.mubr.bf16.mxu0 0
      %765 = vmatmul.mubr.bf16.gmra.mxu0 %v727
      %v766 = vpop.f32.mrf.mxu0
      %v767 = vadd.f32 0.0, %v766
      %v768 = vpop.f32.mrf.mxu0
      %v769 = vadd.f32 0.0, %v768
      %v770 = vpop.f32.mrf.mxu0
      %v771 = vadd.f32 0.0, %v770
      %v772 = vpop.f32.mrf.mxu0
      %v773 = vadd.f32 0.0, %v772
      %774 = vmatprep.mubr.bf16.mxu0 0
      %775 = vmatmul.mubr.bf16.gmra.mxu0 %v730
      %v776 = vpop.f32.mrf.mxu0
      %v777 = vadd.f32 0.0, %v776
      %v778 = vpop.f32.mrf.mxu0
      %v779 = vadd.f32 0.0, %v778
      %v780 = vpop.f32.mrf.mxu0
      %v781 = vadd.f32 0.0, %v780
      %v782 = vpop.f32.mrf.mxu0
      %v783 = vadd.f32 0.0, %v782
      %784 = vdwg.mxu0
      %v785 = vpack.c.bf16 %v771, %v767
      %v786 = vpack.c.bf16 %v773, %v769
      %v787 = vpack.c.bf16 %v781, %v777
      %v788 = vpack.c.bf16 %v783, %v779
      %v793 = vunpack.c.l.b16 %v785
      %v794 = vunpack.c.l.b16 %v786
      %v795 = vunpack.c.h.b16 %v785
      %v796 = vunpack.c.h.b16 %v786
      %v797 = vunpack.c.l.b16 %v787
      %v798 = vunpack.c.l.b16 %v788
      %v799 = vunpack.c.h.b16 %v787
      %v800 = vunpack.c.h.b16 %v788
      %v801 = vpack.c.b16 %v794, %v793
      %v802 = vpack.c.b16 %v796, %v795
      %v803 = vpack.c.b16 %v798, %v797
      %v804 = vpack.c.b16 %v800, %v799
      %809 = vst [vmem:[%s430] sm:$0xff] %v801
      %810 = vst [vmem:[%s430 + $0x8] sm:$0xff] %v802
      %811 = vst [vmem:[%s430 + $0x10] sm:$0xff] %v803
      %812 = vst [vmem:[%s430 + $0x18] sm:$0xff] %v804
      %s813 = smul.u32 2, %s25
      %p814 = scmp.lt.s32.totalorder %s24, 1
      %s815 = scalar_select %p814, %s24, 1
      %p816 = scmp.lt.s32.totalorder %s813, 1
      %s817 = scalar_select %p816, %s813, 1
      %s818 = smul.addr %s815, 8
      %s819 = sadd.s32 %s817, %s818
      %s820 = smul.addr %s819, 4
      %s821 = scalar_lea.vmem %s6, %s820
      %s822 = smul.u32 2, %s25
      %p823 = scmp.lt.s32.totalorder %s24, 1
      %s824 = scalar_select %p823, %s24, 1
      %p825 = scmp.lt.s32.totalorder %s822, 1
      %s826 = scalar_select %p825, %s822, 1
      %s827 = smul.addr %s824, 8
      %s828 = sadd.s32 %s826, %s827
      %s829 = smul.addr %s828, 4
      %s830 = scalar_lea.vmem %s7, %s829
      %s831 = smul.u32 2, %s25
      %p832 = scmp.lt.s32.totalorder %s24, 1
      %s833 = scalar_select %p832, %s24, 1
      %p834 = scmp.lt.s32.totalorder %s831, 1
      %s835 = scalar_select %p834, %s831, 1
      %s836 = smul.addr %s833, 8
      %s837 = sadd.s32 %s835, %s836
      %s838 = smul.addr %s837, 4
      %s839 = scalar_lea.vmem %s8, %s838
      // Predicated region
      $region45: #{attention_block.2} parent=43 // pred_check
        %p840 = pneg %p195
      $region46: #{attention_block.2} parent=43 // pred_check_branch
        %842 = sbr.rel (%p840) target = $region48
      $region47: #{attention_block.2} parent=43 // pred_region
        %s843 = smul.u32 2, %s25
      $region48: #{attention_block.2} parent=43 // pred_fallthru
        _
      // Predicated region
      $region49: #{attention_block.2} parent=43 // pred_check
        %p844 = pneg %p223
      $region50: #{attention_block.2} parent=43 // pred_check_branch
        %846 = sbr.rel (%p844) target = $region52
      $region51: #{attention_block.2} parent=43 // pred_region
        %s847 = smul.u32 2, %s25
      $region52: #{attention_block.2} parent=43 // pred_fallthru
        _
      // Predicated region
      $region53: #{attention_block.2} parent=43 // pred_check
        %p848 = pneg %p251
      $region54: #{attention_block.2} parent=43 // pred_check_branch
        %850 = sbr.rel (%p848) target = $region56
      $region55: #{attention_block.2} parent=43 // pred_region
        %s851 = smul.u32 2, %s25
      $region56: #{attention_block.2} parent=43 // pred_fallthru
        _
    $region44: #{attention_block.2} parent=5 // pred_fallthru
      _
    %p852 = scmp.le.s32.totalorder 2, %s15
    // Predicated region
    $region57: #{attention_block.2} parent=5 // pred_check
      %p853 = pneg %p852
    $region58: #{attention_block.2} parent=5 // pred_check_branch
      %855 = sbr.rel (%p853) target = $region60
    $region59: #{attention_block.2} parent=5 // pred_region
      %s856 = ssub.s32 %s15, 2
      // Predicated region
      $region61: #{attention_block.2} parent=59 // pred_check
        %p857 = pneg %p201
      $region62: #{attention_block.2} parent=59 // pred_check_branch
        %859 = sbr.rel (%p857) target = $region64
      $region63: #{attention_block.2} parent=59 // pred_region
        %s860 = smul.u32 2, %s27
        %p861 = scmp.lt.s32.totalorder %s26, 1
        %s862 = scalar_select %p861, %s26, 1
        %p863 = scmp.lt.s32.totalorder %s860, 1
        %s864 = scalar_select %p863, %s860, 1
        %s865 = smul.addr %s862, 8
        %s866 = sadd.s32 %s864, %s865
        %s867 = smul.addr %s866, 4
        %s868 = scalar_lea.vmem %s6, %s867
      $region64: #{attention_block.2} parent=59 // pred_fallthru
        _
      // Predicated region
      $region65: #{attention_block.2} parent=59 // pred_check
        %p869 = pneg %p229
      $region66: #{attention_block.2} parent=59 // pred_check_branch
        %871 = sbr.rel (%p869) target = $region68
      $region67: #{attention_block.2} parent=59 // pred_region
        %s872 = smul.u32 2, %s27
        %p873 = scmp.lt.s32.totalorder %s26, 1
        %s874 = scalar_select %p873, %s26, 1
        %p875 = scmp.lt.s32.totalorder %s872, 1
        %s876 = scalar_select %p875, %s872, 1
        %s877 = smul.addr %s874, 8
        %s878 = sadd.s32 %s876, %s877
        %s879 = smul.addr %s878, 4
        %s880 = scalar_lea.vmem %s7, %s879
      $region68: #{attention_block.2} parent=59 // pred_fallthru
        _
      // Predicated region
      $region69: #{attention_block.2} parent=59 // pred_check
        %p881 = pneg %p257
      $region70: #{attention_block.2} parent=59 // pred_check_branch
        %883 = sbr.rel (%p881) target = $region72
      $region71: #{attention_block.2} parent=59 // pred_region
        %s884 = smul.u32 2, %s27
        %p885 = scmp.lt.s32.totalorder %s26, 1
        %s886 = scalar_select %p885, %s26, 1
        %p887 = scmp.lt.s32.totalorder %s884, 1
        %s888 = scalar_select %p887, %s884, 1
        %s889 = smul.addr %s886, 8
        %s890 = sadd.s32 %s888, %s889
        %s891 = smul.addr %s890, 4
        %s892 = scalar_lea.vmem %s8, %s891
      $region72: #{attention_block.2} parent=59 // pred_fallthru
        _
    $region60: #{attention_block.2} parent=5 // pred_fallthru
      _
  $region6: #{attention_block.2} parent=0 // loop_footer
    %s19 = sadd.s32 1, %s15
  $region7: #{attention_block.2} parent=0 // loop_footer_branch
    %14 = sbr.rel target = $region3
  $region8: #{attention_block.2} parent=0 // loop_exit
    _

// kernel: attention_block.3
$region0: #{attention_block.3}
  #allocation0 [shape = 'u32[]', space=smem, size = 0x4, offset = 0x4, fixed_abs, tag = 'smem constant byte address 0x4 - core index']
  #allocation1 [shape = 'u32[144,128]{1,0:T(1,128)}', space=vmem, size = 0x12000, scoped, tag = 'internal scratch']
  #allocation2 [shape = 'f32[2,1,256]{2,1,0:T(1,128)}', space=vmem, size = 0x800, scoped, tag = 'scratch operand']
  #allocation3 [shape = 'f32[2,1,256]{2,1,0:T(1,128)}', space=vmem, size = 0x800, scoped, tag = 'scratch operand']
  #allocation4 [shape = 'f32[2,16,256]{2,1,0:T(8,128)}', space=vmem, size = 0x8000, scoped, tag = 'scratch operand']
  %s0 = inlined_call_operand.vmem [shape: bf16[2,32,256], index: 0, kind: input, shape index: {}]
  %s1 = inlined_call_operand.vmem [shape: bf16[2,2,256,16], index: 1, kind: input, shape index: {}]
  %s2 = inlined_call_operand.vmem [shape: bf16[2,32,256], index: 2, kind: input, shape index: {}]
  %s3 = inlined_call_operand.vmem [shape: f32[2,32,256], index: 3, kind: input, shape index: {}]
  %s4 = inlined_call_operand.vmem [shape: bf16[32,32], index: 4, kind: input, shape index: {}]
  %s5 = inlined_call_operand.vmem [shape: f32[32,1], index: 5, kind: input, shape index: {}]
  %s6 = inlined_call_operand.vmem [shape: f32[2,32,256], index: 6, kind: output, shape index: {}]
  %s7 = sld [smem:[#allocation0]]
  $region65: #{attention_block.3} parent=0
    _
  %s9 = ssub.s32 1, %s7
  %s10 = scalar_select 0, %s9, %s7
  loop: start=0, step=1, limit=4
  $region2: #{attention_block.3} parent=0 // loop_pre_header
    _
  $region3: #{attention_block.3} parent=0 // loop_header
    %s12 = sphi 0, %s16
    %p13 = scmp.ge.s32.totalorder %s12, 4
    %s19 = sphi 0, %s38
    %s20 = sphi 0, %s34
    %s21 = sphi 0, %s30
    %s22 = sphi 0, %s19
    %s23 = sphi 0, %s20
    %s24 = sphi 0, %s21
    %s25 = sphi 0, %s22
    %s26 = sphi 0, %s23
    %s27 = sphi 0, %s24
    %s43 = sphi 0, %s45
    %s46 = sphi 0, %s43
    %s47 = sphi 0, %s46
    %s63 = sphi 0, %s47
    %s69 = sphi 0, %s71
    %s72 = sphi 0, %s69
    %s73 = sphi 0, %s72
    %s89 = sphi 0, %s73
    %s95 = sphi 0, %s97
    %s98 = sphi 0, %s95
    %s99 = sphi 0, %s98
    %s115 = sphi 0, %s99
    %s123 = sphi 0, %s125
    %s126 = sphi 0, %s123
    %s127 = sphi 0, %s126
    %s143 = sphi 0, %s127
    %s147 = sphi 0, %s147
    %s149 = sphi 0, %s147
    %s150 = sphi 0, %s149
    %s164 = sphi 0, %s150
    %s168 = sphi 0, %s168
    %s170 = sphi 0, %s168
    %s171 = sphi 0, %s170
    %s185 = sphi 0, %s171
    %s193 = sphi 0, %s195
    %s196 = sphi 0, %s193
    %s197 = sphi 0, %s196
    %s213 = sphi 0, %s197
  $region4: #{attention_block.3} parent=0 // loop_header_branch
    %15 = sbr.rel (%p13) target = $region8
  $region5: #{attention_block.3} parent=0 // loop_body
    %s17 = ssub.s32 %s12, 1
    %s18 = ssub.s32 %s12, 2
    %s28 = sadd.s32 1, %s21
    %p29 = scmp.ge.s32.totalorder %s28, 1
    %s30 = scalar_select %p29, 0, %s28
    %s31 = sadd.s32 1, %s20
    %s32 = scalar_select %p29, %s31, %s20
    %p33 = scmp.ge.s32.totalorder %s32, 1
    %s34 = scalar_select %p33, 0, %s32
    %s35 = sadd.s32 1, %s19
    %s36 = scalar_select %p33, %s35, %s19
    %p37 = scmp.ge.s32.totalorder %s36, 2
    %s38 = scalar_select %p37, 0, %s36
    %s39 = ssub.s32 %s19, %s38
    %s40 = ssub.s32 %s20, %s34
    %s41 = sor.u32 %s39, %s40
    %p42 = scmp.eq.s32.totalorder %s41, 0
    %s44 = sadd.s32 %s43, 1
    %s45 = scalar_select %p42, %s43, %s44
    %p48 = pneg %p42
    %p49 = scmp.eq.s32.totalorder %s12, 1
    %p50 = por %p48, %p49
    %p51 = scmp.ne.s32.totalorder %s43, %s46
    %p52 = scmp.eq.s32.totalorder %s12, 0
    %p53 = por %p51, %p52
    %p54 = scmp.ne.s32.totalorder %s43, %s46
    %p55 = scmp.eq.s32.totalorder %s17, 1
    %p56 = por %p54, %p55
    %p57 = scmp.ne.s32.totalorder %s46, %s47
    %p58 = scmp.eq.s32.totalorder %s17, 0
    %p59 = por %p57, %p58
    %p60 = scmp.ne.s32.totalorder %s46, %s47
    %p61 = scmp.eq.s32.totalorder %s18, 1
    %p62 = por %p60, %p61
    %p64 = scmp.ne.s32.totalorder %s47, %s63
    %p65 = scmp.eq.s32.totalorder %s18, 0
    %p66 = por %p64, %p65
    %s67 = ssub.s32 %s19, %s38
    %p68 = scmp.eq.s32.totalorder %s67, 0
    %s70 = sadd.s32 %s69, 1
    %s71 = scalar_select %p68, %s69, %s70
    %p74 = pneg %p68
    %p75 = scmp.eq.s32.totalorder %s12, 1
    %p76 = por %p74, %p75
    %p77 = scmp.ne.s32.totalorder %s69, %s72
    %p78 = scmp.eq.s32.totalorder %s12, 0
    %p79 = por %p77, %p78
    %p80 = scmp.ne.s32.totalorder %s69, %s72
    %p81 = scmp.eq.s32.totalorder %s17, 1
    %p82 = por %p80, %p81
    %p83 = scmp.ne.s32.totalorder %s72, %s73
    %p84 = scmp.eq.s32.totalorder %s17, 0
    %p85 = por %p83, %p84
    %p86 = scmp.ne.s32.totalorder %s72, %s73
    %p87 = scmp.eq.s32.totalorder %s18, 1
    %p88 = por %p86, %p87
    %p90 = scmp.ne.s32.totalorder %s73, %s89
    %p91 = scmp.eq.s32.totalorder %s18, 0
    %p92 = por %p90, %p91
    %s93 = ssub.s32 %s19, %s38
    %p94 = scmp.eq.s32.totalorder %s93, 0
    %s96 = sadd.s32 %s95, 1
    %s97 = scalar_select %p94, %s95, %s96
    %p100 = pneg %p94
    %p101 = scmp.eq.s32.totalorder %s12, 1
    %p102 = por %p100, %p101
    %p103 = scmp.ne.s32.totalorder %s95, %s98
    %p104 = scmp.eq.s32.totalorder %s12, 0
    %p105 = por %p103, %p104
    %p106 = scmp.ne.s32.totalorder %s95, %s98
    %p107 = scmp.eq.s32.totalorder %s17, 1
    %p108 = por %p106, %p107
    %p109 = scmp.ne.s32.totalorder %s98, %s99
    %p110 = scmp.eq.s32.totalorder %s17, 0
    %p111 = por %p109, %p110
    %p112 = scmp.ne.s32.totalorder %s98, %s99
    %p113 = scmp.eq.s32.totalorder %s18, 1
    %p114 = por %p112, %p113
    %p116 = scmp.ne.s32.totalorder %s99, %s115
    %p117 = scmp.eq.s32.totalorder %s18, 0
    %p118 = por %p116, %p117
    %s119 = ssub.s32 %s19, %s38
    %s120 = ssub.s32 %s20, %s34
    %s121 = sor.u32 %s119, %s120
    %p122 = scmp.eq.s32.totalorder %s121, 0
    %s124 = sadd.s32 %s123, 1
    %s125 = scalar_select %p122, %s123, %s124
    %p128 = pneg %p122
    %p129 = scmp.eq.s32.totalorder %s12, 1
    %p130 = por %p128, %p129
    %p131 = scmp.ne.s32.totalorder %s123, %s126
    %p132 = scmp.eq.s32.totalorder %s12, 0
    %p133 = por %p131, %p132
    %p134 = scmp.ne.s32.totalorder %s123, %s126
    %p135 = scmp.eq.s32.totalorder %s17, 1
    %p136 = por %p134, %p135
    %p137 = scmp.ne.s32.totalorder %s126, %s127
    %p138 = scmp.eq.s32.totalorder %s17, 0
    %p139 = por %p137, %p138
    %p140 = scmp.ne.s32.totalorder %s126, %s127
    %p141 = scmp.eq.s32.totalorder %s18, 1
    %p142 = por %p140, %p141
    %p144 = scmp.ne.s32.totalorder %s127, %s143
    %p145 = scmp.eq.s32.totalorder %s18, 0
    %p146 = por %p144, %p145
    %s148 = sadd.s32 %s147, 1
    %p151 = scmp.eq.s32.totalorder %s12, 1
    %p152 = scmp.ne.s32.totalorder %s147, %s149
    %p153 = scmp.eq.s32.totalorder %s12, 0
    %p154 = por %p152, %p153
    %p155 = scmp.ne.s32.totalorder %s147, %s149
    %p156 = scmp.eq.s32.totalorder %s17, 1
    %p157 = por %p155, %p156
    %p158 = scmp.ne.s32.totalorder %s149, %s150
    %p159 = scmp.eq.s32.totalorder %s17, 0
    %p160 = por %p158, %p159
    %p161 = scmp.ne.s32.totalorder %s149, %s150
    %p162 = scmp.eq.s32.totalorder %s18, 1
    %p163 = por %p161, %p162
    %p165 = scmp.ne.s32.totalorder %s150, %s164
    %p166 = scmp.eq.s32.totalorder %s18, 0
    %p167 = por %p165, %p166
    %s169 = sadd.s32 %s168, 1
    %p172 = scmp.eq.s32.totalorder %s12, 1
    %p173 = scmp.ne.s32.totalorder %s168, %s170
    %p174 = scmp.eq.s32.totalorder %s12, 0
    %p175 = por %p173, %p174
    %p176 = scmp.ne.s32.totalorder %s168, %s170
    %p177 = scmp.eq.s32.totalorder %s17, 1
    %p178 = por %p176, %p177
    %p179 = scmp.ne.s32.totalorder %s170, %s171
    %p180 = scmp.eq.s32.totalorder %s17, 0
    %p181 = por %p179, %p180
    %p182 = scmp.ne.s32.totalorder %s170, %s171
    %p183 = scmp.eq.s32.totalorder %s18, 1
    %p184 = por %p182, %p183
    %p186 = scmp.ne.s32.totalorder %s171, %s185
    %p187 = scmp.eq.s32.totalorder %s18, 0
    %p188 = por %p186, %p187
    %s189 = ssub.s32 %s19, %s38
    %s190 = ssub.s32 %s20, %s34
    %s191 = sor.u32 %s189, %s190
    %p192 = scmp.eq.s32.totalorder %s191, 0
    %s194 = sadd.s32 %s193, 1
    %s195 = scalar_select %p192, %s193, %s194
    %p198 = pneg %p192
    %p199 = scmp.eq.s32.totalorder %s12, 1
    %p200 = por %p198, %p199
    %p201 = scmp.ne.s32.totalorder %s193, %s196
    %p202 = scmp.eq.s32.totalorder %s12, 0
    %p203 = por %p201, %p202
    %p204 = scmp.ne.s32.totalorder %s193, %s196
    %p205 = scmp.eq.s32.totalorder %s17, 1
    %p206 = por %p204, %p205
    %p207 = scmp.ne.s32.totalorder %s196, %s197
    %p208 = scmp.eq.s32.totalorder %s17, 0
    %p209 = por %p207, %p208
    %p210 = scmp.ne.s32.totalorder %s196, %s197
    %p211 = scmp.eq.s32.totalorder %s18, 1
    %p212 = por %p210, %p211
    %p214 = scmp.ne.s32.totalorder %s197, %s213
    %p215 = scmp.eq.s32.totalorder %s18, 0
    %p216 = por %p214, %p215
    %p217 = scmp.le.s32.totalorder 1, %s12
    %p218 = scmp.lt.s32.totalorder %s12, 3
    %p219 = pnand %p217, %p218
    %p220 = pneg %p219
    // Predicated region
    $region9: #{attention_block.3} parent=5 // pred_check
      _
    $region10: #{attention_block.3} parent=5 // pred_check_branch
      %222 = sbr.rel (%p219) target = $region12
    $region11: #{attention_block.3} parent=5 // pred_region
      %s223 = ssub.s32 %s12, 1
      // Predicated region
      $region13: #{attention_block.3} parent=11 // pred_check
        %p224 = pneg %p160
      $region14: #{attention_block.3} parent=11 // pred_check_branch
        %226 = sbr.rel (%p224) target = $region16
      $region15: #{attention_block.3} parent=11 // pred_region
        _
      $region16: #{attention_block.3} parent=11 // pred_fallthru
        _
      // Predicated region
      $region17: #{attention_block.3} parent=11 // pred_check
        %p227 = pneg %p181
      $region18: #{attention_block.3} parent=11 // pred_check_branch
        %229 = sbr.rel (%p227) target = $region20
      $region19: #{attention_block.3} parent=11 // pred_region
        _
      $region20: #{attention_block.3} parent=11 // pred_fallthru
        _
    $region12: #{attention_block.3} parent=5 // pred_fallthru
      _
    %p230 = scmp.lt.s32.totalorder %s12, 2
    // Predicated region
    $region21: #{attention_block.3} parent=5 // pred_check
      %p231 = pneg %p230
    $region22: #{attention_block.3} parent=5 // pred_check_branch
      %233 = sbr.rel (%p231) target = $region24
    $region23: #{attention_block.3} parent=5 // pred_region
      // Predicated region
      $region25: #{attention_block.3} parent=23 // pred_check
        %p234 = pneg %p53
      $region26: #{attention_block.3} parent=23 // pred_check_branch
        %236 = sbr.rel (%p234) target = $region28
      $region27: #{attention_block.3} parent=23 // pred_region
        %s237 = smul.u32 2, %s20
        %p238 = scmp.lt.s32.totalorder %s19, 1
        %s239 = scalar_select %p238, %s19, 1
        %p240 = scmp.lt.s32.totalorder %s237, 1
        %s241 = scalar_select %p240, %s237, 1
        %s242 = smul.addr %s239, 8
        %s243 = sadd.s32 %s241, %s242
        %s244 = smul.addr %s243, 4
        %s245 = scalar_lea.vmem %s0, %s244
        %s246 = smul.u32 2, %s20
      $region28: #{attention_block.3} parent=23 // pred_fallthru
        _
      // Predicated region
      $region29: #{attention_block.3} parent=23 // pred_check
        %p247 = pneg %p79
      $region30: #{attention_block.3} parent=23 // pred_check_branch
        %249 = sbr.rel (%p247) target = $region32
      $region31: #{attention_block.3} parent=23 // pred_region
        %p250 = scmp.lt.s32.totalorder %s19, 1
        %s251 = scalar_select %p250, %s19, 1
        %s252 = smul.addr %s251, 64
        %s253 = smul.addr %s252, 4
        %s254 = scalar_lea.vmem %s1, %s253
      $region32: #{attention_block.3} parent=23 // pred_fallthru
        _
      // Predicated region
      $region33: #{attention_block.3} parent=23 // pred_check
        %p255 = pneg %p105
      $region34: #{attention_block.3} parent=23 // pred_check_branch
        %257 = sbr.rel (%p255) target = $region36
      $region35: #{attention_block.3} parent=23 // pred_region
        %p258 = scmp.lt.s32.totalorder %s19, 1
        %s259 = scalar_select %p258, %s19, 1
        %s260 = smul.addr %s259, 8
        %s261 = smul.addr %s260, 4
        %s262 = scalar_lea.vmem %s2, %s261
      $region36: #{attention_block.3} parent=23 // pred_fallthru
        _
      // Predicated region
      $region37: #{attention_block.3} parent=23 // pred_check
        %p263 = pneg %p133
      $region38: #{attention_block.3} parent=23 // pred_check_branch
        %265 = sbr.rel (%p263) target = $region40
      $region39: #{attention_block.3} parent=23 // pred_region
        %s266 = smul.u32 2, %s20
        %p267 = scmp.lt.s32.totalorder %s19, 1
        %s268 = scalar_select %p267, %s19, 1
        %p269 = scmp.lt.s32.totalorder %s266, 1
        %s270 = scalar_select %p269, %s266, 1
        %s271 = smul.addr %s268, 8
        %s272 = sadd.s32 %s270, %s271
        %s273 = smul.addr %s272, 8
        %s274 = scalar_lea.vmem %s3, %s273
        %s275 = smul.u32 2, %s20
      $region40: #{attention_block.3} parent=23 // pred_fallthru
        _
    $region24: #{attention_block.3} parent=5 // pred_fallthru
      _
    %p276 = scmp.le.s32.totalorder 1, %s12
    %p277 = scmp.lt.s32.totalorder %s12, 3
    %p278 = pnand %p276, %p277
    %p279 = pneg %p278
    // Predicated region
    $region41: #{attention_block.3} parent=5 // pred_check
      _
    $region42: #{attention_block.3} parent=5 // pred_check_branch
      %281 = sbr.rel (%p278) target = $region44
    $region43: #{attention_block.3} parent=5 // pred_region
      %s282 = ssub.s32 %s12, 1
      %s283 = smul.u32 2, %s23
      %p284 = scmp.lt.s32.totalorder %s22, 1
      %s285 = scalar_select %p284, %s22, 1
      %p286 = scmp.lt.s32.totalorder %s283, 1
      %s287 = scalar_select %p286, %s283, 1
      %s288 = smul.addr %s285, 8
      %s289 = sadd.s32 %s287, %s288
      %s290 = smul.addr %s289, 4
      %s291 = scalar_lea.vmem %s0, %s290
      %p292 = pneg %p59
      %p293 = pneg %p56
      %p294 = scmp.lt.s32.totalorder %s22, 1
      %s295 = scalar_select %p294, %s22, 1
      %s296 = smul.addr %s295, 64
      %s297 = smul.addr %s296, 4
      %s298 = scalar_lea.vmem %s1, %s297
      %p299 = pneg %p85
      %p300 = pneg %p82
      %p301 = scmp.lt.s32.totalorder %s22, 1
      %s302 = scalar_select %p301, %s22, 1
      %s303 = smul.addr %s302, 8
      %s304 = smul.addr %s303, 4
      %s305 = scalar_lea.vmem %s2, %s304
      %p306 = pneg %p111
      %p307 = pneg %p108
      %s308 = smul.u32 2, %s23
      %p309 = scmp.lt.s32.totalorder %s22, 1
      %s310 = scalar_select %p309, %s22, 1
      %p311 = scmp.lt.s32.totalorder %s308, 1
      %s312 = scalar_select %p311, %s308, 1
      %s313 = smul.addr %s310, 8
      %s314 = sadd.s32 %s312, %s313
      %s315 = smul.addr %s314, 8
      %s316 = scalar_lea.vmem %s3, %s315
      %p317 = pneg %p139
      %p318 = pneg %p136
      %p319 = pneg %p160
      %p320 = pneg %p157
      %p321 = pneg %p181
      %p322 = pneg %p178
      %p323 = pneg %p209
      %p324 = pneg %p206
      %s325 = smul.u32 2, %s23
      %p326 = scmp.lt.s32.totalorder %s22, 1
      %s327 = scalar_select %p326, %s22, 1
      %p328 = scmp.lt.s32.totalorder %s325, 1
      %s329 = scalar_select %p328, %s325, 1
      %s330 = smul.addr %s327, 8
      %s331 = sadd.s32 %s329, %s330
      %s332 = smul.addr %s331, 8
      %s333 = scalar_lea.vmem %s6, %s332
      %s334 = smul.u32 2, %s23
      %p335 = scmp.lt.s32.totalorder %s22, 1
      %s336 = scalar_select %p335, %s22, 1
      %p337 = scmp.lt.s32.totalorder %s334, 1
      %s338 = scalar_select %p337, %s334, 1
      %s339 = smul.addr %s336, 8
      %s340 = sadd.s32 %s338, %s339
      %s341 = smul.addr %s340, 4
      %s342 = scalar_lea.vmem %s0, %s341
      %s343 = smul.u32 2, %s23
      %p344 = scmp.lt.s32.totalorder %s22, 1
      %s345 = scalar_select %p344, %s22, 1
      %s346 = smul.addr %s345, 64
      %s347 = smul.addr %s346, 4
      %s348 = scalar_lea.vmem %s1, %s347
      %p349 = scmp.lt.s32.totalorder %s22, 1
      %s350 = scalar_select %p349, %s22, 1
      %s351 = smul.addr %s350, 8
      %s352 = smul.addr %s351, 4
      %s353 = scalar_lea.vmem %s2, %s352
      %s354 = smul.u32 2, %s23
      %p355 = scmp.lt.s32.totalorder %s22, 1
      %s356 = scalar_select %p355, %s22, 1
      %p357 = scmp.lt.s32.totalorder %s354, 1
      %s358 = scalar_select %p357, %s354, 1
      %s359 = smul.addr %s356, 8
      %s360 = sadd.s32 %s358, %s359
      %s361 = smul.addr %s360, 8
      %s362 = scalar_lea.vmem %s3, %s361
      %s363 = smul.u32 2, %s23
      %s364 = smul.u32 2, %s23
      %p365 = scmp.lt.s32.totalorder %s22, 1
      %s366 = scalar_select %p365, %s22, 1
      %p367 = scmp.lt.s32.totalorder %s364, 1
      %s368 = scalar_select %p367, %s364, 1
      %s369 = smul.addr %s366, 8
      %s370 = sadd.s32 %s368, %s369
      %s371 = smul.addr %s370, 8
      %s372 = scalar_lea.vmem %s6, %s371
      %s373 = smul.u32 2, %s23
      %p375 = scmp.eq.s32.totalorder %s24, 0
      // Predicated region
      $region45: #{attention_block.3} parent=43 // pred_check
        %p376 = pneg %p375
      $region46: #{attention_block.3} parent=43 // pred_check_branch
        %378 = sbr.rel (%p376) target = $region48
      $region47: #{attention_block.3} parent=43 // pred_region
        %v379 = vlaneseq
        %vm380 = vcmp.ge.s32.totalorder %v379, 0
        %vm381 = vcmp.lt.s32.totalorder %v379, 256
        %vm382 = vmand %vm380, %vm381
        %383 = vst.msk [vmem:[#allocation2] sm:$0x3] %vm382, -inf
        %384 = vst.msk [vmem:[#allocation2 + $0x2] sm:$0x3] %vm382, -inf
        %385 = vst.msk [vmem:[#allocation3] sm:$0x3] %vm382, 0.0
        %386 = vst.msk [vmem:[#allocation3 + $0x2] sm:$0x3] %vm382, 0.0
        %387 = vst [vmem:[#allocation4] sm:$0xff] 0.0
        %388 = vst [vmem:[#allocation4 + $0x8] sm:$0xff] 0.0
        %389 = vst [vmem:[#allocation4 + $0x10] sm:$0xff] 0.0
        %390 = vst [vmem:[#allocation4 + $0x18] sm:$0xff] 0.0
        %391 = vst [vmem:[#allocation4 + $0x20] sm:$0xff] 0.0
        %392 = vst [vmem:[#allocation4 + $0x28] sm:$0xff] 0.0
        %393 = vst [vmem:[#allocation4 + $0x30] sm:$0xff] 0.0
        %394 = vst [vmem:[#allocation4 + $0x38] sm:$0xff] 0.0
      $region48: #{attention_block.3} parent=43 // pred_fallthru
        _
      %v395 = vld [vmem:[%s342] sm:$0xff]
      %v396 = vld [vmem:[%s342 + $0x8] sm:$0xff]
      %v397 = vld [vmem:[%s342 + $0x10] sm:$0xff]
      %v398 = vld [vmem:[%s342 + $0x18] sm:$0xff]
      %s399 = smul.u32 %s24, 256
      %s400 = sshra.s32 %s399, 3
      %s401 = sand.u32 %s399, 7
      %s402 = smul.addr %s400, 4
      %s403 = scalar_lea.vmem %s348, %s402
      %v404 = vld [vmem:[%s403] sm:$0xf]
      %v405 = vld [vmem:[%s403 + $0x4] sm:$0xf]
      %v406 = vld [vmem:[%s403 + $0x8] sm:$0xf]
      %v407 = vld [vmem:[%s403 + $0xc] sm:$0xf]
      %v408 = vld [vmem:[%s403 + $0x10] sm:$0xf]
      %v409 = vld [vmem:[%s403 + $0x14] sm:$0xf]
      %v410 = vld [vmem:[%s403 + $0x18] sm:$0xf]
      %v411 = vld [vmem:[%s403 + $0x1c] sm:$0xf]
      %v412 = vld [vmem:[%s403 + $0x20] sm:$0xf]
      %v413 = vld [vmem:[%s403 + $0x24] sm:$0xf]
      %v414 = vld [vmem:[%s403 + $0x28] sm:$0xf]
      %v415 = vld [vmem:[%s403 + $0x2c] sm:$0xf]
      %v416 = vld [vmem:[%s403 + $0x30] sm:$0xf]
      %v417 = vld [vmem:[%s403 + $0x34] sm:$0xf]
      %v418 = vld [vmem:[%s403 + $0x38] sm:$0xf]
      %v419 = vld [vmem:[%s403 + $0x3c] sm:$0xf]
      %v420 = vld [vmem:[%s403 + $0x40] sm:$0xf]
      %v421 = vld [vmem:[%s403 + $0x44] sm:$0xf]
      %v422 = vld [vmem:[%s403 + $0x48] sm:$0xf]
      %v423 = vld [vmem:[%s403 + $0x4c] sm:$0xf]
      %v424 = vld [vmem:[%s403 + $0x50] sm:$0xf]
      %v425 = vld [vmem:[%s403 + $0x54] sm:$0xf]
      %v426 = vld [vmem:[%s403 + $0x58] sm:$0xf]
      %v427 = vld [vmem:[%s403 + $0x5c] sm:$0xf]
      %v428 = vld [vmem:[%s403 + $0x60] sm:$0xf]
      %v429 = vld [vmem:[%s403 + $0x64] sm:$0xf]
      %v430 = vld [vmem:[%s403 + $0x68] sm:$0xf]
      %v431 = vld [vmem:[%s403 + $0x6c] sm:$0xf]
      %v432 = vld [vmem:[%s403 + $0x70] sm:$0xf]
      %v433 = vld [vmem:[%s403 + $0x74] sm:$0xf]
      %v434 = vld [vmem:[%s403 + $0x78] sm:$0xf]
      %v435 = vld [vmem:[%s403 + $0x7c] sm:$0xf]
      %v436 = vld [vmem:[%s403 + $0x80] sm:$0xf]
      %v437 = vld [vmem:[%s403 + $0x84] sm:$0xf]
      %v438 = vld [vmem:[%s403 + $0x88] sm:$0xf]
      %v439 = vld [vmem:[%s403 + $0x8c] sm:$0xf]
      %v440 = vld [vmem:[%s403 + $0x90] sm:$0xf]
      %v441 = vld [vmem:[%s403 + $0x94] sm:$0xf]
      %v442 = vld [vmem:[%s403 + $0x98] sm:$0xf]
      %v443 = vld [vmem:[%s403 + $0x9c] sm:$0xf]
      %v444 = vld [vmem:[%s403 + $0xa0] sm:$0xf]
      %v445 = vld [vmem:[%s403 + $0xa4] sm:$0xf]
      %v446 = vld [vmem:[%s403 + $0xa8] sm:$0xf]
      %v447 = vld [vmem:[%s403 + $0xac] sm:$0xf]
      %v448 = vld [vmem:[%s403 + $0xb0] sm:$0xf]
      %v449 = vld [vmem:[%s403 + $0xb4] sm:$0xf]
      %v450 = vld [vmem:[%s403 + $0xb8] sm:$0xf]
      %v451 = vld [vmem:[%s403 + $0xbc] sm:$0xf]
      %v452 = vld [vmem:[%s403 + $0xc0] sm:$0xf]
      %v453 = vld [vmem:[%s403 + $0xc4] sm:$0xf]
      %v454 = vld [vmem:[%s403 + $0xc8] sm:$0xf]
      %v455 = vld [vmem:[%s403 + $0xcc] sm:$0xf]
      %v456 = vld [vmem:[%s403 + $0xd0] sm:$0xf]
      %v457 = vld [vmem:[%s403 + $0xd4] sm:$0xf]
      %v458 = vld [vmem:[%s403 + $0xd8] sm:$0xf]
      %v459 = vld [vmem:[%s403 + $0xdc] sm:$0xf]
      %v460 = vld [vmem:[%s403 + $0xe0] sm:$0xf]
      %v461 = vld [vmem:[%s403 + $0xe4] sm:$0xf]
      %v462 = vld [vmem:[%s403 + $0xe8] sm:$0xf]
      %v463 = vld [vmem:[%s403 + $0xec] sm:$0xf]
      %v464 = vld [vmem:[%s403 + $0xf0] sm:$0xf]
      %v465 = vld [vmem:[%s403 + $0xf4] sm:$0xf]
      %v466 = vld [vmem:[%s403 + $0xf8] sm:$0xf]
      %v467 = vld [vmem:[%s403 + $0xfc] sm:$0xf]
      %s468 = sshra.s32 %s399, 7
      %s469 = sand.u32 %s399, 127
      %s470 = smul.addr %s468, 4
      %s471 = scalar_lea.vmem %s353, %s470
      %v472 = vld [vmem:[%s471] sm:$0xff]
      %v473 = vld [vmem:[%s471 + $0x8] sm:$0xff]
      %v474 = vld [vmem:[%s471 + $0x10] sm:$0xff]
      %v475 = vld [vmem:[%s471 + $0x18] sm:$0xff]
      %v508 = vunpack.c.l.b16 %v404
      %v509 = vunpack.c.l.b16 %v405
      %v510 = vunpack.c.l.b16 %v406
      %v511 = vunpack.c.l.b16 %v407
      %v512 = vunpack.c.l.b16 %v408
      %v513 = vunpack.c.l.b16 %v409
      %v514 = vunpack.c.l.b16 %v410
      %v515 = vunpack.c.l.b16 %v411
      %v516 = vunpack.c.l.b16 %v412
      %v517 = vunpack.c.l.b16 %v413
      %v518 = vunpack.c.l.b16 %v414
      %v519 = vunpack.c.l.b16 %v415
      %v520 = vunpack.c.l.b16 %v416
      %v521 = vunpack.c.l.b16 %v417
      %v522 = vunpack.c.l.b16 %v418
      %v523 = vunpack.c.l.b16 %v419
      %v524 = vunpack.c.l.b16 %v420
      %v525 = vunpack.c.l.b16 %v421
      %v526 = vunpack.c.l.b16 %v422
      %v527 = vunpack.c.l.b16 %v423
      %v528 = vunpack.c.l.b16 %v424
      %v529 = vunpack.c.l.b16 %v425
      %v530 = vunpack.c.l.b16 %v426
      %v531 = vunpack.c.l.b16 %v427
      %v532 = vunpack.c.l.b16 %v428
      %v533 = vunpack.c.l.b16 %v429
      %v534 = vunpack.c.l.b16 %v430
      %v535 = vunpack.c.l.b16 %v431
      %v536 = vunpack.c.l.b16 %v432
      %v537 = vunpack.c.l.b16 %v433
      %v538 = vunpack.c.l.b16 %v434
      %v539 = vunpack.c.l.b16 %v435
      %v540 = vpack.c.b16 %v509, %v508
      %v541 = vpack.c.b16 %v511, %v510
      %v542 = vpack.c.b16 %v513, %v512
      %v543 = vpack.c.b16 %v515, %v514
      %v544 = vpack.c.b16 %v517, %v516
      %v545 = vpack.c.b16 %v519, %v518
      %v546 = vpack.c.b16 %v521, %v520
      %v547 = vpack.c.b16 %v523, %v522
      %v548 = vpack.c.b16 %v525, %v524
      %v549 = vpack.c.b16 %v527, %v526
      %v550 = vpack.c.b16 %v529, %v528
      %v551 = vpack.c.b16 %v531, %v530
      %v552 = vpack.c.b16 %v533, %v532
      %v553 = vpack.c.b16 %v535, %v534
      %v554 = vpack.c.b16 %v537, %v536
      %v555 = vpack.c.b16 %v539, %v538
      %v558 = vunpack.c.l.b16 %v395
      %v559 = vunpack.c.h.b16 %v395
      %v560 = vunpack.c.l.b16 %v396
      %v561 = vunpack.c.h.b16 %v396
      %v562 = vpack.c.b16 %v560, %v558
      %v563 = vpack.c.b16 %v561, %v559
      %vm566 = vcmask 130048
      %v568 = vsel %vm566, %v540, 0
      %v571 = vsel %vm566, %v541, 0
      %v574 = vsel %vm566, %v542, 0
      %v577 = vsel %vm566, %v543, 0
      %v580 = vsel %vm566, %v544, 0
      %v583 = vsel %vm566, %v545, 0
      %v586 = vsel %vm566, %v546, 0
      %v589 = vsel %vm566, %v547, 0
      %v592 = vsel %vm566, %v548, 0
      %v595 = vsel %vm566, %v549, 0
      %v598 = vsel %vm566, %v550, 0
      %v601 = vsel %vm566, %v551, 0
      %v604 = vsel %vm566, %v552, 0
      %v607 = vsel %vm566, %v553, 0
      %v610 = vsel %vm566, %v554, 0
      %v613 = vsel %vm566, %v555, 0
      %615 = vmatprep.subr.bf16.mxu0 0
      %616 = vmatpush1.bf16.msra.mxu0 0
      %617 = vmatprep.subr.bf16.mxu0 0
      %618 = vmatpush1.bf16.msra.mxu0 0
      %619 = vmatprep.subr.bf16.mxu0 0
      %620 = vmatpush1.bf16.msra.mxu0 0
      %621 = vmatprep.subr.bf16.mxu0 0
      %622 = vmatpush1.bf16.msra.mxu0 0
      %623 = vmatprep.subr.bf16.mxu0 0
      %624 = vmatpush1.bf16.msra.mxu0 0
      %625 = vmatprep.subr.bf16.mxu0 0
      %626 = vmatpush1.bf16.msra.mxu0 0
      %627 = vmatprep.subr.bf16.mxu0 0
      %628 = vmatpush1.bf16.msra.mxu0 0
      %629 = vmatprep.subr.bf16.mxu0 %v563
      %630 = vmatpush1.bf16.msra.mxu0 %v562
      %631 = vmatprep.subr.bf16.mxu0 0
      %632 = vmatpush2.bf16.msra.mxu0 0
      %633 = vmatprep.subr.bf16.mxu0 0
      %634 = vmatpush2.bf16.msra.mxu0 0
      %635 = vmatprep.subr.bf16.mxu0 0
      %636 = vmatpush2.bf16.msra.mxu0 0
      %637 = vmatprep.subr.bf16.mxu0 0
      %638 = vmatpush2.bf16.msra.mxu0 0
      %639 = vmatprep.subr.bf16.mxu0 0
      %640 = vmatpush2.bf16.msra.mxu0 0
      %641 = vmatprep.subr.bf16.mxu0 0
      %642 = vmatpush2.bf16.msra.mxu0 0
      %643 = vmatprep.subr.bf16.mxu0 0
      %644 = vmatpush2.bf16.msra.mxu0 0
      %645 = vmatprep.subr.bf16.mxu0 0
      %646 = vmatpush2.bf16.msra.mxu0 0
      %647 = vmatprep.mubr.bf16.mxu0 0
      %648 = vmatmul.mubr.bf16.gmra.mxu0 %v568
      %v649 = vpop.f32.mrf.mxu0
      %v650 = vadd.f32 0.0, %v649
      %v651 = vpop.f32.mrf.mxu0
      %v652 = vadd.f32 0.0, %v651
      %v653 = vpop.f32.mrf.mxu0
      %v654 = vadd.f32 0.0, %v653
      %v655 = vpop.f32.mrf.mxu0
      %v656 = vadd.f32 0.0, %v655
      %657 = vmatprep.mubr.bf16.mxu0 0
      %658 = vmatmul.mubr.bf16.gmra.mxu0 %v571
      %v659 = vpop.f32.mrf.mxu0
      %v660 = vadd.f32 0.0, %v659
      %v661 = vpop.f32.mrf.mxu0
      %v662 = vadd.f32 0.0, %v661
      %v663 = vpop.f32.mrf.mxu0
      %v664 = vadd.f32 0.0, %v663
      %v665 = vpop.f32.mrf.mxu0
      %v666 = vadd.f32 0.0, %v665
      %667 = vmatprep.mubr.bf16.mxu0 0
      %668 = vmatmul.mubr.bf16.gmra.mxu0 %v574
      %v669 = vpop.f32.mrf.mxu0
      %v670 = vadd.f32 0.0, %v669
      %v671 = vpop.f32.mrf.mxu0
      %v672 = vadd.f32 0.0, %v671
      %v673 = vpop.f32.mrf.mxu0
      %v674 = vadd.f32 0.0, %v673
      %v675 = vpop.f32.mrf.mxu0
      %v676 = vadd.f32 0.0, %v675
      %677 = vmatprep.mubr.bf16.mxu0 0
      %678 = vmatmul.mubr.bf16.gmra.mxu0 %v577
      %v679 = vpop.f32.mrf.mxu0
      %v680 = vadd.f32 0.0, %v679
      %v681 = vpop.f32.mrf.mxu0
      %v682 = vadd.f32 0.0, %v681
      %v683 = vpop.f32.mrf.mxu0
      %v684 = vadd.f32 0.0, %v683
      %v685 = vpop.f32.mrf.mxu0
      %v686 = vadd.f32 0.0, %v685
      %687 = vmatprep.mubr.bf16.mxu0 0
      %688 = vmatmul.mubr.bf16.gmra.mxu0 %v580
      %v689 = vpop.f32.mrf.mxu0
      %v690 = vadd.f32 0.0, %v689
      %v691 = vpop.f32.mrf.mxu0
      %v692 = vadd.f32 0.0, %v691
      %v693 = vpop.f32.mrf.mxu0
      %v694 = vadd.f32 0.0, %v693
      %v695 = vpop.f32.mrf.mxu0
      %v696 = vadd.f32 0.0, %v695
      %697 = vmatprep.mubr.bf16.mxu0 0
      %698 = vmatmul.mubr.bf16.gmra.mxu0 %v583
      %v699 = vpop.f32.mrf.mxu0
      %v700 = vadd.f32 0.0, %v699
      %v701 = vpop.f32.mrf.mxu0
      %v702 = vadd.f32 0.0, %v701
      %v703 = vpop.f32.mrf.mxu0
      %v704 = vadd.f32 0.0, %v703
      %v705 = vpop.f32.mrf.mxu0
      %v706 = vadd.f32 0.0, %v705
      %707 = vmatprep.mubr.bf16.mxu0 0
      %708 = vmatmul.mubr.bf16.gmra.mxu0 %v586
      %v709 = vpop.f32.mrf.mxu0
      %v710 = vadd.f32 0.0, %v709
      %v711 = vpop.f32.mrf.mxu0
      %v712 = vadd.f32 0.0, %v711
      %v713 = vpop.f32.mrf.mxu0
      %v714 = vadd.f32 0.0, %v713
      %v715 = vpop.f32.mrf.mxu0
      %v716 = vadd.f32 0.0, %v715
      %717 = vmatprep.mubr.bf16.mxu0 0
      %718 = vmatmul.mubr.bf16.gmra.mxu0 %v589
      %v719 = vpop.f32.mrf.mxu0
      %v720 = vadd.f32 0.0, %v719
      %v721 = vpop.f32.mrf.mxu0
      %v722 = vadd.f32 0.0, %v721
      %v723 = vpop.f32.mrf.mxu0
      %v724 = vadd.f32 0.0, %v723
      %v725 = vpop.f32.mrf.mxu0
      %v726 = vadd.f32 0.0, %v725
      %727 = vmatprep.mubr.bf16.mxu0 0
      %728 = vmatmul.mubr.bf16.gmra.mxu0 %v592
      %v729 = vpop.f32.mrf.mxu0
      %v730 = vadd.f32 0.0, %v729
      %v731 = vpop.f32.mrf.mxu0
      %v732 = vadd.f32 0.0, %v731
      %v733 = vpop.f32.mrf.mxu0
      %v734 = vadd.f32 0.0, %v733
      %v735 = vpop.f32.mrf.mxu0
      %v736 = vadd.f32 0.0, %v735
      %737 = vmatprep.mubr.bf16.mxu0 0
      %738 = vmatmul.mubr.bf16.gmra.mxu0 %v595
      %v739 = vpop.f32.mrf.mxu0
      %v740 = vadd.f32 0.0, %v739
      %v741 = vpop.f32.mrf.mxu0
      %v742 = vadd.f32 0.0, %v741
      %v743 = vpop.f32.mrf.mxu0
      %v744 = vadd.f32 0.0, %v743
      %v745 = vpop.f32.mrf.mxu0
      %v746 = vadd.f32 0.0, %v745
      %747 = vmatprep.mubr.bf16.mxu0 0
      %748 = vmatmul.mubr.bf16.gmra.mxu0 %v598
      %v749 = vpop.f32.mrf.mxu0
      %v750 = vadd.f32 0.0, %v749
      %v751 = vpop.f32.mrf.mxu0
      %v752 = vadd.f32 0.0, %v751
      %v753 = vpop.f32.mrf.mxu0
      %v754 = vadd.f32 0.0, %v753
      %v755 = vpop.f32.mrf.mxu0
      %v756 = vadd.f32 0.0, %v755
      %757 = vmatprep.mubr.bf16.mxu0 0
      %758 = vmatmul.mubr.bf16.gmra.mxu0 %v601
      %v759 = vpop.f32.mrf.mxu0
      %v760 = vadd.f32 0.0, %v759
      %v761 = vpop.f32.mrf.mxu0
      %v762 = vadd.f32 0.0, %v761
      %v763 = vpop.f32.mrf.mxu0
      %v764 = vadd.f32 0.0, %v763
      %v765 = vpop.f32.mrf.mxu0
      %v766 = vadd.f32 0.0, %v765
      %767 = vmatprep.mubr.bf16.mxu0 0
      %768 = vmatmul.mubr.bf16.gmra.mxu0 %v604
      %v769 = vpop.f32.mrf.mxu0
      %v770 = vadd.f32 0.0, %v769
      %v771 = vpop.f32.mrf.mxu0
      %v772 = vadd.f32 0.0, %v771
      %v773 = vpop.f32.mrf.mxu0
      %v774 = vadd.f32 0.0, %v773
      %v775 = vpop.f32.mrf.mxu0
      %v776 = vadd.f32 0.0, %v775
      %777 = vmatprep.mubr.bf16.mxu0 0
      %778 = vmatmul.mubr.bf16.gmra.mxu0 %v607
      %v779 = vpop.f32.mrf.mxu0
      %v780 = vadd.f32 0.0, %v779
      %v781 = vpop.f32.mrf.mxu0
      %v782 = vadd.f32 0.0, %v781
      %v783 = vpop.f32.mrf.mxu0
      %v784 = vadd.f32 0.0, %v783
      %v785 = vpop.f32.mrf.mxu0
      %v786 = vadd.f32 0.0, %v785
      %787 = vmatprep.mubr.bf16.mxu0 0
      %788 = vmatmul.mubr.bf16.gmra.mxu0 %v610
      %v789 = vpop.f32.mrf.mxu0
      %v790 = vadd.f32 0.0, %v789
      %v791 = vpop.f32.mrf.mxu0
      %v792 = vadd.f32 0.0, %v791
      %v793 = vpop.f32.mrf.mxu0
      %v794 = vadd.f32 0.0, %v793
      %v795 = vpop.f32.mrf.mxu0
      %v796 = vadd.f32 0.0, %v795
      %797 = vmatprep.mubr.bf16.mxu0 0
      %798 = vmatmul.mubr.bf16.gmra.mxu0 %v613
      %v799 = vpop.f32.mrf.mxu0
      %v800 = vadd.f32 0.0, %v799
      %v801 = vpop.f32.mrf.mxu0
      %v802 = vadd.f32 0.0, %v801
      %v803 = vpop.f32.mrf.mxu0
      %v804 = vadd.f32 0.0, %v803
      %v805 = vpop.f32.mrf.mxu0
      %v806 = vadd.f32 0.0, %v805
      %807 = vdwg.mxu0
      %v840 = vunpack.c.l.b16 %v436
      %v841 = vunpack.c.l.b16 %v437
      %v842 = vunpack.c.l.b16 %v438
      %v843 = vunpack.c.l.b16 %v439
      %v844 = vunpack.c.l.b16 %v440
      %v845 = vunpack.c.l.b16 %v441
      %v846 = vunpack.c.l.b16 %v442
      %v847 = vunpack.c.l.b16 %v443
      %v848 = vunpack.c.l.b16 %v444
      %v849 = vunpack.c.l.b16 %v445
      %v850 = vunpack.c.l.b16 %v446
      %v851 = vunpack.c.l.b16 %v447
      %v852 = vunpack.c.l.b16 %v448
      %v853 = vunpack.c.l.b16 %v449
      %v854 = vunpack.c.l.b16 %v450
      %v855 = vunpack.c.l.b16 %v451
      %v856 = vunpack.c.l.b16 %v452
      %v857 = vunpack.c.l.b16 %v453
      %v858 = vunpack.c.l.b16 %v454
      %v859 = vunpack.c.l.b16 %v455
      %v860 = vunpack.c.l.b16 %v456
      %v861 = vunpack.c.l.b16 %v457
      %v862 = vunpack.c.l.b16 %v458
      %v863 = vunpack.c.l.b16 %v459
      %v864 = vunpack.c.l.b16 %v460
      %v865 = vunpack.c.l.b16 %v461
      %v866 = vunpack.c.l.b16 %v462
      %v867 = vunpack.c.l.b16 %v463
      %v868 = vunpack.c.l.b16 %v464
      %v869 = vunpack.c.l.b16 %v465
      %v870 = vunpack.c.l.b16 %v466
      %v871 = vunpack.c.l.b16 %v467
      %v872 = vpack.c.b16 %v841, %v840
      %v873 = vpack.c.b16 %v843, %v842
      %v874 = vpack.c.b16 %v845, %v844
      %v875 = vpack.c.b16 %v847, %v846
      %v876 = vpack.c.b16 %v849, %v848
      %v877 = vpack.c.b16 %v851, %v850
      %v878 = vpack.c.b16 %v853, %v852
      %v879 = vpack.c.b16 %v855, %v854
      %v880 = vpack.c.b16 %v857, %v856
      %v881 = vpack.c.b16 %v859, %v858
      %v882 = vpack.c.b16 %v861, %v860
      %v883 = vpack.c.b16 %v863, %v862
      %v884 = vpack.c.b16 %v865, %v864
      %v885 = vpack.c.b16 %v867, %v866
      %v886 = vpack.c.b16 %v869, %v868
      %v887 = vpack.c.b16 %v871, %v870
      %v890 = vunpack.c.l.b16 %v397
      %v891 = vunpack.c.h.b16 %v397
      %v892 = vunpack.c.l.b16 %v398
      %v893 = vunpack.c.h.b16 %v398
      %v894 = vpack.c.b16 %v892, %v890
      %v895 = vpack.c.b16 %v893, %v891
      %v899 = vsel %vm566, %v872, 0
      %v902 = vsel %vm566, %v873, 0
      %v905 = vsel %vm566, %v874, 0
      %v908 = vsel %vm566, %v875, 0
      %v911 = vsel %vm566, %v876, 0
      %v914 = vsel %vm566, %v877, 0
      %v917 = vsel %vm566, %v878, 0
      %v920 = vsel %vm566, %v879, 0
      %v923 = vsel %vm566, %v880, 0
      %v926 = vsel %vm566, %v881, 0
      %v929 = vsel %vm566, %v882, 0
      %v932 = vsel %vm566, %v883, 0
      %v935 = vsel %vm566, %v884, 0
      %v938 = vsel %vm566, %v885, 0
      %v941 = vsel %vm566, %v886, 0
      %v944 = vsel %vm566, %v887, 0
      %946 = vmatprep.subr.bf16.mxu0 0
      %947 = vmatpush1.bf16.msra.mxu0 0
      %948 = vmatprep.subr.bf16.mxu0 0
      %949 = vmatpush1.bf16.msra.mxu0 0
      %950 = vmatprep.subr.bf16.mxu0 0
      %951 = vmatpush1.bf16.msra.mxu0 0
      %952 = vmatprep.subr.bf16.mxu0 0
      %953 = vmatpush1.bf16.msra.mxu0 0
      %954 = vmatprep.subr.bf16.mxu0 0
      %955 = vmatpush1.bf16.msra.mxu0 0
      %956 = vmatprep.subr.bf16.mxu0 0
      %957 = vmatpush1.bf16.msra.mxu0 0
      %958 = vmatprep.subr.bf16.mxu0 0
      %959 = vmatpush1.bf16.msra.mxu0 0
      %960 = vmatprep.subr.bf16.mxu0 %v895
      %961 = vmatpush1.bf16.msra.mxu0 %v894
      %962 = vmatprep.subr.bf16.mxu0 0
      %963 = vmatpush2.bf16.msra.mxu0 0
      %964 = vmatprep.subr.bf16.mxu0 0
      %965 = vmatpush2.bf16.msra.mxu0 0
      %966 = vmatprep.subr.bf16.mxu0 0
      %967 = vmatpush2.bf16.msra.mxu0 0
      %968 = vmatprep.subr.bf16.mxu0 0
      %969 = vmatpush2.bf16.msra.mxu0 0
      %970 = vmatprep.subr.bf16.mxu0 0
      %971 = vmatpush2.bf16.msra.mxu0 0
      %972 = vmatprep.subr.bf16.mxu0 0
      %973 = vmatpush2.bf16.msra.mxu0 0
      %974 = vmatprep.subr.bf16.mxu0 0
      %975 = vmatpush2.bf16.msra.mxu0 0
      %976 = vmatprep.subr.bf16.mxu0 0
      %977 = vmatpush2.bf16.msra.mxu0 0
      %978 = vmatprep.mubr.bf16.mxu0 0
      %979 = vmatmul.mubr.bf16.gmra.mxu0 %v899
      %v980 = vpop.f32.mrf.mxu0
      %v981 = vadd.f32 0.0, %v980
      %v982 = vpop.f32.mrf.mxu0
      %v983 = vadd.f32 0.0, %v982
      %v984 = vpop.f32.mrf.mxu0
      %v985 = vadd.f32 0.0, %v984
      %v986 = vpop.f32.mrf.mxu0
      %v987 = vadd.f32 0.0, %v986
      %988 = vmatprep.mubr.bf16.mxu0 0
      %989 = vmatmul.mubr.bf16.gmra.mxu0 %v902
      %v990 = vpop.f32.mrf.mxu0
      %v991 = vadd.f32 0.0, %v990
      %v992 = vpop.f32.mrf.mxu0
      %v993 = vadd.f32 0.0, %v992
      %v994 = vpop.f32.mrf.mxu0
      %v995 = vadd.f32 0.0, %v994
      %v996 = vpop.f32.mrf.mxu0
      %v997 = vadd.f32 0.0, %v996
      %998 = vmatprep.mubr.bf16.mxu0 0
      %999 = vmatmul.mubr.bf16.gmra.mxu0 %v905
      %v1000 = vpop.f32.mrf.mxu0
      %v1001 = vadd.f32 0.0, %v1000
      %v1002 = vpop.f32.mrf.mxu0
      %v1003 = vadd.f32 0.0, %v1002
      %v1004 = vpop.f32.mrf.mxu0
      %v1005 = vadd.f32 0.0, %v1004
      %v1006 = vpop.f32.mrf.mxu0
      %v1007 = vadd.f32 0.0, %v1006
      %1008 = vmatprep.mubr.bf16.mxu0 0
      %1009 = vmatmul.mubr.bf16.gmra.mxu0 %v908
      %v1010 = vpop.f32.mrf.mxu0
      %v1011 = vadd.f32 0.0, %v1010
      %v1012 = vpop.f32.mrf.mxu0
      %v1013 = vadd.f32 0.0, %v1012
      %v1014 = vpop.f32.mrf.mxu0
      %v1015 = vadd.f32 0.0, %v1014
      %v1016 = vpop.f32.mrf.mxu0
      %v1017 = vadd.f32 0.0, %v1016
      %1018 = vmatprep.mubr.bf16.mxu0 0
      %1019 = vmatmul.mubr.bf16.gmra.mxu0 %v911
      %v1020 = vpop.f32.mrf.mxu0
      %v1021 = vadd.f32 0.0, %v1020
      %v1022 = vpop.f32.mrf.mxu0
      %v1023 = vadd.f32 0.0, %v1022
      %v1024 = vpop.f32.mrf.mxu0
      %v1025 = vadd.f32 0.0, %v1024
      %v1026 = vpop.f32.mrf.mxu0
      %v1027 = vadd.f32 0.0, %v1026
      %1028 = vmatprep.mubr.bf16.mxu0 0
      %1029 = vmatmul.mubr.bf16.gmra.mxu0 %v914
      %v1030 = vpop.f32.mrf.mxu0
      %v1031 = vadd.f32 0.0, %v1030
      %v1032 = vpop.f32.mrf.mxu0
      %v1033 = vadd.f32 0.0, %v1032
      %v1034 = vpop.f32.mrf.mxu0
      %v1035 = vadd.f32 0.0, %v1034
      %v1036 = vpop.f32.mrf.mxu0
      %v1037 = vadd.f32 0.0, %v1036
      %1038 = vmatprep.mubr.bf16.mxu0 0
      %1039 = vmatmul.mubr.bf16.gmra.mxu0 %v917
      %v1040 = vpop.f32.mrf.mxu0
      %v1041 = vadd.f32 0.0, %v1040
      %v1042 = vpop.f32.mrf.mxu0
      %v1043 = vadd.f32 0.0, %v1042
      %v1044 = vpop.f32.mrf.mxu0
      %v1045 = vadd.f32 0.0, %v1044
      %v1046 = vpop.f32.mrf.mxu0
      %v1047 = vadd.f32 0.0, %v1046
      %1048 = vmatprep.mubr.bf16.mxu0 0
      %1049 = vmatmul.mubr.bf16.gmra.mxu0 %v920
      %v1050 = vpop.f32.mrf.mxu0
      %v1051 = vadd.f32 0.0, %v1050
      %v1052 = vpop.f32.mrf.mxu0
      %v1053 = vadd.f32 0.0, %v1052
      %v1054 = vpop.f32.mrf.mxu0
      %v1055 = vadd.f32 0.0, %v1054
      %v1056 = vpop.f32.mrf.mxu0
      %v1057 = vadd.f32 0.0, %v1056
      %1058 = vmatprep.mubr.bf16.mxu0 0
      %1059 = vmatmul.mubr.bf16.gmra.mxu0 %v923
      %v1060 = vpop.f32.mrf.mxu0
      %v1061 = vadd.f32 0.0, %v1060
      %v1062 = vpop.f32.mrf.mxu0
      %v1063 = vadd.f32 0.0, %v1062
      %v1064 = vpop.f32.mrf.mxu0
      %v1065 = vadd.f32 0.0, %v1064
      %v1066 = vpop.f32.mrf.mxu0
      %v1067 = vadd.f32 0.0, %v1066
      %1068 = vmatprep.mubr.bf16.mxu0 0
      %1069 = vmatmul.mubr.bf16.gmra.mxu0 %v926
      %v1070 = vpop.f32.mrf.mxu0
      %v1071 = vadd.f32 0.0, %v1070
      %v1072 = vpop.f32.mrf.mxu0
      %v1073 = vadd.f32 0.0, %v1072
      %v1074 = vpop.f32.mrf.mxu0
      %v1075 = vadd.f32 0.0, %v1074
      %v1076 = vpop.f32.mrf.mxu0
      %v1077 = vadd.f32 0.0, %v1076
      %1078 = vmatprep.mubr.bf16.mxu0 0
      %1079 = vmatmul.mubr.bf16.gmra.mxu0 %v929
      %v1080 = vpop.f32.mrf.mxu0
      %v1081 = vadd.f32 0.0, %v1080
      %v1082 = vpop.f32.mrf.mxu0
      %v1083 = vadd.f32 0.0, %v1082
      %v1084 = vpop.f32.mrf.mxu0
      %v1085 = vadd.f32 0.0, %v1084
      %v1086 = vpop.f32.mrf.mxu0
      %v1087 = vadd.f32 0.0, %v1086
      %1088 = vmatprep.mubr.bf16.mxu0 0
      %1089 = vmatmul.mubr.bf16.gmra.mxu0 %v932
      %v1090 = vpop.f32.mrf.mxu0
      %v1091 = vadd.f32 0.0, %v1090
      %v1092 = vpop.f32.mrf.mxu0
      %v1093 = vadd.f32 0.0, %v1092
      %v1094 = vpop.f32.mrf.mxu0
      %v1095 = vadd.f32 0.0, %v1094
      %v1096 = vpop.f32.mrf.mxu0
      %v1097 = vadd.f32 0.0, %v1096
      %1098 = vmatprep.mubr.bf16.mxu0 0
      %1099 = vmatmul.mubr.bf16.gmra.mxu0 %v935
      %v1100 = vpop.f32.mrf.mxu0
      %v1101 = vadd.f32 0.0, %v1100
      %v1102 = vpop.f32.mrf.mxu0
      %v1103 = vadd.f32 0.0, %v1102
      %v1104 = vpop.f32.mrf.mxu0
      %v1105 = vadd.f32 0.0, %v1104
      %v1106 = vpop.f32.mrf.mxu0
      %v1107 = vadd.f32 0.0, %v1106
      %1108 = vmatprep.mubr.bf16.mxu0 0
      %1109 = vmatmul.mubr.bf16.gmra.mxu0 %v938
      %v1110 = vpop.f32.mrf.mxu0
      %v1111 = vadd.f32 0.0, %v1110
      %v1112 = vpop.f32.mrf.mxu0
      %v1113 = vadd.f32 0.0, %v1112
      %v1114 = vpop.f32.mrf.mxu0
      %v1115 = vadd.f32 0.0, %v1114
      %v1116 = vpop.f32.mrf.mxu0
      %v1117 = vadd.f32 0.0, %v1116
      %1118 = vmatprep.mubr.bf16.mxu0 0
      %1119 = vmatmul.mubr.bf16.gmra.mxu0 %v941
      %v1120 = vpop.f32.mrf.mxu0
      %v1121 = vadd.f32 0.0, %v1120
      %v1122 = vpop.f32.mrf.mxu0
      %v1123 = vadd.f32 0.0, %v1122
      %v1124 = vpop.f32.mrf.mxu0
      %v1125 = vadd.f32 0.0, %v1124
      %v1126 = vpop.f32.mrf.mxu0
      %v1127 = vadd.f32 0.0, %v1126
      %1128 = vmatprep.mubr.bf16.mxu0 0
      %1129 = vmatmul.mubr.bf16.gmra.mxu0 %v944
      %v1130 = vpop.f32.mrf.mxu0
      %v1131 = vadd.f32 0.0, %v1130
      %v1132 = vpop.f32.mrf.mxu0
      %v1133 = vadd.f32 0.0, %v1132
      %v1134 = vpop.f32.mrf.mxu0
      %v1135 = vadd.f32 0.0, %v1134
      %v1136 = vpop.f32.mrf.mxu0
      %v1137 = vadd.f32 0.0, %v1136
      %1138 = vdwg.mxu0
      %v1139 = vld [vmem:[#allocation2] sm:$0x3]
      %v1140 = vld [vmem:[#allocation2 + $0x2] sm:$0x3]
      %v1141 = vmax.f32 %v650, %v654
      %v1142 = vmax.f32 %v1141, %v660
      %v1143 = vmax.f32 %v1142, %v664
      %v1144 = vmax.f32 %v1143, %v670
      %v1145 = vmax.f32 %v1144, %v674
      %v1146 = vmax.f32 %v1145, %v680
      %v1147 = vmax.f32 %v1146, %v684
      %v1148 = vmax.f32 %v1147, %v690
      %v1149 = vmax.f32 %v1148, %v694
      %v1150 = vmax.f32 %v1149, %v700
      %v1151 = vmax.f32 %v1150, %v704
      %v1152 = vmax.f32 %v1151, %v710
      %v1153 = vmax.f32 %v1152, %v714
      %v1154 = vmax.f32 %v1153, %v720
      %v1155 = vmax.f32 %v1154, %v724
      %v1156 = vmax.f32 %v1155, %v730
      %v1157 = vmax.f32 %v1156, %v734
      %v1158 = vmax.f32 %v1157, %v740
      %v1159 = vmax.f32 %v1158, %v744
      %v1160 = vmax.f32 %v1159, %v750
      %v1161 = vmax.f32 %v1160, %v754
      %v1162 = vmax.f32 %v1161, %v760
      %v1163 = vmax.f32 %v1162, %v764
      %v1164 = vmax.f32 %v1163, %v770
      %v1165 = vmax.f32 %v1164, %v774
      %v1166 = vmax.f32 %v1165, %v780
      %v1167 = vmax.f32 %v1166, %v784
      %v1168 = vmax.f32 %v1167, %v790
      %v1169 = vmax.f32 %v1168, %v794
      %v1170 = vmax.f32 %v1169, %v800
      %v1171 = vmax.f32 %v1170, %v804
      %v1172 = vrot.slane %v1171, 4
      %v1173 = vmax.f32 %v1171, %v1172
      %v1174 = vrot.slane %v1173, 2
      %v1175 = vmax.f32 %v1173, %v1174
      %v1176 = vrot.slane %v1175, 1
      %v1177 = vmax.f32 %v1175, %v1176
      %v1178 = vmax.f32 %v652, %v656
      %v1179 = vmax.f32 %v1178, %v662
      %v1180 = vmax.f32 %v1179, %v666
      %v1181 = vmax.f32 %v1180, %v672
      %v1182 = vmax.f32 %v1181, %v676
      %v1183 = vmax.f32 %v1182, %v682
      %v1184 = vmax.f32 %v1183, %v686
      %v1185 = vmax.f32 %v1184, %v692
      %v1186 = vmax.f32 %v1185, %v696
      %v1187 = vmax.f32 %v1186, %v702
      %v1188 = vmax.f32 %v1187, %v706
      %v1189 = vmax.f32 %v1188, %v712
      %v1190 = vmax.f32 %v1189, %v716
      %v1191 = vmax.f32 %v1190, %v722
      %v1192 = vmax.f32 %v1191, %v726
      %v1193 = vmax.f32 %v1192, %v732
      %v1194 = vmax.f32 %v1193, %v736
      %v1195 = vmax.f32 %v1194, %v742
      %v1196 = vmax.f32 %v1195, %v746
      %v1197 = vmax.f32 %v1196, %v752
      %v1198 = vmax.f32 %v1197, %v756
      %v1199 = vmax.f32 %v1198, %v762
      %v1200 = vmax.f32 %v1199, %v766
      %v1201 = vmax.f32 %v1200, %v772
      %v1202 = vmax.f32 %v1201, %v776
      %v1203 = vmax.f32 %v1202, %v782
      %v1204 = vmax.f32 %v1203, %v786
      %v1205 = vmax.f32 %v1204, %v792
      %v1206 = vmax.f32 %v1205, %v796
      %v1207 = vmax.f32 %v1206, %v802
      %v1208 = vmax.f32 %v1207, %v806
      %v1209 = vrot.slane %v1208, 4
      %v1210 = vmax.f32 %v1208, %v1209
      %v1211 = vrot.slane %v1210, 2
      %v1212 = vmax.f32 %v1210, %v1211
      %v1213 = vrot.slane %v1212, 1
      %v1214 = vmax.f32 %v1212, %v1213
      %v1215 = vmax.f32 %v981, %v985
      %v1216 = vmax.f32 %v1215, %v991
      %v1217 = vmax.f32 %v1216, %v995
      %v1218 = vmax.f32 %v1217, %v1001
      %v1219 = vmax.f32 %v1218, %v1005
      %v1220 = vmax.f32 %v1219, %v1011
      %v1221 = vmax.f32 %v1220, %v1015
      %v1222 = vmax.f32 %v1221, %v1021
      %v1223 = vmax.f32 %v1222, %v1025
      %v1224 = vmax.f32 %v1223, %v1031
      %v1225 = vmax.f32 %v1224, %v1035
      %v1226 = vmax.f32 %v1225, %v1041
      %v1227 = vmax.f32 %v1226, %v1045
      %v1228 = vmax.f32 %v1227, %v1051
      %v1229 = vmax.f32 %v1228, %v1055
      %v1230 = vmax.f32 %v1229, %v1061
      %v1231 = vmax.f32 %v1230, %v1065
      %v1232 = vmax.f32 %v1231, %v1071
      %v1233 = vmax.f32 %v1232, %v1075
      %v1234 = vmax.f32 %v1233, %v1081
      %v1235 = vmax.f32 %v1234, %v1085
      %v1236 = vmax.f32 %v1235, %v1091
      %v1237 = vmax.f32 %v1236, %v1095
      %v1238 = vmax.f32 %v1237, %v1101
      %v1239 = vmax.f32 %v1238, %v1105
      %v1240 = vmax.f32 %v1239, %v1111
      %v1241 = vmax.f32 %v1240, %v1115
      %v1242 = vmax.f32 %v1241, %v1121
      %v1243 = vmax.f32 %v1242, %v1125
      %v1244 = vmax.f32 %v1243, %v1131
      %v1245 = vmax.f32 %v1244, %v1135
      %v1246 = vrot.slane %v1245, 4
      %v1247 = vmax.f32 %v1245, %v1246
      %v1248 = vrot.slane %v1247, 2
      %v1249 = vmax.f32 %v1247, %v1248
      %v1250 = vrot.slane %v1249, 1
      %v1251 = vmax.f32 %v1249, %v1250
      %v1252 = vmax.f32 %v983, %v987
      %v1253 = vmax.f32 %v1252, %v993
      %v1254 = vmax.f32 %v1253, %v997
      %v1255 = vmax.f32 %v1254, %v1003
      %v1256 = vmax.f32 %v1255, %v1007
      %v1257 = vmax.f32 %v1256, %v1013
      %v1258 = vmax.f32 %v1257, %v1017
      %v1259 = vmax.f32 %v1258, %v1023
      %v1260 = vmax.f32 %v1259, %v1027
      %v1261 = vmax.f32 %v1260, %v1033
      %v1262 = vmax.f32 %v1261, %v1037
      %v1263 = vmax.f32 %v1262, %v1043
      %v1264 = vmax.f32 %v1263, %v1047
      %v1265 = vmax.f32 %v1264, %v1053
      %v1266 = vmax.f32 %v1265, %v1057
      %v1267 = vmax.f32 %v1266, %v1063
      %v1268 = vmax.f32 %v1267, %v1067
      %v1269 = vmax.f32 %v1268, %v1073
      %v1270 = vmax.f32 %v1269, %v1077
      %v1271 = vmax.f32 %v1270, %v1083
      %v1272 = vmax.f32 %v1271, %v1087
      %v1273 = vmax.f32 %v1272, %v1093
      %v1274 = vmax.f32 %v1273, %v1097
      %v1275 = vmax.f32 %v1274, %v1103
      %v1276 = vmax.f32 %v1275, %v1107
      %v1277 = vmax.f32 %v1276, %v1113
      %v1278 = vmax.f32 %v1277, %v1117
      %v1279 = vmax.f32 %v1278, %v1123
      %v1280 = vmax.f32 %v1279, %v1127
      %v1281 = vmax.f32 %v1280, %v1133
      %v1282 = vmax.f32 %v1281, %v1137
      %v1283 = vrot.slane %v1282, 4
      %v1284 = vmax.f32 %v1282, %v1283
      %v1285 = vrot.slane %v1284, 2
      %v1286 = vmax.f32 %v1284, %v1285
      %v1287 = vrot.slane %v1286, 1
      %v1288 = vmax.f32 %v1286, %v1287
      %v1293 = vcombine.low %v1177, %v1214
      %v1295 = vunpack.c.l.s4 1966171168
      %v1296 = vunpack.c.0.s8 %v1295
      %v1297 = vlaneseq
      %v1298 = vshrl.u32 %v1297, 7
      %v1299 = vsub.s32 %v1296, %v1298
      %v1300 = vrot.slane %v1293, %v1299
      %v1302 = vunpack.c.l.s4 1966171168
      %v1303 = vunpack.c.0.s8 %v1302
      %v1304 = vlaneseq
      %v1305 = vshrl.u32 %v1304, 7
      %v1306 = vsub.s32 %v1303, %v1305
      %v1307 = vrot.slane %v1300, %v1306
      %v1308 = vcombine.low %v1251, %v1288
      %v1310 = vunpack.c.l.s4 1966171168
      %v1311 = vunpack.c.0.s8 %v1310
      %v1312 = vlaneseq
      %v1313 = vshrl.u32 %v1312, 7
      %v1314 = vsub.s32 %v1311, %v1313
      %v1315 = vrot.slane %v1308, %v1314
      %v1317 = vunpack.c.l.s4 1966171168
      %v1318 = vunpack.c.0.s8 %v1317
      %v1319 = vlaneseq
      %v1320 = vshrl.u32 %v1319, 7
      %v1321 = vsub.s32 %v1318, %v1320
      %v1322 = vrot.slane %v1315, %v1321
      %v1325 = vmax.f32 %v1139, %v1307
      %v1326 = vmax.f32 %v1140, %v1322
      %v1327 = vsub.f32 %v1139, %v1325
      %v1328 = vsub.f32 %v1140, %v1326
      %v1329 = vmul.f32 %v1327, 1.442695
      %v1330 = vpow.pop %v1329
      %v1331 = vmul.f32 %v1328, 1.442695
      %v1332 = vpow.pop %v1331
      %v1335 = vlaneseq
      %v1336 = vshrl.u32 %v1335, 7
      %v1337 = vsub.s32 0, %v1336
      %v1338 = vrot.slane %v1325, %v1337
      %v1339 = vlaneseq
      %v1340 = vshrl.u32 %v1339, 7
      %v1341 = vsub.s32 1, %v1340
      %v1342 = vrot.slane %v1325, %v1341
      %v1343 = vlaneseq
      %v1344 = vshrl.u32 %v1343, 7
      %v1345 = vsub.s32 0, %v1344
      %v1346 = vrot.slane %v1326, %v1345
      %v1347 = vlaneseq
      %v1348 = vshrl.u32 %v1347, 7
      %v1349 = vsub.s32 1, %v1348
      %v1350 = vrot.slane %v1326, %v1349
      %v1355 = vsub.f32 %v650, %v1338
      %v1356 = vsub.f32 %v652, %v1342
      %v1357 = vsub.f32 %v654, %v1338
      %v1358 = vsub.f32 %v656, %v1342
      %v1359 = vsub.f32 %v660, %v1338
      %v1360 = vsub.f32 %v662, %v1342
      %v1361 = vsub.f32 %v664, %v1338
      %v1362 = vsub.f32 %v666, %v1342
      %v1363 = vsub.f32 %v670, %v1338
      %v1364 = vsub.f32 %v672, %v1342
      %v1365 = vsub.f32 %v674, %v1338
      %v1366 = vsub.f32 %v676, %v1342
      %v1367 = vsub.f32 %v680, %v1338
      %v1368 = vsub.f32 %v682, %v1342
      %v1369 = vsub.f32 %v684, %v1338
      %v1370 = vsub.f32 %v686, %v1342
      %v1371 = vsub.f32 %v690, %v1338
      %v1372 = vsub.f32 %v692, %v1342
      %v1373 = vsub.f32 %v694, %v1338
      %v1374 = vsub.f32 %v696, %v1342
      %v1375 = vsub.f32 %v700, %v1338
      %v1376 = vsub.f32 %v702, %v1342
      %v1377 = vsub.f32 %v704, %v1338
      %v1378 = vsub.f32 %v706, %v1342
      %v1379 = vsub.f32 %v710, %v1338
      %v1380 = vsub.f32 %v712, %v1342
      %v1381 = vsub.f32 %v714, %v1338
      %v1382 = vsub.f32 %v716, %v1342
      %v1383 = vsub.f32 %v720, %v1338
      %v1384 = vsub.f32 %v722, %v1342
      %v1385 = vsub.f32 %v724, %v1338
      %v1386 = vsub.f32 %v726, %v1342
      %v1387 = vsub.f32 %v730, %v1338
      %v1388 = vsub.f32 %v732, %v1342
      %v1389 = vsub.f32 %v734, %v1338
      %v1390 = vsub.f32 %v736, %v1342
      %v1391 = vsub.f32 %v740, %v1338
      %v1392 = vsub.f32 %v742, %v1342
      %v1393 = vsub.f32 %v744, %v1338
      %v1394 = vsub.f32 %v746, %v1342
      %v1395 = vsub.f32 %v750, %v1338
      %v1396 = vsub.f32 %v752, %v1342
      %v1397 = vsub.f32 %v754, %v1338
      %v1398 = vsub.f32 %v756, %v1342
      %v1399 = vsub.f32 %v760, %v1338
      %v1400 = vsub.f32 %v762, %v1342
      %v1401 = vsub.f32 %v764, %v1338
      %v1402 = vsub.f32 %v766, %v1342
      %v1403 = vsub.f32 %v770, %v1338
      %v1404 = vsub.f32 %v772, %v1342
      %v1405 = vsub.f32 %v774, %v1338
      %v1406 = vsub.f32 %v776, %v1342
      %v1407 = vsub.f32 %v780, %v1338
      %v1408 = vsub.f32 %v782, %v1342
      %v1409 = vsub.f32 %v784, %v1338
      %v1410 = vsub.f32 %v786, %v1342
      %v1411 = vsub.f32 %v790, %v1338
      %v1412 = vsub.f32 %v792, %v1342
      %v1413 = vsub.f32 %v794, %v1338
      %v1414 = vsub.f32 %v796, %v1342
      %v1415 = vsub.f32 %v800, %v1338
      %v1416 = vsub.f32 %v802, %v1342
      %v1417 = vsub.f32 %v804, %v1338
      %v1418 = vsub.f32 %v806, %v1342
      %v1419 = vsub.f32 %v981, %v1346
      %v1420 = vsub.f32 %v983, %v1350
      %v1421 = vsub.f32 %v985, %v1346
      %v1422 = vsub.f32 %v987, %v1350
      %v1423 = vsub.f32 %v991, %v1346
      %v1424 = vsub.f32 %v993, %v1350
      %v1425 = vsub.f32 %v995, %v1346
      %v1426 = vsub.f32 %v997, %v1350
      %v1427 = vsub.f32 %v1001, %v1346
      %v1428 = vsub.f32 %v1003, %v1350
      %v1429 = vsub.f32 %v1005, %v1346
      %v1430 = vsub.f32 %v1007, %v1350
      %v1431 = vsub.f32 %v1011, %v1346
      %v1432 = vsub.f32 %v1013, %v1350
      %v1433 = vsub.f32 %v1015, %v1346
      %v1434 = vsub.f32 %v1017, %v1350
      %v1435 = vsub.f32 %v1021, %v1346
      %v1436 = vsub.f32 %v1023, %v1350
      %v1437 = vsub.f32 %v1025, %v1346
      %v1438 = vsub.f32 %v1027, %v1350
      %v1439 = vsub.f32 %v1031, %v1346
      %v1440 = vsub.f32 %v1033, %v1350
      %v1441 = vsub.f32 %v1035, %v1346
      %v1442 = vsub.f32 %v1037, %v1350
      %v1443 = vsub.f32 %v1041, %v1346
      %v1444 = vsub.f32 %v1043, %v1350
      %v1445 = vsub.f32 %v1045, %v1346
      %v1446 = vsub.f32 %v1047, %v1350
      %v1447 = vsub.f32 %v1051, %v1346
      %v1448 = vsub.f32 %v1053, %v1350
      %v1449 = vsub.f32 %v1055, %v1346
      %v1450 = vsub.f32 %v1057, %v1350
      %v1451 = vsub.f32 %v1061, %v1346
      %v1452 = vsub.f32 %v1063, %v1350
      %v1453 = vsub.f32 %v1065, %v1346
      %v1454 = vsub.f32 %v1067, %v1350
      %v1455 = vsub.f32 %v1071, %v1346
      %v1456 = vsub.f32 %v1073, %v1350
      %v1457 = vsub.f32 %v1075, %v1346
      %v1458 = vsub.f32 %v1077, %v1350
      %v1459 = vsub.f32 %v1081, %v1346
      %v1460 = vsub.f32 %v1083, %v1350
      %v1461 = vsub.f32 %v1085, %v1346
      %v1462 = vsub.f32 %v1087, %v1350
      %v1463 = vsub.f32 %v1091, %v1346
      %v1464 = vsub.f32 %v1093, %v1350
      %v1465 = vsub.f32 %v1095, %v1346
      %v1466 = vsub.f32 %v1097, %v1350
      %v1467 = vsub.f32 %v1101, %v1346
      %v1468 = vsub.f32 %v1103, %v1350
      %v1469 = vsub.f32 %v1105, %v1346
      %v1470 = vsub.f32 %v1107, %v1350
      %v1471 = vsub.f32 %v1111, %v1346
      %v1472 = vsub.f32 %v1113, %v1350
      %v1473 = vsub.f32 %v1115, %v1346
      %v1474 = vsub.f32 %v1117, %v1350
      %v1475 = vsub.f32 %v1121, %v1346
      %v1476 = vsub.f32 %v1123, %v1350
      %v1477 = vsub.f32 %v1125, %v1346
      %v1478 = vsub.f32 %v1127, %v1350
      %v1479 = vsub.f32 %v1131, %v1346
      %v1480 = vsub.f32 %v1133, %v1350
      %v1481 = vsub.f32 %v1135, %v1346
      %v1482 = vsub.f32 %v1137, %v1350
      %v1483 = vmul.f32 %v1355, 1.442695
      %v1484 = vpow.pop %v1483
      %v1485 = vmul.f32 %v1356, 1.442695
      %v1486 = vpow.pop %v1485
      %v1487 = vmul.f32 %v1357, 1.442695
      %v1488 = vpow.pop %v1487
      %v1489 = vmul.f32 %v1358, 1.442695
      %v1490 = vpow.pop %v1489
      %v1491 = vmul.f32 %v1359, 1.442695
      %v1492 = vpow.pop %v1491
      %v1493 = vmul.f32 %v1360, 1.442695
      %v1494 = vpow.pop %v1493
      %v1495 = vmul.f32 %v1361, 1.442695
      %v1496 = vpow.pop %v1495
      %v1497 = vmul.f32 %v1362, 1.442695
      %v1498 = vpow.pop %v1497
      %v1499 = vmul.f32 %v1363, 1.442695
      %v1500 = vpow.pop %v1499
      %v1501 = vmul.f32 %v1364, 1.442695
      %v1502 = vpow.pop %v1501
      %v1503 = vmul.f32 %v1365, 1.442695
      %v1504 = vpow.pop %v1503
      %v1505 = vmul.f32 %v1366, 1.442695
      %v1506 = vpow.pop %v1505
      %v1507 = vmul.f32 %v1367, 1.442695
      %v1508 = vpow.pop %v1507
      %v1509 = vmul.f32 %v1368, 1.442695
      %v1510 = vpow.pop %v1509
      %v1511 = vmul.f32 %v1369, 1.442695
      %v1512 = vpow.pop %v1511
      %v1513 = vmul.f32 %v1370, 1.442695
      %v1514 = vpow.pop %v1513
      %v1515 = vmul.f32 %v1371, 1.442695
      %v1516 = vpow.pop %v1515
      %v1517 = vmul.f32 %v1372, 1.442695
      %v1518 = vpow.pop %v1517
      %v1519 = vmul.f32 %v1373, 1.442695
      %v1520 = vpow.pop %v1519
      %v1521 = vmul.f32 %v1374, 1.442695
      %v1522 = vpow.pop %v1521
      %v1523 = vmul.f32 %v1375, 1.442695
      %v1524 = vpow.pop %v1523
      %v1525 = vmul.f32 %v1376, 1.442695
      %v1526 = vpow.pop %v1525
      %v1527 = vmul.f32 %v1377, 1.442695
      %v1528 = vpow.pop %v1527
      %v1529 = vmul.f32 %v1378, 1.442695
      %v1530 = vpow.pop %v1529
      %v1531 = vmul.f32 %v1379, 1.442695
      %v1532 = vpow.pop %v1531
      %v1533 = vmul.f32 %v1380, 1.442695
      %v1534 = vpow.pop %v1533
      %v1535 = vmul.f32 %v1381, 1.442695
      %v1536 = vpow.pop %v1535
      %v1537 = vmul.f32 %v1382, 1.442695
      %v1538 = vpow.pop %v1537
      %v1539 = vmul.f32 %v1383, 1.442695
      %v1540 = vpow.pop %v1539
      %v1541 = vmul.f32 %v1384, 1.442695
      %v1542 = vpow.pop %v1541
      %v1543 = vmul.f32 %v1385, 1.442695
      %v1544 = vpow.pop %v1543
      %v1545 = vmul.f32 %v1386, 1.442695
      %v1546 = vpow.pop %v1545
      %v1547 = vmul.f32 %v1387, 1.442695
      %v1548 = vpow.pop %v1547
      %v1549 = vmul.f32 %v1388, 1.442695
      %v1550 = vpow.pop %v1549
      %v1551 = vmul.f32 %v1389, 1.442695
      %v1552 = vpow.pop %v1551
      %v1553 = vmul.f32 %v1390, 1.442695
      %v1554 = vpow.pop %v1553
      %v1555 = vmul.f32 %v1391, 1.442695
      %v1556 = vpow.pop %v1555
      %v1557 = vmul.f32 %v1392, 1.442695
      %v1558 = vpow.pop %v1557
      %v1559 = vmul.f32 %v1393, 1.442695
      %v1560 = vpow.pop %v1559
      %v1561 = vmul.f32 %v1394, 1.442695
      %v1562 = vpow.pop %v1561
      %v1563 = vmul.f32 %v1395, 1.442695
      %v1564 = vpow.pop %v1563
      %v1565 = vmul.f32 %v1396, 1.442695
      %v1566 = vpow.pop %v1565
      %v1567 = vmul.f32 %v1397, 1.442695
      %v1568 = vpow.pop %v1567
      %v1569 = vmul.f32 %v1398, 1.442695
      %v1570 = vpow.pop %v1569
      %v1571 = vmul.f32 %v1399, 1.442695
      %v1572 = vpow.pop %v1571
      %v1573 = vmul.f32 %v1400, 1.442695
      %v1574 = vpow.pop %v1573
      %v1575 = vmul.f32 %v1401, 1.442695
      %v1576 = vpow.pop %v1575
      %v1577 = vmul.f32 %v1402, 1.442695
      %v1578 = vpow.pop %v1577
      %v1579 = vmul.f32 %v1403, 1.442695
      %v1580 = vpow.pop %v1579
      %v1581 = vmul.f32 %v1404, 1.442695
      %v1582 = vpow.pop %v1581
      %v1583 = vmul.f32 %v1405, 1.442695
      %v1584 = vpow.pop %v1583
      %v1585 = vmul.f32 %v1406, 1.442695
      %v1586 = vpow.pop %v1585
      %v1587 = vmul.f32 %v1407, 1.442695
      %v1588 = vpow.pop %v1587
      %v1589 = vmul.f32 %v1408, 1.442695
      %v1590 = vpow.pop %v1589
      %v1591 = vmul.f32 %v1409, 1.442695
      %v1592 = vpow.pop %v1591
      %v1593 = vmul.f32 %v1410, 1.442695
      %v1594 = vpow.pop %v1593
      %v1595 = vmul.f32 %v1411, 1.442695
      %v1596 = vpow.pop %v1595
      %v1597 = vmul.f32 %v1412, 1.442695
      %v1598 = vpow.pop %v1597
      %v1599 = vmul.f32 %v1413, 1.442695
      %v1600 = vpow.pop %v1599
      %v1601 = vmul.f32 %v1414, 1.442695
      %v1602 = vpow.pop %v1601
      %v1603 = vmul.f32 %v1415, 1.442695
      %v1604 = vpow.pop %v1603
      %v1605 = vmul.f32 %v1416, 1.442695
      %v1606 = vpow.pop %v1605
      %v1607 = vmul.f32 %v1417, 1.442695
      %v1608 = vpow.pop %v1607
      %v1609 = vmul.f32 %v1418, 1.442695
      %v1610 = vpow.pop %v1609
      %v1611 = vmul.f32 %v1419, 1.442695
      %v1612 = vpow.pop %v1611
      %v1613 = vmul.f32 %v1420, 1.442695
      %v1614 = vpow.pop %v1613
      %v1615 = vmul.f32 %v1421, 1.442695
      %v1616 = vpow.pop %v1615
      %v1617 = vmul.f32 %v1422, 1.442695
      %v1618 = vpow.pop %v1617
      %v1619 = vmul.f32 %v1423, 1.442695
      %v1620 = vpow.pop %v1619
      %v1621 = vmul.f32 %v1424, 1.442695
      %v1622 = vpow.pop %v1621
      %v1623 = vmul.f32 %v1425, 1.442695
      %v1624 = vpow.pop %v1623
      %v1625 = vmul.f32 %v1426, 1.442695
      %v1626 = vpow.pop %v1625
      %v1627 = vmul.f32 %v1427, 1.442695
      %v1628 = vpow.pop %v1627
      %v1629 = vmul.f32 %v1428, 1.442695
      %v1630 = vpow.pop %v1629
      %v1631 = vmul.f32 %v1429, 1.442695
      %v1632 = vpow.pop %v1631
      %v1633 = vmul.f32 %v1430, 1.442695
      %v1634 = vpow.pop %v1633
      %v1635 = vmul.f32 %v1431, 1.442695
      %v1636 = vpow.pop %v1635
      %v1637 = vmul.f32 %v1432, 1.442695
      %v1638 = vpow.pop %v1637
      %v1639 = vmul.f32 %v1433, 1.442695
      %v1640 = vpow.pop %v1639
      %v1641 = vmul.f32 %v1434, 1.442695
      %v1642 = vpow.pop %v1641
      %v1643 = vmul.f32 %v1435, 1.442695
      %v1644 = vpow.pop %v1643
      %v1645 = vmul.f32 %v1436, 1.442695
      %v1646 = vpow.pop %v1645
      %v1647 = vmul.f32 %v1437, 1.442695
      %v1648 = vpow.pop %v1647
      %v1649 = vmul.f32 %v1438, 1.442695
      %v1650 = vpow.pop %v1649
      %v1651 = vmul.f32 %v1439, 1.442695
      %v1652 = vpow.pop %v1651
      %v1653 = vmul.f32 %v1440, 1.442695
      %v1654 = vpow.pop %v1653
      %v1655 = vmul.f32 %v1441, 1.442695
      %v1656 = vpow.pop %v1655
      %v1657 = vmul.f32 %v1442, 1.442695
      %v1658 = vpow.pop %v1657
      %v1659 = vmul.f32 %v1443, 1.442695
      %v1660 = vpow.pop %v1659
      %v1661 = vmul.f32 %v1444, 1.442695
      %v1662 = vpow.pop %v1661
      %v1663 = vmul.f32 %v1445, 1.442695
      %v1664 = vpow.pop %v1663
      %v1665 = vmul.f32 %v1446, 1.442695
      %v1666 = vpow.pop %v1665
      %v1667 = vmul.f32 %v1447, 1.442695
      %v1668 = vpow.pop %v1667
      %v1669 = vmul.f32 %v1448, 1.442695
      %v1670 = vpow.pop %v1669
      %v1671 = vmul.f32 %v1449, 1.442695
      %v1672 = vpow.pop %v1671
      %v1673 = vmul.f32 %v1450, 1.442695
      %v1674 = vpow.pop %v1673
      %v1675 = vmul.f32 %v1451, 1.442695
      %v1676 = vpow.pop %v1675
      %v1677 = vmul.f32 %v1452, 1.442695
      %v1678 = vpow.pop %v1677
      %v1679 = vmul.f32 %v1453, 1.442695
      %v1680 = vpow.pop %v1679
      %v1681 = vmul.f32 %v1454, 1.442695
      %v1682 = vpow.pop %v1681
      %v1683 = vmul.f32 %v1455, 1.442695
      %v1684 = vpow.pop %v1683
      %v1685 = vmul.f32 %v1456, 1.442695
      %v1686 = vpow.pop %v1685
      %v1687 = vmul.f32 %v1457, 1.442695
      %v1688 = vpow.pop %v1687
      %v1689 = vmul.f32 %v1458, 1.442695
      %v1690 = vpow.pop %v1689
      %v1691 = vmul.f32 %v1459, 1.442695
      %v1692 = vpow.pop %v1691
      %v1693 = vmul.f32 %v1460, 1.442695
      %v1694 = vpow.pop %v1693
      %v1695 = vmul.f32 %v1461, 1.442695
      %v1696 = vpow.pop %v1695
      %v1697 = vmul.f32 %v1462, 1.442695
      %v1698 = vpow.pop %v1697
      %v1699 = vmul.f32 %v1463, 1.442695
      %v1700 = vpow.pop %v1699
      %v1701 = vmul.f32 %v1464, 1.442695
      %v1702 = vpow.pop %v1701
      %v1703 = vmul.f32 %v1465, 1.442695
      %v1704 = vpow.pop %v1703
      %v1705 = vmul.f32 %v1466, 1.442695
      %v1706 = vpow.pop %v1705
      %v1707 = vmul.f32 %v1467, 1.442695
      %v1708 = vpow.pop %v1707
      %v1709 = vmul.f32 %v1468, 1.442695
      %v1710 = vpow.pop %v1709
      %v1711 = vmul.f32 %v1469, 1.442695
      %v1712 = vpow.pop %v1711
      %v1713 = vmul.f32 %v1470, 1.442695
      %v1714 = vpow.pop %v1713
      %v1715 = vmul.f32 %v1471, 1.442695
      %v1716 = vpow.pop %v1715
      %v1717 = vmul.f32 %v1472, 1.442695
      %v1718 = vpow.pop %v1717
      %v1719 = vmul.f32 %v1473, 1.442695
      %v1720 = vpow.pop %v1719
      %v1721 = vmul.f32 %v1474, 1.442695
      %v1722 = vpow.pop %v1721
      %v1723 = vmul.f32 %v1475, 1.442695
      %v1724 = vpow.pop %v1723
      %v1725 = vmul.f32 %v1476, 1.442695
      %v1726 = vpow.pop %v1725
      %v1727 = vmul.f32 %v1477, 1.442695
      %v1728 = vpow.pop %v1727
      %v1729 = vmul.f32 %v1478, 1.442695
      %v1730 = vpow.pop %v1729
      %v1731 = vmul.f32 %v1479, 1.442695
      %v1732 = vpow.pop %v1731
      %v1733 = vmul.f32 %v1480, 1.442695
      %v1734 = vpow.pop %v1733
      %v1735 = vmul.f32 %v1481, 1.442695
      %v1736 = vpow.pop %v1735
      %v1737 = vmul.f32 %v1482, 1.442695
      %v1738 = vpow.pop %v1737
      %v1739 = vld [vmem:[#allocation3] sm:$0x3]
      %v1740 = vld [vmem:[#allocation3 + $0x2] sm:$0x3]
      %v1741 = vmul.f32 %v1330, %v1739
      %v1742 = vmul.f32 %v1332, %v1740
      %v1743 = vadd.f32 %v1484, %v1488
      %v1744 = vadd.f32 %v1743, %v1492
      %v1745 = vadd.f32 %v1744, %v1496
      %v1746 = vadd.f32 %v1745, %v1500
      %v1747 = vadd.f32 %v1746, %v1504
      %v1748 = vadd.f32 %v1747, %v1508
      %v1749 = vadd.f32 %v1748, %v1512
      %v1750 = vadd.f32 %v1749, %v1516
      %v1751 = vadd.f32 %v1750, %v1520
      %v1752 = vadd.f32 %v1751, %v1524
      %v1753 = vadd.f32 %v1752, %v1528
      %v1754 = vadd.f32 %v1753, %v1532
      %v1755 = vadd.f32 %v1754, %v1536
      %v1756 = vadd.f32 %v1755, %v1540
      %v1757 = vadd.f32 %v1756, %v1544
      %v1758 = vadd.f32 %v1757, %v1548
      %v1759 = vadd.f32 %v1758, %v1552
      %v1760 = vadd.f32 %v1759, %v1556
      %v1761 = vadd.f32 %v1760, %v1560
      %v1762 = vadd.f32 %v1761, %v1564
      %v1763 = vadd.f32 %v1762, %v1568
      %v1764 = vadd.f32 %v1763, %v1572
      %v1765 = vadd.f32 %v1764, %v1576
      %v1766 = vadd.f32 %v1765, %v1580
      %v1767 = vadd.f32 %v1766, %v1584
      %v1768 = vadd.f32 %v1767, %v1588
      %v1769 = vadd.f32 %v1768, %v1592
      %v1770 = vadd.f32 %v1769, %v1596
      %v1771 = vadd.f32 %v1770, %v1600
      %v1772 = vadd.f32 %v1771, %v1604
      %v1773 = vadd.f32 %v1772, %v1608
      %v1774 = vrot.slane %v1773, 4
      %v1775 = vadd.f32 %v1773, %v1774
      %v1776 = vrot.slane %v1775, 2
      %v1777 = vadd.f32 %v1775, %v1776
      %v1778 = vrot.slane %v1777, 1
      %v1779 = vadd.f32 %v1777, %v1778
      %v1780 = vadd.f32 %v1486, %v1490
      %v1781 = vadd.f32 %v1780, %v1494
      %v1782 = vadd.f32 %v1781, %v1498
      %v1783 = vadd.f32 %v1782, %v1502
      %v1784 = vadd.f32 %v1783, %v1506
      %v1785 = vadd.f32 %v1784, %v1510
      %v1786 = vadd.f32 %v1785, %v1514
      %v1787 = vadd.f32 %v1786, %v1518
      %v1788 = vadd.f32 %v1787, %v1522
      %v1789 = vadd.f32 %v1788, %v1526
      %v1790 = vadd.f32 %v1789, %v1530
      %v1791 = vadd.f32 %v1790, %v1534
      %v1792 = vadd.f32 %v1791, %v1538
      %v1793 = vadd.f32 %v1792, %v1542
      %v1794 = vadd.f32 %v1793, %v1546
      %v1795 = vadd.f32 %v1794, %v1550
      %v1796 = vadd.f32 %v1795, %v1554
      %v1797 = vadd.f32 %v1796, %v1558
      %v1798 = vadd.f32 %v1797, %v1562
      %v1799 = vadd.f32 %v1798, %v1566
      %v1800 = vadd.f32 %v1799, %v1570
      %v1801 = vadd.f32 %v1800, %v1574
      %v1802 = vadd.f32 %v1801, %v1578
      %v1803 = vadd.f32 %v1802, %v1582
      %v1804 = vadd.f32 %v1803, %v1586
      %v1805 = vadd.f32 %v1804, %v1590
      %v1806 = vadd.f32 %v1805, %v1594
      %v1807 = vadd.f32 %v1806, %v1598
      %v1808 = vadd.f32 %v1807, %v1602
      %v1809 = vadd.f32 %v1808, %v1606
      %v1810 = vadd.f32 %v1809, %v1610
      %v1811 = vrot.slane %v1810, 4
      %v1812 = vadd.f32 %v1810, %v1811
      %v1813 = vrot.slane %v1812, 2
      %v1814 = vadd.f32 %v1812, %v1813
      %v1815 = vrot.slane %v1814, 1
      %v1816 = vadd.f32 %v1814, %v1815
      %v1817 = vadd.f32 %v1612, %v1616
      %v1818 = vadd.f32 %v1817, %v1620
      %v1819 = vadd.f32 %v1818, %v1624
      %v1820 = vadd.f32 %v1819, %v1628
      %v1821 = vadd.f32 %v1820, %v1632
      %v1822 = vadd.f32 %v1821, %v1636
      %v1823 = vadd.f32 %v1822, %v1640
      %v1824 = vadd.f32 %v1823, %v1644
      %v1825 = vadd.f32 %v1824, %v1648
      %v1826 = vadd.f32 %v1825, %v1652
      %v1827 = vadd.f32 %v1826, %v1656
      %v1828 = vadd.f32 %v1827, %v1660
      %v1829 = vadd.f32 %v1828, %v1664
      %v1830 = vadd.f32 %v1829, %v1668
      %v1831 = vadd.f32 %v1830, %v1672
      %v1832 = vadd.f32 %v1831, %v1676
      %v1833 = vadd.f32 %v1832, %v1680
      %v1834 = vadd.f32 %v1833, %v1684
      %v1835 = vadd.f32 %v1834, %v1688
      %v1836 = vadd.f32 %v1835, %v1692
      %v1837 = vadd.f32 %v1836, %v1696
      %v1838 = vadd.f32 %v1837, %v1700
      %v1839 = vadd.f32 %v1838, %v1704
      %v1840 = vadd.f32 %v1839, %v1708
      %v1841 = vadd.f32 %v1840, %v1712
      %v1842 = vadd.f32 %v1841, %v1716
      %v1843 = vadd.f32 %v1842, %v1720
      %v1844 = vadd.f32 %v1843, %v1724
      %v1845 = vadd.f32 %v1844, %v1728
      %v1846 = vadd.f32 %v1845, %v1732
      %v1847 = vadd.f32 %v1846, %v1736
      %v1848 = vrot.slane %v1847, 4
      %v1849 = vadd.f32 %v1847, %v1848
      %v1850 = vrot.slane %v1849, 2
      %v1851 = vadd.f32 %v1849, %v1850
      %v1852 = vrot.slane %v1851, 1
      %v1853 = vadd.f32 %v1851, %v1852
      %v1854 = vadd.f32 %v1614, %v1618
      %v1855 = vadd.f32 %v1854, %v1622
      %v1856 = vadd.f32 %v1855, %v1626
      %v1857 = vadd.f32 %v1856, %v1630
      %v1858 = vadd.f32 %v1857, %v1634
      %v1859 = vadd.f32 %v1858, %v1638
      %v1860 = vadd.f32 %v1859, %v1642
      %v1861 = vadd.f32 %v1860, %v1646
      %v1862 = vadd.f32 %v1861, %v1650
      %v1863 = vadd.f32 %v1862, %v1654
      %v1864 = vadd.f32 %v1863, %v1658
      %v1865 = vadd.f32 %v1864, %v1662
      %v1866 = vadd.f32 %v1865, %v1666
      %v1867 = vadd.f32 %v1866, %v1670
      %v1868 = vadd.f32 %v1867, %v1674
      %v1869 = vadd.f32 %v1868, %v1678
      %v1870 = vadd.f32 %v1869, %v1682
      %v1871 = vadd.f32 %v1870, %v1686
      %v1872 = vadd.f32 %v1871, %v1690
      %v1873 = vadd.f32 %v1872, %v1694
      %v1874 = vadd.f32 %v1873, %v1698
      %v1875 = vadd.f32 %v1874, %v1702
      %v1876 = vadd.f32 %v1875, %v1706
      %v1877 = vadd.f32 %v1876, %v1710
      %v1878 = vadd.f32 %v1877, %v1714
      %v1879 = vadd.f32 %v1878, %v1718
      %v1880 = vadd.f32 %v1879, %v1722
      %v1881 = vadd.f32 %v1880, %v1726
      %v1882 = vadd.f32 %v1881, %v1730
      %v1883 = vadd.f32 %v1882, %v1734
      %v1884 = vadd.f32 %v1883, %v1738
      %v1885 = vrot.slane %v1884, 4
      %v1886 = vadd.f32 %v1884, %v1885
      %v1887 = vrot.slane %v1886, 2
      %v1888 = vadd.f32 %v1886, %v1887
      %v1889 = vrot.slane %v1888, 1
      %v1890 = vadd.f32 %v1888, %v1889
      %v1895 = vcombine.low %v1779, %v1816
      %v1897 = vunpack.c.l.s4 1966171168
      %v1898 = vunpack.c.0.s8 %v1897
      %v1899 = vlaneseq
      %v1900 = vshrl.u32 %v1899, 7
      %v1901 = vsub.s32 %v1898, %v1900
      %v1902 = vrot.slane %v1895, %v1901
      %v1904 = vunpack.c.l.s4 1966171168
      %v1905 = vunpack.c.0.s8 %v1904
      %v1906 = vlaneseq
      %v1907 = vshrl.u32 %v1906, 7
      %v1908 = vsub.s32 %v1905, %v1907
      %v1909 = vrot.slane %v1902, %v1908
      %v1910 = vcombine.low %v1853, %v1890
      %v1912 = vunpack.c.l.s4 1966171168
      %v1913 = vunpack.c.0.s8 %v1912
      %v1914 = vlaneseq
      %v1915 = vshrl.u32 %v1914, 7
      %v1916 = vsub.s32 %v1913, %v1915
      %v1917 = vrot.slane %v1910, %v1916
      %v1919 = vunpack.c.l.s4 1966171168
      %v1920 = vunpack.c.0.s8 %v1919
      %v1921 = vlaneseq
      %v1922 = vshrl.u32 %v1921, 7
      %v1923 = vsub.s32 %v1920, %v1922
      %v1924 = vrot.slane %v1917, %v1923
      %v1927 = vadd.f32 %v1741, %v1909
      %v1928 = vadd.f32 %v1742, %v1924
      %v1929 = vlaneseq
      %vm1930 = vcmp.ge.s32.totalorder %v1929, 0
      %vm1931 = vcmp.lt.s32.totalorder %v1929, 256
      %vm1932 = vmand %vm1930, %vm1931
      %1933 = vst.msk [vmem:[#allocation3] sm:$0x3] %vm1932, %v1927
      %1934 = vst.msk [vmem:[#allocation3 + $0x2] sm:$0x3] %vm1932, %v1928
      %v1935 = vpack.c.bf16 %v1488, %v1484
      %v1936 = vpack.c.bf16 %v1490, %v1486
      %v1937 = vpack.c.bf16 %v1496, %v1492
      %v1938 = vpack.c.bf16 %v1498, %v1494
      %v1939 = vpack.c.bf16 %v1504, %v1500
      %v1940 = vpack.c.bf16 %v1506, %v1502
      %v1941 = vpack.c.bf16 %v1512, %v1508
      %v1942 = vpack.c.bf16 %v1514, %v1510
      %v1943 = vpack.c.bf16 %v1520, %v1516
      %v1944 = vpack.c.bf16 %v1522, %v1518
      %v1945 = vpack.c.bf16 %v1528, %v1524
      %v1946 = vpack.c.bf16 %v1530, %v1526
      %v1947 = vpack.c.bf16 %v1536, %v1532
      %v1948 = vpack.c.bf16 %v1538, %v1534
      %v1949 = vpack.c.bf16 %v1544, %v1540
      %v1950 = vpack.c.bf16 %v1546, %v1542
      %v1951 = vpack.c.bf16 %v1552, %v1548
      %v1952 = vpack.c.bf16 %v1554, %v1550
      %v1953 = vpack.c.bf16 %v1560, %v1556
      %v1954 = vpack.c.bf16 %v1562, %v1558
      %v1955 = vpack.c.bf16 %v1568, %v1564
      %v1956 = vpack.c.bf16 %v1570, %v1566
      %v1957 = vpack.c.bf16 %v1576, %v1572
      %v1958 = vpack.c.bf16 %v1578, %v1574
      %v1959 = vpack.c.bf16 %v1584, %v1580
      %v1960 = vpack.c.bf16 %v1586, %v1582
      %v1961 = vpack.c.bf16 %v1592, %v1588
      %v1962 = vpack.c.bf16 %v1594, %v1590
      %v1963 = vpack.c.bf16 %v1600, %v1596
      %v1964 = vpack.c.bf16 %v1602, %v1598
      %v1965 = vpack.c.bf16 %v1608, %v1604
      %v1966 = vpack.c.bf16 %v1610, %v1606
      %v1967 = vpack.c.bf16 %v1616, %v1612
      %v1968 = vpack.c.bf16 %v1618, %v1614
      %v1969 = vpack.c.bf16 %v1624, %v1620
      %v1970 = vpack.c.bf16 %v1626, %v1622
      %v1971 = vpack.c.bf16 %v1632, %v1628
      %v1972 = vpack.c.bf16 %v1634, %v1630
      %v1973 = vpack.c.bf16 %v1640, %v1636
      %v1974 = vpack.c.bf16 %v1642, %v1638
      %v1975 = vpack.c.bf16 %v1648, %v1644
      %v1976 = vpack.c.bf16 %v1650, %v1646
      %v1977 = vpack.c.bf16 %v1656, %v1652
      %v1978 = vpack.c.bf16 %v1658, %v1654
      %v1979 = vpack.c.bf16 %v1664, %v1660
      %v1980 = vpack.c.bf16 %v1666, %v1662
      %v1981 = vpack.c.bf16 %v1672, %v1668
      %v1982 = vpack.c.bf16 %v1674, %v1670
      %v1983 = vpack.c.bf16 %v1680, %v1676
      %v1984 = vpack.c.bf16 %v1682, %v1678
      %v1985 = vpack.c.bf16 %v1688, %v1684
      %v1986 = vpack.c.bf16 %v1690, %v1686
      %v1987 = vpack.c.bf16 %v1696, %v1692
      %v1988 = vpack.c.bf16 %v1698, %v1694
      %v1989 = vpack.c.bf16 %v1704, %v1700
      %v1990 = vpack.c.bf16 %v1706, %v1702
      %v1991 = vpack.c.bf16 %v1712, %v1708
      %v1992 = vpack.c.bf16 %v1714, %v1710
      %v1993 = vpack.c.bf16 %v1720, %v1716
      %v1994 = vpack.c.bf16 %v1722, %v1718
      %v1995 = vpack.c.bf16 %v1728, %v1724
      %v1996 = vpack.c.bf16 %v1730, %v1726
      %v1997 = vpack.c.bf16 %v1736, %v1732
      %v1998 = vpack.c.bf16 %v1738, %v1734
      %v2001 = vunpack.c.l.b16 %v472
      %v2002 = vunpack.c.h.b16 %v472
      %v2003 = vunpack.c.l.b16 %v473
      %v2004 = vunpack.c.h.b16 %v473
      %v2005 = vpack.c.b16 %v2003, %v2001
      %v2006 = vpack.c.b16 %v2004, %v2002
      %2009 = vmatprep.subr.bf16.mxu0 %v1950
      %2010 = vmatpush1.bf16.msra.mxu0 %v1949
      %2011 = vmatprep.subr.bf16.mxu0 %v1948
      %2012 = vmatpush1.bf16.msra.mxu0 %v1947
      %2013 = vmatprep.subr.bf16.mxu0 %v1946
      %2014 = vmatpush1.bf16.msra.mxu0 %v1945
      %2015 = vmatprep.subr.bf16.mxu0 %v1944
      %2016 = vmatpush1.bf16.msra.mxu0 %v1943
      %2017 = vmatprep.subr.bf16.mxu0 %v1942
      %2018 = vmatpush1.bf16.msra.mxu0 %v1941
      %2019 = vmatprep.subr.bf16.mxu0 %v1940
      %2020 = vmatpush1.bf16.msra.mxu0 %v1939
      %2021 = vmatprep.subr.bf16.mxu0 %v1938
      %2022 = vmatpush1.bf16.msra.mxu0 %v1937
      %2023 = vmatprep.subr.bf16.mxu0 %v1936
      %2024 = vmatpush1.bf16.msra.mxu0 %v1935
      %2025 = vmatprep.subr.bf16.mxu0 %v1966
      %2026 = vmatpush2.bf16.msra.mxu0 %v1965
      %2027 = vmatprep.subr.bf16.mxu0 %v1964
      %2028 = vmatpush2.bf16.msra.mxu0 %v1963
      %2029 = vmatprep.subr.bf16.mxu0 %v1962
      %2030 = vmatpush2.bf16.msra.mxu0 %v1961
      %2031 = vmatprep.subr.bf16.mxu0 %v1960
      %2032 = vmatpush2.bf16.msra.mxu0 %v1959
      %2033 = vmatprep.subr.bf16.mxu0 %v1958
      %2034 = vmatpush2.bf16.msra.mxu0 %v1957
      %2035 = vmatprep.subr.bf16.mxu0 %v1956
      %2036 = vmatpush2.bf16.msra.mxu0 %v1955
      %2037 = vmatprep.subr.bf16.mxu0 %v1954
      %2038 = vmatpush2.bf16.msra.mxu0 %v1953
      %2039 = vmatprep.subr.bf16.mxu0 %v1952
      %2040 = vmatpush2.bf16.msra.mxu0 %v1951
      %2041 = vmatprep.mubr.bf16.mxu0 %v2006
      %2042 = vmatmul.mubr.bf16.gmra.mxu0 %v2005
      %v2043 = vpop.f32.mrf.mxu0
      %v2044 = vadd.f32 0.0, %v2043
      %v2045 = vpop.f32.mrf.mxu0
      %v2046 = vadd.f32 0.0, %v2045
      %v2047 = vpop.f32.mrf.mxu0
      %v2048 = vadd.f32 0.0, %v2047
      %v2049 = vpop.f32.mrf.mxu0
      %v2050 = vadd.f32 0.0, %v2049
      %2051 = vdwg.mxu0
      %v2054 = vunpack.c.l.b16 %v474
      %v2055 = vunpack.c.h.b16 %v474
      %v2056 = vunpack.c.l.b16 %v475
      %v2057 = vunpack.c.h.b16 %v475
      %v2058 = vpack.c.b16 %v2056, %v2054
      %v2059 = vpack.c.b16 %v2057, %v2055
      %2062 = vmatprep.subr.bf16.mxu0 %v1982
      %2063 = vmatpush1.bf16.msra.mxu0 %v1981
      %2064 = vmatprep.subr.bf16.mxu0 %v1980
      %2065 = vmatpush1.bf16.msra.mxu0 %v1979
      %2066 = vmatprep.subr.bf16.mxu0 %v1978
      %2067 = vmatpush1.bf16.msra.mxu0 %v1977
      %2068 = vmatprep.subr.bf16.mxu0 %v1976
      %2069 = vmatpush1.bf16.msra.mxu0 %v1975
      %2070 = vmatprep.subr.bf16.mxu0 %v1974
      %2071 = vmatpush1.bf16.msra.mxu0 %v1973
      %2072 = vmatprep.subr.bf16.mxu0 %v1972
      %2073 = vmatpush1.bf16.msra.mxu0 %v1971
      %2074 = vmatprep.subr.bf16.mxu0 %v1970
      %2075 = vmatpush1.bf16.msra.mxu0 %v1969
      %2076 = vmatprep.subr.bf16.mxu0 %v1968
      %2077 = vmatpush1.bf16.msra.mxu0 %v1967
      %2078 = vmatprep.subr.bf16.mxu0 %v1998
      %2079 = vmatpush2.bf16.msra.mxu0 %v1997
      %2080 = vmatprep.subr.bf16.mxu0 %v1996
      %2081 = vmatpush2.bf16.msra.mxu0 %v1995
      %2082 = vmatprep.subr.bf16.mxu0 %v1994
      %2083 = vmatpush2.bf16.msra.mxu0 %v1993
      %2084 = vmatprep.subr.bf16.mxu0 %v1992
      %2085 = vmatpush2.bf16.msra.mxu0 %v1991
      %2086 = vmatprep.subr.bf16.mxu0 %v1990
      %2087 = vmatpush2.bf16.msra.mxu0 %v1989
      %2088 = vmatprep.subr.bf16.mxu0 %v1988
      %2089 = vmatpush2.bf16.msra.mxu0 %v1987
      %2090 = vmatprep.subr.bf16.mxu0 %v1986
      %2091 = vmatpush2.bf16.msra.mxu0 %v1985
      %2092 = vmatprep.subr.bf16.mxu0 %v1984
      %2093 = vmatpush2.bf16.msra.mxu0 %v1983
      %2094 = vmatprep.mubr.bf16.mxu0 %v2059
      %2095 = vmatmul.mubr.bf16.gmra.mxu0 %v2058
      %v2096 = vpop.f32.mrf.mxu0
      %v2097 = vadd.f32 0.0, %v2096
      %v2098 = vpop.f32.mrf.mxu0
      %v2099 = vadd.f32 0.0, %v2098
      %v2100 = vpop.f32.mrf.mxu0
      %v2101 = vadd.f32 0.0, %v2100
      %v2102 = vpop.f32.mrf.mxu0
      %v2103 = vadd.f32 0.0, %v2102
      %2104 = vdwg.mxu0
      %v2105 = vld [vmem:[#allocation4] sm:$0xff]
      %v2106 = vld [vmem:[#allocation4 + $0x8] sm:$0xff]
      %v2107 = vld [vmem:[#allocation4 + $0x10] sm:$0xff]
      %v2108 = vld [vmem:[#allocation4 + $0x18] sm:$0xff]
      %v2109 = vld [vmem:[#allocation4 + $0x20] sm:$0xff]
      %v2110 = vld [vmem:[#allocation4 + $0x28] sm:$0xff]
      %v2111 = vld [vmem:[#allocation4 + $0x30] sm:$0xff]
      %v2112 = vld [vmem:[#allocation4 + $0x38] sm:$0xff]
      %v2115 = vlaneseq
      %v2116 = vshrl.u32 %v2115, 7
      %v2117 = vsub.s32 0, %v2116
      %v2118 = vrot.slane %v1330, %v2117
      %v2119 = vlaneseq
      %v2120 = vshrl.u32 %v2119, 7
      %v2121 = vsub.s32 1, %v2120
      %v2122 = vrot.slane %v1330, %v2121
      %v2123 = vlaneseq
      %v2124 = vshrl.u32 %v2123, 7
      %v2125 = vsub.s32 0, %v2124
      %v2126 = vrot.slane %v1332, %v2125
      %v2127 = vlaneseq
      %v2128 = vshrl.u32 %v2127, 7
      %v2129 = vsub.s32 1, %v2128
      %v2130 = vrot.slane %v1332, %v2129
      %v2135 = vmul.f32 %v2118, %v2105
      %v2136 = vmul.f32 %v2122, %v2106
      %v2137 = vmul.f32 %v2118, %v2107
      %v2138 = vmul.f32 %v2122, %v2108
      %v2139 = vmul.f32 %v2126, %v2109
      %v2140 = vmul.f32 %v2130, %v2110
      %v2141 = vmul.f32 %v2126, %v2111
      %v2142 = vmul.f32 %v2130, %v2112
      %v2143 = vadd.f32 %v2135, %v2044
      %v2144 = vadd.f32 %v2136, %v2046
      %v2145 = vadd.f32 %v2137, %v2048
      %v2146 = vadd.f32 %v2138, %v2050
      %v2147 = vadd.f32 %v2139, %v2097
      %v2148 = vadd.f32 %v2140, %v2099
      %v2149 = vadd.f32 %v2141, %v2101
      %v2150 = vadd.f32 %v2142, %v2103
      %2151 = vst [vmem:[#allocation4] sm:$0xff] %v2143
      %2152 = vst [vmem:[#allocation4 + $0x8] sm:$0xff] %v2144
      %2153 = vst [vmem:[#allocation4 + $0x10] sm:$0xff] %v2145
      %2154 = vst [vmem:[#allocation4 + $0x18] sm:$0xff] %v2146
      %2155 = vst [vmem:[#allocation4 + $0x20] sm:$0xff] %v2147
      %2156 = vst [vmem:[#allocation4 + $0x28] sm:$0xff] %v2148
      %2157 = vst [vmem:[#allocation4 + $0x30] sm:$0xff] %v2149
      %2158 = vst [vmem:[#allocation4 + $0x38] sm:$0xff] %v2150
      %2159 = vst.msk [vmem:[#allocation2] sm:$0x3] %vm1932, %v1325
      %2160 = vst.msk [vmem:[#allocation2 + $0x2] sm:$0x3] %vm1932, %v1326
      // Predicated region
      $region49: #{attention_block.3} parent=43 // pred_check
        %p2161 = pneg %p375
      $region50: #{attention_block.3} parent=43 // pred_check_branch
        %2163 = sbr.rel (%p2161) target = $region52
      $region51: #{attention_block.3} parent=43 // pred_region
        %v2164 = vld [vmem:[#allocation3] sm:$0x3]
        %v2165 = vld [vmem:[#allocation3 + $0x2] sm:$0x3]
        %v2166 = vrcp.pop %v2164
        %v2167 = vrcp.pop %v2165
        %v2168 = vld [vmem:[#allocation4] sm:$0xff]
        %v2169 = vld [vmem:[#allocation4 + $0x8] sm:$0xff]
        %v2170 = vld [vmem:[#allocation4 + $0x10] sm:$0xff]
        %v2171 = vld [vmem:[#allocation4 + $0x18] sm:$0xff]
        %v2172 = vld [vmem:[#allocation4 + $0x20] sm:$0xff]
        %v2173 = vld [vmem:[#allocation4 + $0x28] sm:$0xff]
        %v2174 = vld [vmem:[#allocation4 + $0x30] sm:$0xff]
        %v2175 = vld [vmem:[#allocation4 + $0x38] sm:$0xff]
        %v2178 = vlaneseq
        %v2179 = vshrl.u32 %v2178, 7
        %v2180 = vsub.s32 0, %v2179
        %v2181 = vrot.slane %v2166, %v2180
        %v2182 = vlaneseq
        %v2183 = vshrl.u32 %v2182, 7
        %v2184 = vsub.s32 1, %v2183
        %v2185 = vrot.slane %v2166, %v2184
        %v2186 = vlaneseq
        %v2187 = vshrl.u32 %v2186, 7
        %v2188 = vsub.s32 0, %v2187
        %v2189 = vrot.slane %v2167, %v2188
        %v2190 = vlaneseq
        %v2191 = vshrl.u32 %v2190, 7
        %v2192 = vsub.s32 1, %v2191
        %v2193 = vrot.slane %v2167, %v2192
        %v2198 = vmul.f32 %v2168, %v2181
        %v2199 = vmul.f32 %v2169, %v2185
        %v2200 = vmul.f32 %v2170, %v2181
        %v2201 = vmul.f32 %v2171, %v2185
        %v2202 = vmul.f32 %v2172, %v2189
        %v2203 = vmul.f32 %v2173, %v2193
        %v2204 = vmul.f32 %v2174, %v2189
        %v2205 = vmul.f32 %v2175, %v2193
        %v2206 = vld [vmem:[%s4] sm:$0xf]
        %v2207 = vld [vmem:[%s4 + $0x4] sm:$0xf]
        %v2208 = vld [vmem:[%s4 + $0x8] sm:$0xf]
        %v2209 = vld [vmem:[%s4 + $0xc] sm:$0xf]
        %v2210 = vpack.c.bf16 %v2200, %v2198
        %v2211 = vpack.c.bf16 %v2201, %v2199
        %v2212 = vpack.c.bf16 %v2204, %v2202
        %v2213 = vpack.c.bf16 %v2205, %v2203
        %v2214 = vld [vmem:[%s5] sm:$0xff]
        %v2215 = vld [vmem:[%s5 + $0x8] sm:$0xff]
        %v2216 = vld [vmem:[%s5 + $0x10] sm:$0xff]
        %v2217 = vld [vmem:[%s5 + $0x18] sm:$0xff]
        %2219 = vset.pattern.permute.xlu0 0
        %2220 = vperm.xlu0 %2219, %v2214
        %v2221 = vpop.permute.xlu0 %2220
        %2224 = vset.pattern.permute.xlu0 0
        %2225 = vperm.xlu0 %2224, %v2215
        %v2226 = vpop.permute.xlu0 %2225
        %2229 = vset.pattern.permute.xlu0 0
        %2230 = vperm.xlu0 %2229, %v2216
        %v2231 = vpop.permute.xlu0 %2230
        %2234 = vset.pattern.permute.xlu0 0
        %2235 = vperm.xlu0 %2234, %v2217
        %v2236 = vpop.permute.xlu0 %2235
        %v2242 = vunpack.c.l.b16 %v2206
        %v2243 = vunpack.c.l.b16 %v2207
        %v2244 = vunpack.c.l.b16 %v2208
        %v2245 = vunpack.c.l.b16 %v2209
        %v2246 = vpack.c.b16 %v2243, %v2242
        %v2247 = vpack.c.b16 %v2245, %v2244
        %vm2248 = vcmask 261120
        %v2250 = vsel %vm2248, %v2246, 0
        %v2253 = vsel %vm2248, %v2247, 0
        %2255 = vmatprep.subr.bf16.mxu0 0
        %2256 = vmatpush1.bf16.msra.mxu0 0
        %2257 = vmatprep.subr.bf16.mxu0 0
        %2258 = vmatpush1.bf16.msra.mxu0 0
        %2259 = vmatprep.subr.bf16.mxu0 0
        %2260 = vmatpush1.bf16.msra.mxu0 0
        %2261 = vmatprep.subr.bf16.mxu0 0
        %2262 = vmatpush1.bf16.msra.mxu0 0
        %2263 = vmatprep.subr.bf16.mxu0 0
        %2264 = vmatpush1.bf16.msra.mxu0 0
        %2265 = vmatprep.subr.bf16.mxu0 0
        %2266 = vmatpush1.bf16.msra.mxu0 0
        %2267 = vmatprep.subr.bf16.mxu0 %v2213
        %2268 = vmatpush1.bf16.msra.mxu0 %v2212
        %2269 = vmatprep.subr.bf16.mxu0 %v2211
        %2270 = vmatpush1.bf16.msra.mxu0 %v2210
        %2271 = vmatprep.subr.bf16.mxu0 0
        %2272 = vmatpush2.bf16.msra.mxu0 0
        %2273 = vmatprep.subr.bf16.mxu0 0
        %2274 = vmatpush2.bf16.msra.mxu0 0
        %2275 = vmatprep.subr.bf16.mxu0 0
        %2276 = vmatpush2.bf16.msra.mxu0 0
        %2277 = vmatprep.subr.bf16.mxu0 0
        %2278 = vmatpush2.bf16.msra.mxu0 0
        %2279 = vmatprep.subr.bf16.mxu0 0
        %2280 = vmatpush2.bf16.msra.mxu0 0
        %2281 = vmatprep.subr.bf16.mxu0 0
        %2282 = vmatpush2.bf16.msra.mxu0 0
        %2283 = vmatprep.subr.bf16.mxu0 0
        %2284 = vmatpush2.bf16.msra.mxu0 0
        %2285 = vmatprep.subr.bf16.mxu0 0
        %2286 = vmatpush2.bf16.msra.mxu0 0
        %2287 = vmatprep.mubr.bf16.mxu0 0
        %2288 = vmatmul.mubr.bf16.gmra.mxu0 %v2250
        %v2289 = vpop.f32.mrf.mxu0
        %v2290 = vadd.f32 %v2221, %v2289
        %v2291 = vpop.f32.mrf.mxu0
        %v2292 = vadd.f32 %v2221, %v2291
        %v2293 = vpop.f32.mrf.mxu0
        %v2294 = vadd.f32 %v2226, %v2293
        %v2295 = vpop.f32.mrf.mxu0
        %v2296 = vadd.f32 %v2226, %v2295
        %2297 = vmatprep.mubr.bf16.mxu0 0
        %2298 = vmatmul.mubr.bf16.gmra.mxu0 %v2253
        %v2299 = vpop.f32.mrf.mxu0
        %v2300 = vadd.f32 %v2231, %v2299
        %v2301 = vpop.f32.mrf.mxu0
        %v2302 = vadd.f32 %v2231, %v2301
        %v2303 = vpop.f32.mrf.mxu0
        %v2304 = vadd.f32 %v2236, %v2303
        %v2305 = vpop.f32.mrf.mxu0
        %v2306 = vadd.f32 %v2236, %v2305
        %2307 = vdwg.mxu0
        %v2308 = vld [vmem:[%s362] sm:$0xff]
        %v2309 = vld [vmem:[%s362 + $0x8] sm:$0xff]
        %v2310 = vld [vmem:[%s362 + $0x10] sm:$0xff]
        %v2311 = vld [vmem:[%s362 + $0x18] sm:$0xff]
        %v2312 = vld [vmem:[%s362 + $0x20] sm:$0xff]
        %v2313 = vld [vmem:[%s362 + $0x28] sm:$0xff]
        %v2314 = vld [vmem:[%s362 + $0x30] sm:$0xff]
        %v2315 = vld [vmem:[%s362 + $0x38] sm:$0xff]
        %v2316 = vadd.f32 %v2290, %v2308
        %v2317 = vadd.f32 %v2292, %v2309
        %v2318 = vadd.f32 %v2294, %v2310
        %v2319 = vadd.f32 %v2296, %v2311
        %v2320 = vadd.f32 %v2300, %v2312
        %v2321 = vadd.f32 %v2302, %v2313
        %v2322 = vadd.f32 %v2304, %v2314
        %v2323 = vadd.f32 %v2306, %v2315
        %2324 = vst [vmem:[%s372] sm:$0xff] %v2316
        %2325 = vst [vmem:[%s372 + $0x8] sm:$0xff] %v2317
        %2326 = vst [vmem:[%s372 + $0x10] sm:$0xff] %v2318
        %2327 = vst [vmem:[%s372 + $0x18] sm:$0xff] %v2319
        %2328 = vst [vmem:[%s372 + $0x20] sm:$0xff] %v2320
        %2329 = vst [vmem:[%s372 + $0x28] sm:$0xff] %v2321
        %2330 = vst [vmem:[%s372 + $0x30] sm:$0xff] %v2322
        %2331 = vst [vmem:[%s372 + $0x38] sm:$0xff] %v2323
      $region52: #{attention_block.3} parent=43 // pred_fallthru
        _
      %s2332 = smul.u32 2, %s23
      %p2333 = scmp.lt.s32.totalorder %s22, 1
      %s2334 = scalar_select %p2333, %s22, 1
      %p2335 = scmp.lt.s32.totalorder %s2332, 1
      %s2336 = scalar_select %p2335, %s2332, 1
      %s2337 = smul.addr %s2334, 8
      %s2338 = sadd.s32 %s2336, %s2337
      %s2339 = smul.addr %s2338, 8
      %s2340 = scalar_lea.vmem %s6, %s2339
      // Predicated region
      $region53: #{attention_block.3} parent=43 // pred_check
        %p2341 = pneg %p206
      $region54: #{attention_block.3} parent=43 // pred_check_branch
        %2343 = sbr.rel (%p2341) target = $region56
      $region55: #{attention_block.3} parent=43 // pred_region
        %s2344 = smul.u32 2, %s23
      $region56: #{attention_block.3} parent=43 // pred_fallthru
        _
    $region44: #{attention_block.3} parent=5 // pred_fallthru
      _
    %p2345 = scmp.le.s32.totalorder 2, %s12
    // Predicated region
    $region57: #{attention_block.3} parent=5 // pred_check
      %p2346 = pneg %p2345
    $region58: #{attention_block.3} parent=5 // pred_check_branch
      %2348 = sbr.rel (%p2346) target = $region60
    $region59: #{attention_block.3} parent=5 // pred_region
      %s2349 = ssub.s32 %s12, 2
      // Predicated region
      $region61: #{attention_block.3} parent=59 // pred_check
        %p2350 = pneg %p212
      $region62: #{attention_block.3} parent=59 // pred_check_branch
        %2352 = sbr.rel (%p2350) target = $region64
      $region63: #{attention_block.3} parent=59 // pred_region
        %s2353 = smul.u32 2, %s26
        %p2354 = scmp.lt.s32.totalorder %s25, 1
        %s2355 = scalar_select %p2354, %s25, 1
        %p2356 = scmp.lt.s32.totalorder %s2353, 1
        %s2357 = scalar_select %p2356, %s2353, 1
        %s2358 = smul.addr %s2355, 8
        %s2359 = sadd.s32 %s2357, %s2358
        %s2360 = smul.addr %s2359, 8
        %s2361 = scalar_lea.vmem %s6, %s2360
      $region64: #{attention_block.3} parent=59 // pred_fallthru
        _
    $region60: #{attention_block.3} parent=5 // pred_fallthru
      _
  $region6: #{attention_block.3} parent=0 // loop_footer
    %s16 = sadd.s32 1, %s12
  $region7: #{attention_block.3} parent=0 // loop_footer_branch
    %11 = sbr.rel target = $region3
  $region8: #{attention_block.3} parent=0 // loop_exit
    _

</llo_original>
